<compile_context>
chip_gen: v6e
topology: v6e:2x2x1
jax: 0.10.0
libtpu: 0.0.40
codegen_flags: <defaults>
</compile_context>

<pallas_src>
import functools

import jax
import jax.numpy as jnp
from jax.experimental import pallas as pl
from jax.experimental.pallas import tpu as pltpu


# ---------------------------------------------------------------------------
# Tiling helper
# ---------------------------------------------------------------------------
def _pick_tm(M, cap=1024):
    """Largest M-tile <= cap that divides M.

    Review: tile=128 reaches ~29% of HBM roofline vs ~85% at 512+; the cap
    keeps double-buffered blocks comfortably inside v7x's 64 MiB VMEM.
    """
    if M > cap:
        for t in (cap, 512, 256, 128, 64, 32, 16, 8):
            if M % t == 0:
                return t
        # TODO(synk): ragged M would need masked partial tiles + stats masking.
        return M
    # M fits in one tile; still split in two when big enough so a v7x chip's
    # two TensorCores both get a grid step (grid of length 1 idles one TC).
    if M >= 256 and (M // 2) % 16 == 0:
        return M // 2
    return M


# ---------------------------------------------------------------------------
# Pallas kernels
# ---------------------------------------------------------------------------
def _matmul_kernel(x_ref, w_ref, o_ref, *maybe_stats, act, alpha):
    """One M-tile of the im2col matmul, fused activation, optional BN stats."""
    y = jnp.dot(x_ref[...], w_ref[...], preferred_element_type=jnp.float32)

    if maybe_stats:  # per-tile partial BN statistics of the *pre-activation* y
        stats_ref, = maybe_stats
        s1 = jnp.sum(y, axis=0, keepdims=True)          # (1, N) f32
        s2 = jnp.sum(y * y, axis=0, keepdims=True)      # (1, N) f32
        stats_ref[...] = jnp.concatenate([s1, s2], axis=0)[None]   # (1, 2, N)

    if act == "leaky":
        y = jnp.where(y > 0, y, alpha * y)
    elif act == "sigmoid":
        y = jax.nn.sigmoid(y)
    o_ref[...] = y.astype(o_ref.dtype)


def conv_matmul(patches, w_mat, *, act="none", alpha=0.2, with_stats=False,
                out_dtype=jnp.bfloat16):
    """[M, K] @ [K, N] with fused activation; optionally also emits per-tile
    per-channel (sum, sum-of-squares) for BatchNorm."""
    M, K = patches.shape
    K2, N = w_mat.shape
    assert K == K2
    tm = _pick_tm(M)
    grid_m = M // tm
    kernel = functools.partial(_matmul_kernel, act=act, alpha=alpha)

    in_specs = [
        pl.BlockSpec((tm, K), lambda i: (i, 0)),
        pl.BlockSpec((K, N), lambda i: (0, 0)),
    ]
    if with_stats:
        out_shape = (
            jax.ShapeDtypeStruct((M, N), out_dtype),
            jax.ShapeDtypeStruct((grid_m, 2, N), jnp.float32),
        )
        out_specs = [
            pl.BlockSpec((tm, N), lambda i: (i, 0)),
            pl.BlockSpec((1, 2, N), lambda i: (i, 0, 0)),
        ]
    else:
        out_shape = jax.ShapeDtypeStruct((M, N), out_dtype)
        out_specs = pl.BlockSpec((tm, N), lambda i: (i, 0))

    return pl.pallas_call(
        kernel,
        out_shape=out_shape,
        grid_spec=pltpu.PrefetchScalarGridSpec(
            num_scalar_prefetch=0,
            grid=(grid_m,),
            in_specs=in_specs,
            out_specs=out_specs,
        ),
        compiler_params=pltpu.CompilerParams(
            dimension_semantics=("parallel",)),
    )(patches, w_mat)


def _bn_lrelu_kernel(y_ref, scale_ref, shift_ref, o_ref, *, alpha):
    # per-channel affine (from BatchNorm batch stats) + LeakyReLU, f32 math.
    y = y_ref[...].astype(jnp.float32) * scale_ref[...] + shift_ref[...]
    o_ref[...] = jnp.where(y > 0, y, alpha * y).astype(o_ref.dtype)


def bn_lrelu(y, scale, shift, alpha=0.2):
    M, N = y.shape
    tm = _pick_tm(M)
    grid_m = M // tm
    kernel = functools.partial(_bn_lrelu_kernel, alpha=alpha)
    return pl.pallas_call(
        kernel,
        out_shape=jax.ShapeDtypeStruct((M, N), y.dtype),
        grid_spec=pltpu.PrefetchScalarGridSpec(
            num_scalar_prefetch=0,
            grid=(grid_m,),
            in_specs=[
                pl.BlockSpec((tm, N), lambda i: (i, 0)),
                pl.BlockSpec((1, N), lambda i: (0, 0)),
                pl.BlockSpec((1, N), lambda i: (0, 0)),
            ],
            out_specs=pl.BlockSpec((tm, N), lambda i: (i, 0)),
        ),
        compiler_params=pltpu.CompilerParams(
            dimension_semantics=("parallel",)),
    )(y,
      scale.reshape(1, N).astype(jnp.float32),
      shift.reshape(1, N).astype(jnp.float32))


# ---------------------------------------------------------------------------
# JAX glue: patch extraction, weight packing, parameter init
# ---------------------------------------------------------------------------
def extract_patches(x_nhwc, k, stride, pad):
    """[B,H,W,C] -> ([B*Ho*Wo, C*k*k], Ho, Wo).  Feature order is
    channel-major then (kh, kw) row-major (matches w_to_matrix)."""
    B = x_nhwc.shape[0]
    patches = jax.lax.conv_general_dilated_patches(
        x_nhwc,
        filter_shape=(k, k),
        window_strides=(stride, stride),
        padding=((pad, pad), (pad, pad)),
        dimension_numbers=("NHWC", "HWIO", "NHWC"),
    )
    _, Ho, Wo, K = patches.shape
    return patches.reshape(B * Ho * Wo, K), Ho, Wo


def w_to_matrix(w_oihw, dtype):
    # PyTorch OIHW [Cout, Cin, kh, kw] -> [Cin*kh*kw, Cout]
    # (channel-major K order, matching conv_general_dilated_patches).
    cout = w_oihw.shape[0]
    return jnp.transpose(w_oihw, (1, 2, 3, 0)).reshape(-1, cout).astype(dtype)


def init_params(key, nc, ndf):
    ks = jax.random.split(key, 5)

    def conv_w(k, cout, cin):
        # DCGAN-style init: N(0, 0.02)
        return 0.02 * jax.random.normal(k, (cout, cin, 4, 4), jnp.float32)

    return {
        "w1": conv_w(ks[0], ndf, nc),
        "w2": conv_w(ks[1], ndf * 2, ndf),
        "w3": conv_w(ks[2], ndf * 4, ndf * 2),
        "w4": conv_w(ks[3], ndf * 8, ndf * 4),
        "w5": conv_w(ks[4], 1, ndf * 8),
        "g2": jnp.ones((ndf * 2,), jnp.float32),
        "b2": jnp.zeros((ndf * 2,), jnp.float32),
        "g3": jnp.ones((ndf * 4,), jnp.float32),
        "b3": jnp.zeros((ndf * 4,), jnp.float32),
        "g4": jnp.ones((ndf * 8,), jnp.float32),
        "b4": jnp.zeros((ndf * 8,), jnp.float32),
    }


# ---------------------------------------------------------------------------
# Discriminator forward
# ---------------------------------------------------------------------------
def discriminator_forward(params, x_nchw, alpha=0.2, eps=1e-5,
                          act_dtype=jnp.bfloat16):
    B = x_nchw.shape[0]
    x = jnp.transpose(x_nchw, (0, 2, 3, 1)).astype(act_dtype)   # NCHW -> NHWC

    def conv_block(x_nhwc, w, *, act, with_stats):
        p, Ho, Wo = extract_patches(x_nhwc, 4, 2, 1)
        out = conv_matmul(p, w_to_matrix(w, act_dtype), act=act, alpha=alpha,
                          with_stats=with_stats, out_dtype=act_dtype)
        return out, Ho, Wo

    def bn_block(y, stats, gamma, beta):
        # nn.BatchNorm2d in (default) training mode: batch stats, biased var.
        M = y.shape[0]
        s = jnp.sum(stats, axis=0)                    # (2, N) f32
        mean = s[0] / M
        var = jnp.maximum(s[1] / M - mean * mean, 0.0)
        scale = gamma / jnp.sqrt(var + eps)
        shift = beta - mean * scale
        return bn_lrelu(y, scale, shift, alpha=alpha)

    # Conv(nc, ndf, 4, 2, 1) + LeakyReLU  (fused into the matmul kernel)
    y, Ho, Wo = conv_block(x, params["w1"], act="leaky", with_stats=False)
    x = y.reshape(B, Ho, Wo, -1)

    # Conv + BN + LeakyReLU  x3  (BN stats fused into the matmul kernel)
    for wk, gk, bk in (("w2", "g2", "b2"),
                       ("w3", "g3", "b3"),
                       ("w4", "g4", "b4")):
        (y, stats), Ho, Wo = conv_block(x, params[wk], act="none",
                                        with_stats=True)
        y = bn_block(y, stats, params[gk], params[bk])
        x = y.reshape(B, Ho, Wo, -1)

    # Conv(8ndf, 1, 4, 1, 0) + Sigmoid.  M = B, N = 1: sub-vreg, so a
    # pallas_call would be pure launch overhead -> plain XLA matvec (review).
    w5 = jnp.transpose(params["w5"], (2, 3, 1, 0)).reshape(-1, 1)
    w5 = w5.astype(jnp.float32)
    logits = x.reshape(B, -1).astype(jnp.float32) @ w5          # (h, w, c) order
    out = jax.nn.sigmoid(logits)
    return out.reshape(B, 1, 1, 1)                              # NCHW [B,1,1,1]


if __name__ == "__main__":
    # DCGAN discriminator requires 64x64 spatial input so the final 4x4
    # valid conv produces a 1x1 map.  Small sizes: B=2, nc=3, ndf=8.
    key = jax.random.PRNGKey(0)
    k_param, k_input = jax.random.split(key)
    nc, ndf, B = 3, 8, 2

    params = init_params(k_param, nc, ndf)
    x = jax.random.normal(k_input, (B, nc, 64, 64), jnp.float32)  # NCHW

    fwd = jax.jit(discriminator_forward)
    out = fwd(params, x)
    out = jax.block_until_ready(out)
    assert out.shape == (B, 1, 1, 1)
    assert bool(jnp.all((out >= 0.0) & (out <= 1.0)))
    print("KERNEL_OK")
</pallas_src>

<mosaic_0001>
module attributes {stable_mosaic.version = 11 : i64} {
  func.func @_matmul_kernel(%arg0: i32, %arg1: memref<1024x48xbf16, #tpu.memory_space<vmem>>, %arg2: memref<48x8xbf16, #tpu.memory_space<vmem>>, %arg3: memref<1024x8xbf16, #tpu.memory_space<vmem>>) attributes {dimension_semantics = [#tpu.dimension_semantics<parallel>], iteration_bounds = array<i64: 2>, scalar_prefetch = 0 : i64, scratch_operands = 0 : i64, tpu.core_type = #tpu.core_type<tc>, window_params = [{transform_indices = @transform_0, window_bounds = array<i64: 1024, 48>}, {pipeline_mode = #tpu.pipeline_mode<synchronous>, transform_indices = @transform_1, window_bounds = array<i64: 48, 8>}, {transform_indices = @transform_2, window_bounds = array<i64: 1024, 8>}]} {
    %c0 = arith.constant 0 : index
    %c0_0 = arith.constant 0 : index
    %0 = vector.load %arg1[%c0, %c0_0] : memref<1024x48xbf16, #tpu.memory_space<vmem>>, vector<1024x48xbf16>
    %c0_1 = arith.constant 0 : index
    %c0_2 = arith.constant 0 : index
    %1 = vector.load %arg2[%c0_1, %c0_2] : memref<48x8xbf16, #tpu.memory_space<vmem>>, vector<48x8xbf16>
    %cst = arith.constant dense<0.000000e+00> : vector<1024x8xf32>
    %2 = tpu.matmul %0, %1, %cst {dimension_numbers = #tpu.dot_dimension_numbers<[1], [0], [0], [1], [0, 0, 1, 1], [], []>} : vector<1024x48xbf16>, vector<48x8xbf16>, vector<1024x8xf32> -> vector<1024x8xf32>
    %cst_3 = arith.constant 0.000000e+00 : f32
    %3 = vector.broadcast %cst_3 : f32 to vector<1024x8xf32>
    %4 = arith.cmpf ogt, %2, %3 : vector<1024x8xf32>
    %cst_4 = arith.constant 2.000000e-01 : f32
    %5 = vector.broadcast %cst_4 : f32 to vector<1024x8xf32>
    %6 = arith.mulf %5, %2 : vector<1024x8xf32>
    %7 = arith.select %4, %2, %6 : vector<1024x8xi1>, vector<1024x8xf32>
    %8 = arith.truncf %7 : vector<1024x8xf32> to vector<1024x8xbf16>
    %c0_5 = arith.constant 0 : index
    %c0_6 = arith.constant 0 : index
    %9 = vector.load %arg3[%c0_5, %c0_6] : memref<1024x8xbf16, #tpu.memory_space<vmem>>, vector<1024x8xbf16>
    tpu.vector_store %arg3[%c0_5, %c0_6], %8 {strides = array<i32>} : memref<1024x8xbf16, #tpu.memory_space<vmem>>, vector<1024x8xbf16>,
    return
  }
  func.func @transform_0(%arg0: i32) -> (i32, i32) {
    %c0_i32 = arith.constant 0 : i32
    %c0_i32_0 = arith.constant 0 : i32
    return %arg0, %c0_i32 : i32, i32
  }
  func.func @transform_1(%arg0: i32) -> (i32, i32) {
    %c0_i32 = arith.constant 0 : i32
    %c0_i32_0 = arith.constant 0 : i32
    %c0_i32_1 = arith.constant 0 : i32
    return %c0_i32, %c0_i32_0 : i32, i32
  }
  func.func @transform_2(%arg0: i32) -> (i32, i32) {
    %c0_i32 = arith.constant 0 : i32
    %c0_i32_0 = arith.constant 0 : i32
    return %arg0, %c0_i32 : i32, i32
  }
}

module attributes {stable_mosaic.version = 11 : i64} {
  func.func @_matmul_kernel(%arg0: i32, %arg1: memref<256x128xbf16, #tpu.memory_space<vmem>>, %arg2: memref<128x16xbf16, #tpu.memory_space<vmem>>, %arg3: memref<256x16xbf16, #tpu.memory_space<vmem>>, %arg4: memref<1x2x16xf32, #tpu.memory_space<vmem>>) attributes {dimension_semantics = [#tpu.dimension_semantics<parallel>], iteration_bounds = array<i64: 2>, scalar_prefetch = 0 : i64, scratch_operands = 0 : i64, tpu.core_type = #tpu.core_type<tc>, window_params = [{transform_indices = @transform_0, window_bounds = array<i64: 256, 128>}, {pipeline_mode = #tpu.pipeline_mode<synchronous>, transform_indices = @transform_1, window_bounds = array<i64: 128, 16>}, {transform_indices = @transform_2, window_bounds = array<i64: 256, 16>}, {transform_indices = @transform_3, window_bounds = array<i64: 1, 2, 16>}]} {
    %c0 = arith.constant 0 : index
    %c0_0 = arith.constant 0 : index
    %0 = vector.load %arg1[%c0, %c0_0] : memref<256x128xbf16, #tpu.memory_space<vmem>>, vector<256x128xbf16>
    %c0_1 = arith.constant 0 : index
    %c0_2 = arith.constant 0 : index
    %1 = vector.load %arg2[%c0_1, %c0_2] : memref<128x16xbf16, #tpu.memory_space<vmem>>, vector<128x16xbf16>
    %cst = arith.constant dense<0.000000e+00> : vector<256x16xf32>
    %2 = tpu.matmul %0, %1, %cst {dimension_numbers = #tpu.dot_dimension_numbers<[1], [0], [0], [1], [0, 0, 1, 1], [], []>} : vector<256x128xbf16>, vector<128x16xbf16>, vector<256x16xf32> -> vector<256x16xf32>
    %cst_3 = arith.constant dense<0.000000e+00> : vector<16xf32>
    %3 = vector.multi_reduction <add>, %2, %cst_3 [0] : vector<256x16xf32> to vector<16xf32>
    %4 = vector.shape_cast %3 : vector<16xf32> to vector<1x16xf32>
    %5 = arith.mulf %2, %2 : vector<256x16xf32>
    %cst_4 = arith.constant dense<0.000000e+00> : vector<16xf32>
    %6 = vector.multi_reduction <add>, %5, %cst_4 [0] : vector<256x16xf32> to vector<16xf32>
    %7 = vector.shape_cast %6 : vector<16xf32> to vector<1x16xf32>
    %8 = tpu.concatenate %4, %7 in 0 : vector<1x16xf32>, vector<1x16xf32> -> vector<2x16xf32>
    %9 = vector.shape_cast %8 : vector<2x16xf32> to vector<1x2x16xf32>
    %c0_5 = arith.constant 0 : index
    %c0_6 = arith.constant 0 : index
    %c0_7 = arith.constant 0 : index
    %10 = vector.load %arg4[%c0_5, %c0_6, %c0_7] : memref<1x2x16xf32, #tpu.memory_space<vmem>>, vector<1x2x16xf32>
    tpu.vector_store %arg4[%c0_5, %c0_6, %c0_7], %9 {strides = array<i32>} : memref<1x2x16xf32, #tpu.memory_space<vmem>>, vector<1x2x16xf32>,
    %11 = arith.truncf %2 : vector<256x16xf32> to vector<256x16xbf16>
    %c0_8 = arith.constant 0 : index
    %c0_9 = arith.constant 0 : index
    %12 = vector.load %arg3[%c0_8, %c0_9] : memref<256x16xbf16, #tpu.memory_space<vmem>>, vector<256x16xbf16>
    tpu.vector_store %arg3[%c0_8, %c0_9], %11 {strides = array<i32>} : memref<256x16xbf16, #tpu.memory_space<vmem>>, vector<256x16xbf16>,
    return
  }
  func.func @transform_0(%arg0: i32) -> (i32, i32) {
    %c0_i32 = arith.constant 0 : i32
    %c0_i32_0 = arith.constant 0 : i32
    return %arg0, %c0_i32 : i32, i32
  }
  func.func @transform_1(%arg0: i32) -> (i32, i32) {
    %c0_i32 = arith.constant 0 : i32
    %c0_i32_0 = arith.constant 0 : i32
    %c0_i32_1 = arith.constant 0 : i32
    return %c0_i32, %c0_i32_0 : i32, i32
  }
  func.func @transform_2(%arg0: i32) -> (i32, i32) {
    %c0_i32 = arith.constant 0 : i32
    %c0_i32_0 = arith.constant 0 : i32
    return %arg0, %c0_i32 : i32, i32
  }
  func.func @transform_3(%arg0: i32) -> (i32, i32, i32) {
    %c0_i32 = arith.constant 0 : i32
    %c0_i32_0 = arith.constant 0 : i32
    %c0_i32_1 = arith.constant 0 : i32
    return %arg0, %c0_i32, %c0_i32_0 : i32, i32, i32
  }
}

module attributes {stable_mosaic.version = 11 : i64} {
  func.func @_bn_lrelu_kernel(%arg0: i32, %arg1: memref<256x16xbf16, #tpu.memory_space<vmem>>, %arg2: memref<1x16xf32, #tpu.memory_space<vmem>>, %arg3: memref<1x16xf32, #tpu.memory_space<vmem>>, %arg4: memref<256x16xbf16, #tpu.memory_space<vmem>>) attributes {dimension_semantics = [#tpu.dimension_semantics<parallel>], iteration_bounds = array<i64: 2>, scalar_prefetch = 0 : i64, scratch_operands = 0 : i64, tpu.core_type = #tpu.core_type<tc>, window_params = [{transform_indices = @transform_0, window_bounds = array<i64: 256, 16>}, {pipeline_mode = #tpu.pipeline_mode<synchronous>, transform_indices = @transform_1, window_bounds = array<i64: 1, 16>}, {pipeline_mode = #tpu.pipeline_mode<synchronous>, transform_indices = @transform_2, window_bounds = array<i64: 1, 16>}, {transform_indices = @transform_3, window_bounds = array<i64: 256, 16>}]} {
    %c0 = arith.constant 0 : index
    %c0_0 = arith.constant 0 : index
    %0 = vector.load %arg1[%c0, %c0_0] : memref<256x16xbf16, #tpu.memory_space<vmem>>, vector<256x16xbf16>
    %1 = arith.extf %0 : vector<256x16xbf16> to vector<256x16xf32>
    %c0_1 = arith.constant 0 : index
    %c0_2 = arith.constant 0 : index
    %2 = vector.load %arg2[%c0_1, %c0_2] : memref<1x16xf32, #tpu.memory_space<vmem>>, vector<1x16xf32>
    %3 = vector.broadcast %2 : vector<1x16xf32> to vector<256x16xf32>
    %4 = arith.mulf %1, %3 : vector<256x16xf32>
    %c0_3 = arith.constant 0 : index
    %c0_4 = arith.constant 0 : index
    %5 = vector.load %arg3[%c0_3, %c0_4] : memref<1x16xf32, #tpu.memory_space<vmem>>, vector<1x16xf32>
    %6 = vector.broadcast %5 : vector<1x16xf32> to vector<256x16xf32>
    %7 = arith.addf %4, %6 : vector<256x16xf32>
    %cst = arith.constant 0.000000e+00 : f32
    %8 = vector.broadcast %cst : f32 to vector<256x16xf32>
    %9 = arith.cmpf ogt, %7, %8 : vector<256x16xf32>
    %cst_5 = arith.constant 2.000000e-01 : f32
    %10 = vector.broadcast %cst_5 : f32 to vector<256x16xf32>
    %11 = arith.mulf %10, %7 : vector<256x16xf32>
    %12 = arith.select %9, %7, %11 : vector<256x16xi1>, vector<256x16xf32>
    %13 = arith.truncf %12 : vector<256x16xf32> to vector<256x16xbf16>
    %c0_6 = arith.constant 0 : index
    %c0_7 = arith.constant 0 : index
    %14 = vector.load %arg4[%c0_6, %c0_7] : memref<256x16xbf16, #tpu.memory_space<vmem>>, vector<256x16xbf16>
    tpu.vector_store %arg4[%c0_6, %c0_7], %13 {strides = array<i32>} : memref<256x16xbf16, #tpu.memory_space<vmem>>, vector<256x16xbf16>,
    return
  }
  func.func @transform_0(%arg0: i32) -> (i32, i32) {
    %c0_i32 = arith.constant 0 : i32
    %c0_i32_0 = arith.constant 0 : i32
    return %arg0, %c0_i32 : i32, i32
  }
  func.func @transform_1(%arg0: i32) -> (i32, i32) {
    %c0_i32 = arith.constant 0 : i32
    %c0_i32_0 = arith.constant 0 : i32
    %c0_i32_1 = arith.constant 0 : i32
    return %c0_i32, %c0_i32_0 : i32, i32
  }
  func.func @transform_2(%arg0: i32) -> (i32, i32) {
    %c0_i32 = arith.constant 0 : i32
    %c0_i32_0 = arith.constant 0 : i32
    %c0_i32_1 = arith.constant 0 : i32
    return %c0_i32, %c0_i32_0 : i32, i32
  }
  func.func @transform_3(%arg0: i32) -> (i32, i32) {
    %c0_i32 = arith.constant 0 : i32
    %c0_i32_0 = arith.constant 0 : i32
    return %arg0, %c0_i32 : i32, i32
  }
}

module attributes {stable_mosaic.version = 11 : i64} {
  func.func @_matmul_kernel(%arg0: i32, %arg1: memref<128x256xbf16, #tpu.memory_space<vmem>>, %arg2: memref<256x32xbf16, #tpu.memory_space<vmem>>, %arg3: memref<128x32xbf16, #tpu.memory_space<vmem>>, %arg4: memref<1x2x32xf32, #tpu.memory_space<vmem>>) attributes {dimension_semantics = [#tpu.dimension_semantics<parallel>], iteration_bounds = array<i64: 1>, scalar_prefetch = 0 : i64, scratch_operands = 0 : i64, tpu.core_type = #tpu.core_type<tc>, window_params = [{transform_indices = @transform_0, window_bounds = array<i64: 128, 256>}, {pipeline_mode = #tpu.pipeline_mode<synchronous>, transform_indices = @transform_1, window_bounds = array<i64: 256, 32>}, {transform_indices = @transform_2, window_bounds = array<i64: 128, 32>}, {transform_indices = @transform_3, window_bounds = array<i64: 1, 2, 32>}]} {
    %c0 = arith.constant 0 : index
    %c0_0 = arith.constant 0 : index
    %0 = vector.load %arg1[%c0, %c0_0] : memref<128x256xbf16, #tpu.memory_space<vmem>>, vector<128x256xbf16>
    %c0_1 = arith.constant 0 : index
    %c0_2 = arith.constant 0 : index
    %1 = vector.load %arg2[%c0_1, %c0_2] : memref<256x32xbf16, #tpu.memory_space<vmem>>, vector<256x32xbf16>
    %cst = arith.constant dense<0.000000e+00> : vector<128x32xf32>
    %2 = tpu.matmul %0, %1, %cst {dimension_numbers = #tpu.dot_dimension_numbers<[1], [0], [0], [1], [0, 0, 1, 1], [], []>} : vector<128x256xbf16>, vector<256x32xbf16>, vector<128x32xf32> -> vector<128x32xf32>
    %cst_3 = arith.constant dense<0.000000e+00> : vector<32xf32>
    %3 = vector.multi_reduction <add>, %2, %cst_3 [0] : vector<128x32xf32> to vector<32xf32>
    %4 = vector.shape_cast %3 : vector<32xf32> to vector<1x32xf32>
    %5 = arith.mulf %2, %2 : vector<128x32xf32>
    %cst_4 = arith.constant dense<0.000000e+00> : vector<32xf32>
    %6 = vector.multi_reduction <add>, %5, %cst_4 [0] : vector<128x32xf32> to vector<32xf32>
    %7 = vector.shape_cast %6 : vector<32xf32> to vector<1x32xf32>
    %8 = tpu.concatenate %4, %7 in 0 : vector<1x32xf32>, vector<1x32xf32> -> vector<2x32xf32>
    %9 = vector.shape_cast %8 : vector<2x32xf32> to vector<1x2x32xf32>
    %c0_5 = arith.constant 0 : index
    %c0_6 = arith.constant 0 : index
    %c0_7 = arith.constant 0 : index
    %10 = vector.load %arg4[%c0_5, %c0_6, %c0_7] : memref<1x2x32xf32, #tpu.memory_space<vmem>>, vector<1x2x32xf32>
    tpu.vector_store %arg4[%c0_5, %c0_6, %c0_7], %9 {strides = array<i32>} : memref<1x2x32xf32, #tpu.memory_space<vmem>>, vector<1x2x32xf32>,
    %11 = arith.truncf %2 : vector<128x32xf32> to vector<128x32xbf16>
    %c0_8 = arith.constant 0 : index
    %c0_9 = arith.constant 0 : index
    %12 = vector.load %arg3[%c0_8, %c0_9] : memref<128x32xbf16, #tpu.memory_space<vmem>>, vector<128x32xbf16>
    tpu.vector_store %arg3[%c0_8, %c0_9], %11 {strides = array<i32>} : memref<128x32xbf16, #tpu.memory_space<vmem>>, vector<128x32xbf16>,
    return
  }
  func.func @transform_0(%arg0: i32) -> (i32, i32) {
    %c0_i32 = arith.constant 0 : i32
    %c0_i32_0 = arith.constant 0 : i32
    return %arg0, %c0_i32 : i32, i32
  }
  func.func @transform_1(%arg0: i32) -> (i32, i32) {
    %c0_i32 = arith.constant 0 : i32
    %c0_i32_0 = arith.constant 0 : i32
    %c0_i32_1 = arith.constant 0 : i32
    return %c0_i32, %c0_i32_0 : i32, i32
  }
  func.func @transform_2(%arg0: i32) -> (i32, i32) {
    %c0_i32 = arith.constant 0 : i32
    %c0_i32_0 = arith.constant 0 : i32
    return %arg0, %c0_i32 : i32, i32
  }
  func.func @transform_3(%arg0: i32) -> (i32, i32, i32) {
    %c0_i32 = arith.constant 0 : i32
    %c0_i32_0 = arith.constant 0 : i32
    %c0_i32_1 = arith.constant 0 : i32
    return %arg0, %c0_i32, %c0_i32_0 : i32, i32, i32
  }
}

module attributes {stable_mosaic.version = 11 : i64} {
  func.func @_bn_lrelu_kernel(%arg0: i32, %arg1: memref<128x32xbf16, #tpu.memory_space<vmem>>, %arg2: memref<1x32xf32, #tpu.memory_space<vmem>>, %arg3: memref<1x32xf32, #tpu.memory_space<vmem>>, %arg4: memref<128x32xbf16, #tpu.memory_space<vmem>>) attributes {dimension_semantics = [#tpu.dimension_semantics<parallel>], iteration_bounds = array<i64: 1>, scalar_prefetch = 0 : i64, scratch_operands = 0 : i64, tpu.core_type = #tpu.core_type<tc>, window_params = [{transform_indices = @transform_0, window_bounds = array<i64: 128, 32>}, {pipeline_mode = #tpu.pipeline_mode<synchronous>, transform_indices = @transform_1, window_bounds = array<i64: 1, 32>}, {pipeline_mode = #tpu.pipeline_mode<synchronous>, transform_indices = @transform_2, window_bounds = array<i64: 1, 32>}, {transform_indices = @transform_3, window_bounds = array<i64: 128, 32>}]} {
    %c0 = arith.constant 0 : index
    %c0_0 = arith.constant 0 : index
    %0 = vector.load %arg1[%c0, %c0_0] : memref<128x32xbf16, #tpu.memory_space<vmem>>, vector<128x32xbf16>
    %1 = arith.extf %0 : vector<128x32xbf16> to vector<128x32xf32>
    %c0_1 = arith.constant 0 : index
    %c0_2 = arith.constant 0 : index
    %2 = vector.load %arg2[%c0_1, %c0_2] : memref<1x32xf32, #tpu.memory_space<vmem>>, vector<1x32xf32>
    %3 = vector.broadcast %2 : vector<1x32xf32> to vector<128x32xf32>
    %4 = arith.mulf %1, %3 : vector<128x32xf32>
    %c0_3 = arith.constant 0 : index
    %c0_4 = arith.constant 0 : index
    %5 = vector.load %arg3[%c0_3, %c0_4] : memref<1x32xf32, #tpu.memory_space<vmem>>, vector<1x32xf32>
    %6 = vector.broadcast %5 : vector<1x32xf32> to vector<128x32xf32>
    %7 = arith.addf %4, %6 : vector<128x32xf32>
    %cst = arith.constant 0.000000e+00 : f32
    %8 = vector.broadcast %cst : f32 to vector<128x32xf32>
    %9 = arith.cmpf ogt, %7, %8 : vector<128x32xf32>
    %cst_5 = arith.constant 2.000000e-01 : f32
    %10 = vector.broadcast %cst_5 : f32 to vector<128x32xf32>
    %11 = arith.mulf %10, %7 : vector<128x32xf32>
    %12 = arith.select %9, %7, %11 : vector<128x32xi1>, vector<128x32xf32>
    %13 = arith.truncf %12 : vector<128x32xf32> to vector<128x32xbf16>
    %c0_6 = arith.constant 0 : index
    %c0_7 = arith.constant 0 : index
    %14 = vector.load %arg4[%c0_6, %c0_7] : memref<128x32xbf16, #tpu.memory_space<vmem>>, vector<128x32xbf16>
    tpu.vector_store %arg4[%c0_6, %c0_7], %13 {strides = array<i32>} : memref<128x32xbf16, #tpu.memory_space<vmem>>, vector<128x32xbf16>,
    return
  }
  func.func @transform_0(%arg0: i32) -> (i32, i32) {
    %c0_i32 = arith.constant 0 : i32
    %c0_i32_0 = arith.constant 0 : i32
    return %arg0, %c0_i32 : i32, i32
  }
  func.func @transform_1(%arg0: i32) -> (i32, i32) {
    %c0_i32 = arith.constant 0 : i32
    %c0_i32_0 = arith.constant 0 : i32
    %c0_i32_1 = arith.constant 0 : i32
    return %c0_i32, %c0_i32_0 : i32, i32
  }
  func.func @transform_2(%arg0: i32) -> (i32, i32) {
    %c0_i32 = arith.constant 0 : i32
    %c0_i32_0 = arith.constant 0 : i32
    %c0_i32_1 = arith.constant 0 : i32
    return %c0_i32, %c0_i32_0 : i32, i32
  }
  func.func @transform_3(%arg0: i32) -> (i32, i32) {
    %c0_i32 = arith.constant 0 : i32
    %c0_i32_0 = arith.constant 0 : i32
    return %arg0, %c0_i32 : i32, i32
  }
}

module attributes {stable_mosaic.version = 11 : i64} {
  func.func @_matmul_kernel(%arg0: i32, %arg1: memref<32x512xbf16, #tpu.memory_space<vmem>>, %arg2: memref<512x64xbf16, #tpu.memory_space<vmem>>, %arg3: memref<32x64xbf16, #tpu.memory_space<vmem>>, %arg4: memref<1x2x64xf32, #tpu.memory_space<vmem>>) attributes {dimension_semantics = [#tpu.dimension_semantics<parallel>], iteration_bounds = array<i64: 1>, scalar_prefetch = 0 : i64, scratch_operands = 0 : i64, tpu.core_type = #tpu.core_type<tc>, window_params = [{transform_indices = @transform_0, window_bounds = array<i64: 32, 512>}, {pipeline_mode = #tpu.pipeline_mode<synchronous>, transform_indices = @transform_1, window_bounds = array<i64: 512, 64>}, {transform_indices = @transform_2, window_bounds = array<i64: 32, 64>}, {transform_indices = @transform_3, window_bounds = array<i64: 1, 2, 64>}]} {
    %c0 = arith.constant 0 : index
    %c0_0 = arith.constant 0 : index
    %0 = vector.load %arg1[%c0, %c0_0] : memref<32x512xbf16, #tpu.memory_space<vmem>>, vector<32x512xbf16>
    %c0_1 = arith.constant 0 : index
    %c0_2 = arith.constant 0 : index
    %1 = vector.load %arg2[%c0_1, %c0_2] : memref<512x64xbf16, #tpu.memory_space<vmem>>, vector<512x64xbf16>
    %cst = arith.constant dense<0.000000e+00> : vector<32x64xf32>
    %2 = tpu.matmul %0, %1, %cst {dimension_numbers = #tpu.dot_dimension_numbers<[1], [0], [0], [1], [0, 0, 1, 1], [], []>} : vector<32x512xbf16>, vector<512x64xbf16>, vector<32x64xf32> -> vector<32x64xf32>
    %cst_3 = arith.constant dense<0.000000e+00> : vector<64xf32>
    %3 = vector.multi_reduction <add>, %2, %cst_3 [0] : vector<32x64xf32> to vector<64xf32>
    %4 = vector.shape_cast %3 : vector<64xf32> to vector<1x64xf32>
    %5 = arith.mulf %2, %2 : vector<32x64xf32>
    %cst_4 = arith.constant dense<0.000000e+00> : vector<64xf32>
    %6 = vector.multi_reduction <add>, %5, %cst_4 [0] : vector<32x64xf32> to vector<64xf32>
    %7 = vector.shape_cast %6 : vector<64xf32> to vector<1x64xf32>
    %8 = tpu.concatenate %4, %7 in 0 : vector<1x64xf32>, vector<1x64xf32> -> vector<2x64xf32>
    %9 = vector.shape_cast %8 : vector<2x64xf32> to vector<1x2x64xf32>
    %c0_5 = arith.constant 0 : index
    %c0_6 = arith.constant 0 : index
    %c0_7 = arith.constant 0 : index
    %10 = vector.load %arg4[%c0_5, %c0_6, %c0_7] : memref<1x2x64xf32, #tpu.memory_space<vmem>>, vector<1x2x64xf32>
    tpu.vector_store %arg4[%c0_5, %c0_6, %c0_7], %9 {strides = array<i32>} : memref<1x2x64xf32, #tpu.memory_space<vmem>>, vector<1x2x64xf32>,
    %11 = arith.truncf %2 : vector<32x64xf32> to vector<32x64xbf16>
    %c0_8 = arith.constant 0 : index
    %c0_9 = arith.constant 0 : index
    %12 = vector.load %arg3[%c0_8, %c0_9] : memref<32x64xbf16, #tpu.memory_space<vmem>>, vector<32x64xbf16>
    tpu.vector_store %arg3[%c0_8, %c0_9], %11 {strides = array<i32>} : memref<32x64xbf16, #tpu.memory_space<vmem>>, vector<32x64xbf16>,
    return
  }
  func.func @transform_0(%arg0: i32) -> (i32, i32) {
    %c0_i32 = arith.constant 0 : i32
    %c0_i32_0 = arith.constant 0 : i32
    return %arg0, %c0_i32 : i32, i32
  }
  func.func @transform_1(%arg0: i32) -> (i32, i32) {
    %c0_i32 = arith.constant 0 : i32
    %c0_i32_0 = arith.constant 0 : i32
    %c0_i32_1 = arith.constant 0 : i32
    return %c0_i32, %c0_i32_0 : i32, i32
  }
  func.func @transform_2(%arg0: i32) -> (i32, i32) {
    %c0_i32 = arith.constant 0 : i32
    %c0_i32_0 = arith.constant 0 : i32
    return %arg0, %c0_i32 : i32, i32
  }
  func.func @transform_3(%arg0: i32) -> (i32, i32, i32) {
    %c0_i32 = arith.constant 0 : i32
    %c0_i32_0 = arith.constant 0 : i32
    %c0_i32_1 = arith.constant 0 : i32
    return %arg0, %c0_i32, %c0_i32_0 : i32, i32, i32
  }
}

module attributes {stable_mosaic.version = 11 : i64} {
  func.func @_bn_lrelu_kernel(%arg0: i32, %arg1: memref<32x64xbf16, #tpu.memory_space<vmem>>, %arg2: memref<1x64xf32, #tpu.memory_space<vmem>>, %arg3: memref<1x64xf32, #tpu.memory_space<vmem>>, %arg4: memref<32x64xbf16, #tpu.memory_space<vmem>>) attributes {dimension_semantics = [#tpu.dimension_semantics<parallel>], iteration_bounds = array<i64: 1>, scalar_prefetch = 0 : i64, scratch_operands = 0 : i64, tpu.core_type = #tpu.core_type<tc>, window_params = [{transform_indices = @transform_0, window_bounds = array<i64: 32, 64>}, {pipeline_mode = #tpu.pipeline_mode<synchronous>, transform_indices = @transform_1, window_bounds = array<i64: 1, 64>}, {pipeline_mode = #tpu.pipeline_mode<synchronous>, transform_indices = @transform_2, window_bounds = array<i64: 1, 64>}, {transform_indices = @transform_3, window_bounds = array<i64: 32, 64>}]} {
    %c0 = arith.constant 0 : index
    %c0_0 = arith.constant 0 : index
    %0 = vector.load %arg1[%c0, %c0_0] : memref<32x64xbf16, #tpu.memory_space<vmem>>, vector<32x64xbf16>
    %1 = arith.extf %0 : vector<32x64xbf16> to vector<32x64xf32>
    %c0_1 = arith.constant 0 : index
    %c0_2 = arith.constant 0 : index
    %2 = vector.load %arg2[%c0_1, %c0_2] : memref<1x64xf32, #tpu.memory_space<vmem>>, vector<1x64xf32>
    %3 = vector.broadcast %2 : vector<1x64xf32> to vector<32x64xf32>
    %4 = arith.mulf %1, %3 : vector<32x64xf32>
    %c0_3 = arith.constant 0 : index
    %c0_4 = arith.constant 0 : index
    %5 = vector.load %arg3[%c0_3, %c0_4] : memref<1x64xf32, #tpu.memory_space<vmem>>, vector<1x64xf32>
    %6 = vector.broadcast %5 : vector<1x64xf32> to vector<32x64xf32>
    %7 = arith.addf %4, %6 : vector<32x64xf32>
    %cst = arith.constant 0.000000e+00 : f32
    %8 = vector.broadcast %cst : f32 to vector<32x64xf32>
    %9 = arith.cmpf ogt, %7, %8 : vector<32x64xf32>
    %cst_5 = arith.constant 2.000000e-01 : f32
    %10 = vector.broadcast %cst_5 : f32 to vector<32x64xf32>
    %11 = arith.mulf %10, %7 : vector<32x64xf32>
    %12 = arith.select %9, %7, %11 : vector<32x64xi1>, vector<32x64xf32>
    %13 = arith.truncf %12 : vector<32x64xf32> to vector<32x64xbf16>
    %c0_6 = arith.constant 0 : index
    %c0_7 = arith.constant 0 : index
    %14 = vector.load %arg4[%c0_6, %c0_7] : memref<32x64xbf16, #tpu.memory_space<vmem>>, vector<32x64xbf16>
    tpu.vector_store %arg4[%c0_6, %c0_7], %13 {strides = array<i32>} : memref<32x64xbf16, #tpu.memory_space<vmem>>, vector<32x64xbf16>,
    return
  }
  func.func @transform_0(%arg0: i32) -> (i32, i32) {
    %c0_i32 = arith.constant 0 : i32
    %c0_i32_0 = arith.constant 0 : i32
    return %arg0, %c0_i32 : i32, i32
  }
  func.func @transform_1(%arg0: i32) -> (i32, i32) {
    %c0_i32 = arith.constant 0 : i32
    %c0_i32_0 = arith.constant 0 : i32
    %c0_i32_1 = arith.constant 0 : i32
    return %c0_i32, %c0_i32_0 : i32, i32
  }
  func.func @transform_2(%arg0: i32) -> (i32, i32) {
    %c0_i32 = arith.constant 0 : i32
    %c0_i32_0 = arith.constant 0 : i32
    %c0_i32_1 = arith.constant 0 : i32
    return %c0_i32, %c0_i32_0 : i32, i32
  }
  func.func @transform_3(%arg0: i32) -> (i32, i32) {
    %c0_i32 = arith.constant 0 : i32
    %c0_i32_0 = arith.constant 0 : i32
    return %arg0, %c0_i32 : i32, i32
  }
}

</mosaic_0001>

<llo_original>
// kernel: discriminator_forward.7
$region0: #{discriminator_forward.7}
  #allocation0 [shape = 'u32[]', space=smem, size = 0x4, offset = 0x4, fixed_abs, tag = 'smem constant byte address 0x4 - core index']
  #allocation1 [shape = 'u32[144,128]{1,0:T(1,128)}', space=vmem, size = 0x12000, scoped, tag = 'internal scratch']
  %s0 = inlined_call_operand.vmem [shape: bf16[2048,48], index: 0, kind: input, shape index: {}]
  %s1 = inlined_call_operand.vmem [shape: bf16[48,8], index: 1, kind: input, shape index: {}]
  %s2 = inlined_call_operand.vmem [shape: bf16[2048,8], index: 2, kind: output, shape index: {}]
  %s3 = sld [smem:[#allocation0]]
  $region41: #{discriminator_forward.7} parent=0
    _
  %s5 = ssub.s32 1, %s3
  %s6 = scalar_select 0, %s5, %s3
  loop: start=0, step=1, limit=4
  $region2: #{discriminator_forward.7} parent=0 // loop_pre_header
    _
  $region3: #{discriminator_forward.7} parent=0 // loop_header
    %s8 = sphi 0, %s12
    %p9 = scmp.ge.s32.totalorder %s8, 4
    %s18 = sphi 0, %s20
    %s21 = sphi 0, %s18
    %s22 = sphi 0, %s21
    %s38 = sphi 0, %s22
    %s42 = sphi 0, %s42
    %s44 = sphi 0, %s42
    %s45 = sphi 0, %s44
    %s59 = sphi 0, %s45
    %s65 = sphi 0, %s67
    %s68 = sphi 0, %s65
    %s69 = sphi 0, %s68
    %s85 = sphi 0, %s69
  $region4: #{discriminator_forward.7} parent=0 // loop_header_branch
    %11 = sbr.rel (%p9) target = $region8
  $region5: #{discriminator_forward.7} parent=0 // loop_body
    %s13 = ssub.s32 %s8, 1
    %s14 = ssub.s32 %s8, 2
    %s15 = sadd.s32 %s8, 1
    %s16 = ssub.s32 %s8, %s15
    %p17 = scmp.eq.s32.totalorder %s16, 0
    %s19 = sadd.s32 %s18, 1
    %s20 = scalar_select %p17, %s18, %s19
    %p23 = pneg %p17
    %p24 = scmp.eq.s32.totalorder %s8, 1
    %p25 = por %p23, %p24
    %p26 = scmp.ne.s32.totalorder %s18, %s21
    %p27 = scmp.eq.s32.totalorder %s8, 0
    %p28 = por %p26, %p27
    %p29 = scmp.ne.s32.totalorder %s18, %s21
    %p30 = scmp.eq.s32.totalorder %s13, 1
    %p31 = por %p29, %p30
    %p32 = scmp.ne.s32.totalorder %s21, %s22
    %p33 = scmp.eq.s32.totalorder %s13, 0
    %p34 = por %p32, %p33
    %p35 = scmp.ne.s32.totalorder %s21, %s22
    %p36 = scmp.eq.s32.totalorder %s14, 1
    %p37 = por %p35, %p36
    %p39 = scmp.ne.s32.totalorder %s22, %s38
    %p40 = scmp.eq.s32.totalorder %s14, 0
    %p41 = por %p39, %p40
    %s43 = sadd.s32 %s42, 1
    %p46 = scmp.eq.s32.totalorder %s8, 1
    %p47 = scmp.ne.s32.totalorder %s42, %s44
    %p48 = scmp.eq.s32.totalorder %s8, 0
    %p49 = por %p47, %p48
    %p50 = scmp.ne.s32.totalorder %s42, %s44
    %p51 = scmp.eq.s32.totalorder %s13, 1
    %p52 = por %p50, %p51
    %p53 = scmp.ne.s32.totalorder %s44, %s45
    %p54 = scmp.eq.s32.totalorder %s13, 0
    %p55 = por %p53, %p54
    %p56 = scmp.ne.s32.totalorder %s44, %s45
    %p57 = scmp.eq.s32.totalorder %s14, 1
    %p58 = por %p56, %p57
    %p60 = scmp.ne.s32.totalorder %s45, %s59
    %p61 = scmp.eq.s32.totalorder %s14, 0
    %p62 = por %p60, %p61
    %s63 = ssub.s32 %s8, %s15
    %p64 = scmp.eq.s32.totalorder %s63, 0
    %s66 = sadd.s32 %s65, 1
    %s67 = scalar_select %p64, %s65, %s66
    %p70 = pneg %p64
    %p71 = scmp.eq.s32.totalorder %s8, 1
    %p72 = por %p70, %p71
    %p73 = scmp.ne.s32.totalorder %s65, %s68
    %p74 = scmp.eq.s32.totalorder %s8, 0
    %p75 = por %p73, %p74
    %p76 = scmp.ne.s32.totalorder %s65, %s68
    %p77 = scmp.eq.s32.totalorder %s13, 1
    %p78 = por %p76, %p77
    %p79 = scmp.ne.s32.totalorder %s68, %s69
    %p80 = scmp.eq.s32.totalorder %s13, 0
    %p81 = por %p79, %p80
    %p82 = scmp.ne.s32.totalorder %s68, %s69
    %p83 = scmp.eq.s32.totalorder %s14, 1
    %p84 = por %p82, %p83
    %p86 = scmp.ne.s32.totalorder %s69, %s85
    %p87 = scmp.eq.s32.totalorder %s14, 0
    %p88 = por %p86, %p87
    %p89 = scmp.le.s32.totalorder 1, %s8
    %p90 = scmp.lt.s32.totalorder %s8, 3
    %p91 = pnand %p89, %p90
    %p92 = pneg %p91
    // Predicated region
    $region9: #{discriminator_forward.7} parent=5 // pred_check
      _
    $region10: #{discriminator_forward.7} parent=5 // pred_check_branch
      %94 = sbr.rel (%p91) target = $region12
    $region11: #{discriminator_forward.7} parent=5 // pred_region
      %s95 = ssub.s32 %s8, 1
      // Predicated region
      $region13: #{discriminator_forward.7} parent=11 // pred_check
        %p96 = pneg %p55
      $region14: #{discriminator_forward.7} parent=11 // pred_check_branch
        %98 = sbr.rel (%p96) target = $region16
      $region15: #{discriminator_forward.7} parent=11 // pred_region
        _
      $region16: #{discriminator_forward.7} parent=11 // pred_fallthru
        _
    $region12: #{discriminator_forward.7} parent=5 // pred_fallthru
      _
    %p99 = scmp.lt.s32.totalorder %s8, 2
    // Predicated region
    $region17: #{discriminator_forward.7} parent=5 // pred_check
      %p100 = pneg %p99
    $region18: #{discriminator_forward.7} parent=5 // pred_check_branch
      %102 = sbr.rel (%p100) target = $region20
    $region19: #{discriminator_forward.7} parent=5 // pred_region
      // Predicated region
      $region21: #{discriminator_forward.7} parent=19 // pred_check
        %p103 = pneg %p28
      $region22: #{discriminator_forward.7} parent=19 // pred_check_branch
        %105 = sbr.rel (%p103) target = $region24
      $region23: #{discriminator_forward.7} parent=19 // pred_region
        %s106 = smul.u32 128, %s8
        %p107 = scmp.lt.s32.totalorder %s106, 255
        %s108 = scalar_select %p107, %s106, 255
        %s109 = smul.addr %s108, 4
        %s110 = scalar_lea.vmem %s0, %s109
        %s111 = smul.u32 128, %s8
      $region24: #{discriminator_forward.7} parent=19 // pred_fallthru
        _
    $region20: #{discriminator_forward.7} parent=5 // pred_fallthru
      _
    %p112 = scmp.le.s32.totalorder 1, %s8
    %p113 = scmp.lt.s32.totalorder %s8, 3
    %p114 = pnand %p112, %p113
    %p115 = pneg %p114
    // Predicated region
    $region25: #{discriminator_forward.7} parent=5 // pred_check
      _
    $region26: #{discriminator_forward.7} parent=5 // pred_check_branch
      %117 = sbr.rel (%p114) target = $region28
    $region27: #{discriminator_forward.7} parent=5 // pred_region
      %s118 = ssub.s32 %s8, 1
      %s119 = smul.u32 128, %s13
      %p120 = scmp.lt.s32.totalorder %s119, 255
      %s121 = scalar_select %p120, %s119, 255
      %s122 = smul.addr %s121, 4
      %s123 = scalar_lea.vmem %s0, %s122
      %p124 = pneg %p34
      %p125 = pneg %p31
      %p126 = pneg %p55
      %p127 = pneg %p52
      %p128 = pneg %p81
      %p129 = pneg %p78
      %s130 = smul.u32 128, %s13
      %p131 = scmp.lt.s32.totalorder %s130, 255
      %s132 = scalar_select %p131, %s130, 255
      %s133 = smul.addr %s132, 4
      %s134 = scalar_lea.vmem %s2, %s133
      %s135 = smul.u32 128, %s13
      %p136 = scmp.lt.s32.totalorder %s135, 255
      %s137 = scalar_select %p136, %s135, 255
      %s138 = smul.addr %s137, 4
      %s139 = scalar_lea.vmem %s0, %s138
      %s140 = smul.u32 128, %s13
      %s141 = smul.u32 128, %s13
      %p142 = scmp.lt.s32.totalorder %s141, 255
      %s143 = scalar_select %p142, %s141, 255
      %s144 = smul.addr %s143, 4
      %s145 = scalar_lea.vmem %s2, %s144
      %s146 = smul.u32 128, %s13
      %v148 = vld [vmem:[%s139] sm:$0xf]
      %v149 = vld [vmem:[%s139 + $0x4] sm:$0xf]
      %v150 = vld [vmem:[%s139 + $0x8] sm:$0xf]
      %v151 = vld [vmem:[%s139 + $0xc] sm:$0xf]
      %v152 = vld [vmem:[%s139 + $0x10] sm:$0xf]
      %v153 = vld [vmem:[%s139 + $0x14] sm:$0xf]
      %v154 = vld [vmem:[%s139 + $0x18] sm:$0xf]
      %v155 = vld [vmem:[%s139 + $0x1c] sm:$0xf]
      %v156 = vld [vmem:[%s139 + $0x20] sm:$0xf]
      %v157 = vld [vmem:[%s139 + $0x24] sm:$0xf]
      %v158 = vld [vmem:[%s139 + $0x28] sm:$0xf]
      %v159 = vld [vmem:[%s139 + $0x2c] sm:$0xf]
      %v160 = vld [vmem:[%s139 + $0x30] sm:$0xf]
      %v161 = vld [vmem:[%s139 + $0x34] sm:$0xf]
      %v162 = vld [vmem:[%s139 + $0x38] sm:$0xf]
      %v163 = vld [vmem:[%s139 + $0x3c] sm:$0xf]
      %v164 = vld [vmem:[%s139 + $0x40] sm:$0xf]
      %v165 = vld [vmem:[%s139 + $0x44] sm:$0xf]
      %v166 = vld [vmem:[%s139 + $0x48] sm:$0xf]
      %v167 = vld [vmem:[%s139 + $0x4c] sm:$0xf]
      %v168 = vld [vmem:[%s139 + $0x50] sm:$0xf]
      %v169 = vld [vmem:[%s139 + $0x54] sm:$0xf]
      %v170 = vld [vmem:[%s139 + $0x58] sm:$0xf]
      %v171 = vld [vmem:[%s139 + $0x5c] sm:$0xf]
      %v172 = vld [vmem:[%s139 + $0x60] sm:$0xf]
      %v173 = vld [vmem:[%s139 + $0x64] sm:$0xf]
      %v174 = vld [vmem:[%s139 + $0x68] sm:$0xf]
      %v175 = vld [vmem:[%s139 + $0x6c] sm:$0xf]
      %v176 = vld [vmem:[%s139 + $0x70] sm:$0xf]
      %v177 = vld [vmem:[%s139 + $0x74] sm:$0xf]
      %v178 = vld [vmem:[%s139 + $0x78] sm:$0xf]
      %v179 = vld [vmem:[%s139 + $0x7c] sm:$0xf]
      %v180 = vld [vmem:[%s139 + $0x80] sm:$0xf]
      %v181 = vld [vmem:[%s139 + $0x84] sm:$0xf]
      %v182 = vld [vmem:[%s139 + $0x88] sm:$0xf]
      %v183 = vld [vmem:[%s139 + $0x8c] sm:$0xf]
      %v184 = vld [vmem:[%s139 + $0x90] sm:$0xf]
      %v185 = vld [vmem:[%s139 + $0x94] sm:$0xf]
      %v186 = vld [vmem:[%s139 + $0x98] sm:$0xf]
      %v187 = vld [vmem:[%s139 + $0x9c] sm:$0xf]
      %v188 = vld [vmem:[%s139 + $0xa0] sm:$0xf]
      %v189 = vld [vmem:[%s139 + $0xa4] sm:$0xf]
      %v190 = vld [vmem:[%s139 + $0xa8] sm:$0xf]
      %v191 = vld [vmem:[%s139 + $0xac] sm:$0xf]
      %v192 = vld [vmem:[%s139 + $0xb0] sm:$0xf]
      %v193 = vld [vmem:[%s139 + $0xb4] sm:$0xf]
      %v194 = vld [vmem:[%s139 + $0xb8] sm:$0xf]
      %v195 = vld [vmem:[%s139 + $0xbc] sm:$0xf]
      %v196 = vld [vmem:[%s139 + $0xc0] sm:$0xf]
      %v197 = vld [vmem:[%s139 + $0xc4] sm:$0xf]
      %v198 = vld [vmem:[%s139 + $0xc8] sm:$0xf]
      %v199 = vld [vmem:[%s139 + $0xcc] sm:$0xf]
      %v200 = vld [vmem:[%s139 + $0xd0] sm:$0xf]
      %v201 = vld [vmem:[%s139 + $0xd4] sm:$0xf]
      %v202 = vld [vmem:[%s139 + $0xd8] sm:$0xf]
      %v203 = vld [vmem:[%s139 + $0xdc] sm:$0xf]
      %v204 = vld [vmem:[%s139 + $0xe0] sm:$0xf]
      %v205 = vld [vmem:[%s139 + $0xe4] sm:$0xf]
      %v206 = vld [vmem:[%s139 + $0xe8] sm:$0xf]
      %v207 = vld [vmem:[%s139 + $0xec] sm:$0xf]
      %v208 = vld [vmem:[%s139 + $0xf0] sm:$0xf]
      %v209 = vld [vmem:[%s139 + $0xf4] sm:$0xf]
      %v210 = vld [vmem:[%s139 + $0xf8] sm:$0xf]
      %v211 = vld [vmem:[%s139 + $0xfc] sm:$0xf]
      %v212 = vld [vmem:[%s139 + $0x100] sm:$0xf]
      %v213 = vld [vmem:[%s139 + $0x104] sm:$0xf]
      %v214 = vld [vmem:[%s139 + $0x108] sm:$0xf]
      %v215 = vld [vmem:[%s139 + $0x10c] sm:$0xf]
      %v216 = vld [vmem:[%s139 + $0x110] sm:$0xf]
      %v217 = vld [vmem:[%s139 + $0x114] sm:$0xf]
      %v218 = vld [vmem:[%s139 + $0x118] sm:$0xf]
      %v219 = vld [vmem:[%s139 + $0x11c] sm:$0xf]
      %v220 = vld [vmem:[%s139 + $0x120] sm:$0xf]
      %v221 = vld [vmem:[%s139 + $0x124] sm:$0xf]
      %v222 = vld [vmem:[%s139 + $0x128] sm:$0xf]
      %v223 = vld [vmem:[%s139 + $0x12c] sm:$0xf]
      %v224 = vld [vmem:[%s139 + $0x130] sm:$0xf]
      %v225 = vld [vmem:[%s139 + $0x134] sm:$0xf]
      %v226 = vld [vmem:[%s139 + $0x138] sm:$0xf]
      %v227 = vld [vmem:[%s139 + $0x13c] sm:$0xf]
      %v228 = vld [vmem:[%s139 + $0x140] sm:$0xf]
      %v229 = vld [vmem:[%s139 + $0x144] sm:$0xf]
      %v230 = vld [vmem:[%s139 + $0x148] sm:$0xf]
      %v231 = vld [vmem:[%s139 + $0x14c] sm:$0xf]
      %v232 = vld [vmem:[%s139 + $0x150] sm:$0xf]
      %v233 = vld [vmem:[%s139 + $0x154] sm:$0xf]
      %v234 = vld [vmem:[%s139 + $0x158] sm:$0xf]
      %v235 = vld [vmem:[%s139 + $0x15c] sm:$0xf]
      %v236 = vld [vmem:[%s139 + $0x160] sm:$0xf]
      %v237 = vld [vmem:[%s139 + $0x164] sm:$0xf]
      %v238 = vld [vmem:[%s139 + $0x168] sm:$0xf]
      %v239 = vld [vmem:[%s139 + $0x16c] sm:$0xf]
      %v240 = vld [vmem:[%s139 + $0x170] sm:$0xf]
      %v241 = vld [vmem:[%s139 + $0x174] sm:$0xf]
      %v242 = vld [vmem:[%s139 + $0x178] sm:$0xf]
      %v243 = vld [vmem:[%s139 + $0x17c] sm:$0xf]
      %v244 = vld [vmem:[%s139 + $0x180] sm:$0xf]
      %v245 = vld [vmem:[%s139 + $0x184] sm:$0xf]
      %v246 = vld [vmem:[%s139 + $0x188] sm:$0xf]
      %v247 = vld [vmem:[%s139 + $0x18c] sm:$0xf]
      %v248 = vld [vmem:[%s139 + $0x190] sm:$0xf]
      %v249 = vld [vmem:[%s139 + $0x194] sm:$0xf]
      %v250 = vld [vmem:[%s139 + $0x198] sm:$0xf]
      %v251 = vld [vmem:[%s139 + $0x19c] sm:$0xf]
      %v252 = vld [vmem:[%s139 + $0x1a0] sm:$0xf]
      %v253 = vld [vmem:[%s139 + $0x1a4] sm:$0xf]
      %v254 = vld [vmem:[%s139 + $0x1a8] sm:$0xf]
      %v255 = vld [vmem:[%s139 + $0x1ac] sm:$0xf]
      %v256 = vld [vmem:[%s139 + $0x1b0] sm:$0xf]
      %v257 = vld [vmem:[%s139 + $0x1b4] sm:$0xf]
      %v258 = vld [vmem:[%s139 + $0x1b8] sm:$0xf]
      %v259 = vld [vmem:[%s139 + $0x1bc] sm:$0xf]
      %v260 = vld [vmem:[%s139 + $0x1c0] sm:$0xf]
      %v261 = vld [vmem:[%s139 + $0x1c4] sm:$0xf]
      %v262 = vld [vmem:[%s139 + $0x1c8] sm:$0xf]
      %v263 = vld [vmem:[%s139 + $0x1cc] sm:$0xf]
      %v264 = vld [vmem:[%s139 + $0x1d0] sm:$0xf]
      %v265 = vld [vmem:[%s139 + $0x1d4] sm:$0xf]
      %v266 = vld [vmem:[%s139 + $0x1d8] sm:$0xf]
      %v267 = vld [vmem:[%s139 + $0x1dc] sm:$0xf]
      %v268 = vld [vmem:[%s139 + $0x1e0] sm:$0xf]
      %v269 = vld [vmem:[%s139 + $0x1e4] sm:$0xf]
      %v270 = vld [vmem:[%s139 + $0x1e8] sm:$0xf]
      %v271 = vld [vmem:[%s139 + $0x1ec] sm:$0xf]
      %v272 = vld [vmem:[%s139 + $0x1f0] sm:$0xf]
      %v273 = vld [vmem:[%s139 + $0x1f4] sm:$0xf]
      %v274 = vld [vmem:[%s139 + $0x1f8] sm:$0xf]
      %v275 = vld [vmem:[%s139 + $0x1fc] sm:$0xf]
      %v276 = vld [vmem:[%s1] sm:$0xf]
      %v277 = vld [vmem:[%s1 + $0x4] sm:$0xf]
      %v278 = vld [vmem:[%s1 + $0x8] sm:$0xf]
      %v279 = vld [vmem:[%s1 + $0xc] sm:$0xf]
      %v280 = vld [vmem:[%s1 + $0x10] sm:$0xf]
      %v281 = vld [vmem:[%s1 + $0x14] sm:$0xf]
      %v410 = vunpack.c.l.b16 %v148
      %v411 = vunpack.c.l.b16 %v149
      %v412 = vunpack.c.l.b16 %v150
      %v413 = vunpack.c.l.b16 %v151
      %v414 = vunpack.c.l.b16 %v152
      %v415 = vunpack.c.l.b16 %v153
      %v416 = vunpack.c.l.b16 %v154
      %v417 = vunpack.c.l.b16 %v155
      %v418 = vunpack.c.l.b16 %v156
      %v419 = vunpack.c.l.b16 %v157
      %v420 = vunpack.c.l.b16 %v158
      %v421 = vunpack.c.l.b16 %v159
      %v422 = vunpack.c.l.b16 %v160
      %v423 = vunpack.c.l.b16 %v161
      %v424 = vunpack.c.l.b16 %v162
      %v425 = vunpack.c.l.b16 %v163
      %v426 = vunpack.c.l.b16 %v164
      %v427 = vunpack.c.l.b16 %v165
      %v428 = vunpack.c.l.b16 %v166
      %v429 = vunpack.c.l.b16 %v167
      %v430 = vunpack.c.l.b16 %v168
      %v431 = vunpack.c.l.b16 %v169
      %v432 = vunpack.c.l.b16 %v170
      %v433 = vunpack.c.l.b16 %v171
      %v434 = vunpack.c.l.b16 %v172
      %v435 = vunpack.c.l.b16 %v173
      %v436 = vunpack.c.l.b16 %v174
      %v437 = vunpack.c.l.b16 %v175
      %v438 = vunpack.c.l.b16 %v176
      %v439 = vunpack.c.l.b16 %v177
      %v440 = vunpack.c.l.b16 %v178
      %v441 = vunpack.c.l.b16 %v179
      %v442 = vunpack.c.l.b16 %v180
      %v443 = vunpack.c.l.b16 %v181
      %v444 = vunpack.c.l.b16 %v182
      %v445 = vunpack.c.l.b16 %v183
      %v446 = vunpack.c.l.b16 %v184
      %v447 = vunpack.c.l.b16 %v185
      %v448 = vunpack.c.l.b16 %v186
      %v449 = vunpack.c.l.b16 %v187
      %v450 = vunpack.c.l.b16 %v188
      %v451 = vunpack.c.l.b16 %v189
      %v452 = vunpack.c.l.b16 %v190
      %v453 = vunpack.c.l.b16 %v191
      %v454 = vunpack.c.l.b16 %v192
      %v455 = vunpack.c.l.b16 %v193
      %v456 = vunpack.c.l.b16 %v194
      %v457 = vunpack.c.l.b16 %v195
      %v458 = vunpack.c.l.b16 %v196
      %v459 = vunpack.c.l.b16 %v197
      %v460 = vunpack.c.l.b16 %v198
      %v461 = vunpack.c.l.b16 %v199
      %v462 = vunpack.c.l.b16 %v200
      %v463 = vunpack.c.l.b16 %v201
      %v464 = vunpack.c.l.b16 %v202
      %v465 = vunpack.c.l.b16 %v203
      %v466 = vunpack.c.l.b16 %v204
      %v467 = vunpack.c.l.b16 %v205
      %v468 = vunpack.c.l.b16 %v206
      %v469 = vunpack.c.l.b16 %v207
      %v470 = vunpack.c.l.b16 %v208
      %v471 = vunpack.c.l.b16 %v209
      %v472 = vunpack.c.l.b16 %v210
      %v473 = vunpack.c.l.b16 %v211
      %v474 = vunpack.c.l.b16 %v212
      %v475 = vunpack.c.l.b16 %v213
      %v476 = vunpack.c.l.b16 %v214
      %v477 = vunpack.c.l.b16 %v215
      %v478 = vunpack.c.l.b16 %v216
      %v479 = vunpack.c.l.b16 %v217
      %v480 = vunpack.c.l.b16 %v218
      %v481 = vunpack.c.l.b16 %v219
      %v482 = vunpack.c.l.b16 %v220
      %v483 = vunpack.c.l.b16 %v221
      %v484 = vunpack.c.l.b16 %v222
      %v485 = vunpack.c.l.b16 %v223
      %v486 = vunpack.c.l.b16 %v224
      %v487 = vunpack.c.l.b16 %v225
      %v488 = vunpack.c.l.b16 %v226
      %v489 = vunpack.c.l.b16 %v227
      %v490 = vunpack.c.l.b16 %v228
      %v491 = vunpack.c.l.b16 %v229
      %v492 = vunpack.c.l.b16 %v230
      %v493 = vunpack.c.l.b16 %v231
      %v494 = vunpack.c.l.b16 %v232
      %v495 = vunpack.c.l.b16 %v233
      %v496 = vunpack.c.l.b16 %v234
      %v497 = vunpack.c.l.b16 %v235
      %v498 = vunpack.c.l.b16 %v236
      %v499 = vunpack.c.l.b16 %v237
      %v500 = vunpack.c.l.b16 %v238
      %v501 = vunpack.c.l.b16 %v239
      %v502 = vunpack.c.l.b16 %v240
      %v503 = vunpack.c.l.b16 %v241
      %v504 = vunpack.c.l.b16 %v242
      %v505 = vunpack.c.l.b16 %v243
      %v506 = vunpack.c.l.b16 %v244
      %v507 = vunpack.c.l.b16 %v245
      %v508 = vunpack.c.l.b16 %v246
      %v509 = vunpack.c.l.b16 %v247
      %v510 = vunpack.c.l.b16 %v248
      %v511 = vunpack.c.l.b16 %v249
      %v512 = vunpack.c.l.b16 %v250
      %v513 = vunpack.c.l.b16 %v251
      %v514 = vunpack.c.l.b16 %v252
      %v515 = vunpack.c.l.b16 %v253
      %v516 = vunpack.c.l.b16 %v254
      %v517 = vunpack.c.l.b16 %v255
      %v518 = vunpack.c.l.b16 %v256
      %v519 = vunpack.c.l.b16 %v257
      %v520 = vunpack.c.l.b16 %v258
      %v521 = vunpack.c.l.b16 %v259
      %v522 = vunpack.c.l.b16 %v260
      %v523 = vunpack.c.l.b16 %v261
      %v524 = vunpack.c.l.b16 %v262
      %v525 = vunpack.c.l.b16 %v263
      %v526 = vunpack.c.l.b16 %v264
      %v527 = vunpack.c.l.b16 %v265
      %v528 = vunpack.c.l.b16 %v266
      %v529 = vunpack.c.l.b16 %v267
      %v530 = vunpack.c.l.b16 %v268
      %v531 = vunpack.c.l.b16 %v269
      %v532 = vunpack.c.l.b16 %v270
      %v533 = vunpack.c.l.b16 %v271
      %v534 = vunpack.c.l.b16 %v272
      %v535 = vunpack.c.l.b16 %v273
      %v536 = vunpack.c.l.b16 %v274
      %v537 = vunpack.c.l.b16 %v275
      %v538 = vpack.c.b16 %v411, %v410
      %v539 = vpack.c.b16 %v413, %v412
      %v540 = vpack.c.b16 %v415, %v414
      %v541 = vpack.c.b16 %v417, %v416
      %v542 = vpack.c.b16 %v419, %v418
      %v543 = vpack.c.b16 %v421, %v420
      %v544 = vpack.c.b16 %v423, %v422
      %v545 = vpack.c.b16 %v425, %v424
      %v546 = vpack.c.b16 %v427, %v426
      %v547 = vpack.c.b16 %v429, %v428
      %v548 = vpack.c.b16 %v431, %v430
      %v549 = vpack.c.b16 %v433, %v432
      %v550 = vpack.c.b16 %v435, %v434
      %v551 = vpack.c.b16 %v437, %v436
      %v552 = vpack.c.b16 %v439, %v438
      %v553 = vpack.c.b16 %v441, %v440
      %v554 = vpack.c.b16 %v443, %v442
      %v555 = vpack.c.b16 %v445, %v444
      %v556 = vpack.c.b16 %v447, %v446
      %v557 = vpack.c.b16 %v449, %v448
      %v558 = vpack.c.b16 %v451, %v450
      %v559 = vpack.c.b16 %v453, %v452
      %v560 = vpack.c.b16 %v455, %v454
      %v561 = vpack.c.b16 %v457, %v456
      %v562 = vpack.c.b16 %v459, %v458
      %v563 = vpack.c.b16 %v461, %v460
      %v564 = vpack.c.b16 %v463, %v462
      %v565 = vpack.c.b16 %v465, %v464
      %v566 = vpack.c.b16 %v467, %v466
      %v567 = vpack.c.b16 %v469, %v468
      %v568 = vpack.c.b16 %v471, %v470
      %v569 = vpack.c.b16 %v473, %v472
      %v570 = vpack.c.b16 %v475, %v474
      %v571 = vpack.c.b16 %v477, %v476
      %v572 = vpack.c.b16 %v479, %v478
      %v573 = vpack.c.b16 %v481, %v480
      %v574 = vpack.c.b16 %v483, %v482
      %v575 = vpack.c.b16 %v485, %v484
      %v576 = vpack.c.b16 %v487, %v486
      %v577 = vpack.c.b16 %v489, %v488
      %v578 = vpack.c.b16 %v491, %v490
      %v579 = vpack.c.b16 %v493, %v492
      %v580 = vpack.c.b16 %v495, %v494
      %v581 = vpack.c.b16 %v497, %v496
      %v582 = vpack.c.b16 %v499, %v498
      %v583 = vpack.c.b16 %v501, %v500
      %v584 = vpack.c.b16 %v503, %v502
      %v585 = vpack.c.b16 %v505, %v504
      %v586 = vpack.c.b16 %v507, %v506
      %v587 = vpack.c.b16 %v509, %v508
      %v588 = vpack.c.b16 %v511, %v510
      %v589 = vpack.c.b16 %v513, %v512
      %v590 = vpack.c.b16 %v515, %v514
      %v591 = vpack.c.b16 %v517, %v516
      %v592 = vpack.c.b16 %v519, %v518
      %v593 = vpack.c.b16 %v521, %v520
      %v594 = vpack.c.b16 %v523, %v522
      %v595 = vpack.c.b16 %v525, %v524
      %v596 = vpack.c.b16 %v527, %v526
      %v597 = vpack.c.b16 %v529, %v528
      %v598 = vpack.c.b16 %v531, %v530
      %v599 = vpack.c.b16 %v533, %v532
      %v600 = vpack.c.b16 %v535, %v534
      %v601 = vpack.c.b16 %v537, %v536
      %v608 = vunpack.c.l.b16 %v276
      %v609 = vunpack.c.l.b16 %v277
      %v610 = vunpack.c.l.b16 %v278
      %v611 = vunpack.c.l.b16 %v279
      %v612 = vunpack.c.l.b16 %v280
      %v613 = vunpack.c.l.b16 %v281
      %v614 = vpack.c.b16 %v609, %v608
      %v615 = vpack.c.b16 %v611, %v610
      %v616 = vpack.c.b16 %v613, %v612
      %vm620 = vcmask 392192
      %v622 = vsel %vm620, %v538, 0
      %v625 = vsel %vm620, %v539, 0
      %v628 = vsel %vm620, %v540, 0
      %v631 = vsel %vm620, %v541, 0
      %v634 = vsel %vm620, %v542, 0
      %v637 = vsel %vm620, %v543, 0
      %v640 = vsel %vm620, %v544, 0
      %v643 = vsel %vm620, %v545, 0
      %v646 = vsel %vm620, %v546, 0
      %v649 = vsel %vm620, %v547, 0
      %v652 = vsel %vm620, %v548, 0
      %v655 = vsel %vm620, %v549, 0
      %v658 = vsel %vm620, %v550, 0
      %v661 = vsel %vm620, %v551, 0
      %v664 = vsel %vm620, %v552, 0
      %v667 = vsel %vm620, %v553, 0
      %v670 = vsel %vm620, %v554, 0
      %v673 = vsel %vm620, %v555, 0
      %v676 = vsel %vm620, %v556, 0
      %v679 = vsel %vm620, %v557, 0
      %v682 = vsel %vm620, %v558, 0
      %v685 = vsel %vm620, %v559, 0
      %v688 = vsel %vm620, %v560, 0
      %v691 = vsel %vm620, %v561, 0
      %v694 = vsel %vm620, %v562, 0
      %v697 = vsel %vm620, %v563, 0
      %v700 = vsel %vm620, %v564, 0
      %v703 = vsel %vm620, %v565, 0
      %v706 = vsel %vm620, %v566, 0
      %v709 = vsel %vm620, %v567, 0
      %v712 = vsel %vm620, %v568, 0
      %v715 = vsel %vm620, %v569, 0
      %v718 = vsel %vm620, %v570, 0
      %v721 = vsel %vm620, %v571, 0
      %v724 = vsel %vm620, %v572, 0
      %v727 = vsel %vm620, %v573, 0
      %v730 = vsel %vm620, %v574, 0
      %v733 = vsel %vm620, %v575, 0
      %v736 = vsel %vm620, %v576, 0
      %v739 = vsel %vm620, %v577, 0
      %v742 = vsel %vm620, %v578, 0
      %v745 = vsel %vm620, %v579, 0
      %v748 = vsel %vm620, %v580, 0
      %v751 = vsel %vm620, %v581, 0
      %v754 = vsel %vm620, %v582, 0
      %v757 = vsel %vm620, %v583, 0
      %v760 = vsel %vm620, %v584, 0
      %v763 = vsel %vm620, %v585, 0
      %v766 = vsel %vm620, %v586, 0
      %v769 = vsel %vm620, %v587, 0
      %v772 = vsel %vm620, %v588, 0
      %v775 = vsel %vm620, %v589, 0
      %v778 = vsel %vm620, %v590, 0
      %v781 = vsel %vm620, %v591, 0
      %v784 = vsel %vm620, %v592, 0
      %v787 = vsel %vm620, %v593, 0
      %v790 = vsel %vm620, %v594, 0
      %v793 = vsel %vm620, %v595, 0
      %v796 = vsel %vm620, %v596, 0
      %v799 = vsel %vm620, %v597, 0
      %v802 = vsel %vm620, %v598, 0
      %v805 = vsel %vm620, %v599, 0
      %v808 = vsel %vm620, %v600, 0
      %v811 = vsel %vm620, %v601, 0
      %813 = vmatprep.subr.bf16.mxu0 0
      %814 = vmatpush1.bf16.msra.mxu0 0
      %815 = vmatprep.subr.bf16.mxu0 0
      %816 = vmatpush1.bf16.msra.mxu0 0
      %817 = vmatprep.subr.bf16.mxu0 0
      %818 = vmatpush1.bf16.msra.mxu0 0
      %819 = vmatprep.subr.bf16.mxu0 0
      %820 = vmatpush1.bf16.msra.mxu0 0
      %821 = vmatprep.subr.bf16.mxu0 0
      %822 = vmatpush1.bf16.msra.mxu0 0
      %823 = vmatprep.subr.bf16.mxu0 0
      %824 = vmatpush1.bf16.msra.mxu0 %v616
      %825 = vmatprep.subr.bf16.mxu0 0
      %826 = vmatpush1.bf16.msra.mxu0 %v615
      %827 = vmatprep.subr.bf16.mxu0 0
      %828 = vmatpush1.bf16.msra.mxu0 %v614
      %829 = vmatprep.subr.bf16.mxu0 0
      %830 = vmatpush2.bf16.msra.mxu0 0
      %831 = vmatprep.subr.bf16.mxu0 0
      %832 = vmatpush2.bf16.msra.mxu0 0
      %833 = vmatprep.subr.bf16.mxu0 0
      %834 = vmatpush2.bf16.msra.mxu0 0
      %835 = vmatprep.subr.bf16.mxu0 0
      %836 = vmatpush2.bf16.msra.mxu0 0
      %837 = vmatprep.subr.bf16.mxu0 0
      %838 = vmatpush2.bf16.msra.mxu0 0
      %839 = vmatprep.subr.bf16.mxu0 0
      %840 = vmatpush2.bf16.msra.mxu0 0
      %841 = vmatprep.subr.bf16.mxu0 0
      %842 = vmatpush2.bf16.msra.mxu0 0
      %843 = vmatprep.subr.bf16.mxu0 0
      %844 = vmatpush2.bf16.msra.mxu0 0
      %845 = vmatprep.mubr.bf16.mxu0 0
      %846 = vmatmul.mubr.bf16.gmra.mxu0 %v622
      %v847 = vpop.f32.mrf.mxu0
      %v848 = vadd.f32 0.0, %v847
      %v849 = vpop.f32.mrf.mxu0
      %v850 = vpop.f32.mrf.mxu0
      %v851 = vadd.f32 0.0, %v850
      %v852 = vpop.f32.mrf.mxu0
      %853 = vmatprep.mubr.bf16.mxu0 0
      %854 = vmatmul.mubr.bf16.gmra.mxu0 %v625
      %v855 = vpop.f32.mrf.mxu0
      %v856 = vadd.f32 0.0, %v855
      %v857 = vpop.f32.mrf.mxu0
      %v858 = vpop.f32.mrf.mxu0
      %v859 = vadd.f32 0.0, %v858
      %v860 = vpop.f32.mrf.mxu0
      %861 = vmatprep.mubr.bf16.mxu0 0
      %862 = vmatmul.mubr.bf16.gmra.mxu0 %v628
      %v863 = vpop.f32.mrf.mxu0
      %v864 = vadd.f32 0.0, %v863
      %v865 = vpop.f32.mrf.mxu0
      %v866 = vpop.f32.mrf.mxu0
      %v867 = vadd.f32 0.0, %v866
      %v868 = vpop.f32.mrf.mxu0
      %869 = vmatprep.mubr.bf16.mxu0 0
      %870 = vmatmul.mubr.bf16.gmra.mxu0 %v631
      %v871 = vpop.f32.mrf.mxu0
      %v872 = vadd.f32 0.0, %v871
      %v873 = vpop.f32.mrf.mxu0
      %v874 = vpop.f32.mrf.mxu0
      %v875 = vadd.f32 0.0, %v874
      %v876 = vpop.f32.mrf.mxu0
      %877 = vmatprep.mubr.bf16.mxu0 0
      %878 = vmatmul.mubr.bf16.gmra.mxu0 %v634
      %v879 = vpop.f32.mrf.mxu0
      %v880 = vadd.f32 0.0, %v879
      %v881 = vpop.f32.mrf.mxu0
      %v882 = vpop.f32.mrf.mxu0
      %v883 = vadd.f32 0.0, %v882
      %v884 = vpop.f32.mrf.mxu0
      %885 = vmatprep.mubr.bf16.mxu0 0
      %886 = vmatmul.mubr.bf16.gmra.mxu0 %v637
      %v887 = vpop.f32.mrf.mxu0
      %v888 = vadd.f32 0.0, %v887
      %v889 = vpop.f32.mrf.mxu0
      %v890 = vpop.f32.mrf.mxu0
      %v891 = vadd.f32 0.0, %v890
      %v892 = vpop.f32.mrf.mxu0
      %893 = vmatprep.mubr.bf16.mxu0 0
      %894 = vmatmul.mubr.bf16.gmra.mxu0 %v640
      %v895 = vpop.f32.mrf.mxu0
      %v896 = vadd.f32 0.0, %v895
      %v897 = vpop.f32.mrf.mxu0
      %v898 = vpop.f32.mrf.mxu0
      %v899 = vadd.f32 0.0, %v898
      %v900 = vpop.f32.mrf.mxu0
      %901 = vmatprep.mubr.bf16.mxu0 0
      %902 = vmatmul.mubr.bf16.gmra.mxu0 %v643
      %v903 = vpop.f32.mrf.mxu0
      %v904 = vadd.f32 0.0, %v903
      %v905 = vpop.f32.mrf.mxu0
      %v906 = vpop.f32.mrf.mxu0
      %v907 = vadd.f32 0.0, %v906
      %v908 = vpop.f32.mrf.mxu0
      %909 = vmatprep.mubr.bf16.mxu0 0
      %910 = vmatmul.mubr.bf16.gmra.mxu0 %v646
      %v911 = vpop.f32.mrf.mxu0
      %v912 = vadd.f32 0.0, %v911
      %v913 = vpop.f32.mrf.mxu0
      %v914 = vpop.f32.mrf.mxu0
      %v915 = vadd.f32 0.0, %v914
      %v916 = vpop.f32.mrf.mxu0
      %917 = vmatprep.mubr.bf16.mxu0 0
      %918 = vmatmul.mubr.bf16.gmra.mxu0 %v649
      %v919 = vpop.f32.mrf.mxu0
      %v920 = vadd.f32 0.0, %v919
      %v921 = vpop.f32.mrf.mxu0
      %v922 = vpop.f32.mrf.mxu0
      %v923 = vadd.f32 0.0, %v922
      %v924 = vpop.f32.mrf.mxu0
      %925 = vmatprep.mubr.bf16.mxu0 0
      %926 = vmatmul.mubr.bf16.gmra.mxu0 %v652
      %v927 = vpop.f32.mrf.mxu0
      %v928 = vadd.f32 0.0, %v927
      %v929 = vpop.f32.mrf.mxu0
      %v930 = vpop.f32.mrf.mxu0
      %v931 = vadd.f32 0.0, %v930
      %v932 = vpop.f32.mrf.mxu0
      %933 = vmatprep.mubr.bf16.mxu0 0
      %934 = vmatmul.mubr.bf16.gmra.mxu0 %v655
      %v935 = vpop.f32.mrf.mxu0
      %v936 = vadd.f32 0.0, %v935
      %v937 = vpop.f32.mrf.mxu0
      %v938 = vpop.f32.mrf.mxu0
      %v939 = vadd.f32 0.0, %v938
      %v940 = vpop.f32.mrf.mxu0
      %941 = vmatprep.mubr.bf16.mxu0 0
      %942 = vmatmul.mubr.bf16.gmra.mxu0 %v658
      %v943 = vpop.f32.mrf.mxu0
      %v944 = vadd.f32 0.0, %v943
      %v945 = vpop.f32.mrf.mxu0
      %v946 = vpop.f32.mrf.mxu0
      %v947 = vadd.f32 0.0, %v946
      %v948 = vpop.f32.mrf.mxu0
      %949 = vmatprep.mubr.bf16.mxu0 0
      %950 = vmatmul.mubr.bf16.gmra.mxu0 %v661
      %v951 = vpop.f32.mrf.mxu0
      %v952 = vadd.f32 0.0, %v951
      %v953 = vpop.f32.mrf.mxu0
      %v954 = vpop.f32.mrf.mxu0
      %v955 = vadd.f32 0.0, %v954
      %v956 = vpop.f32.mrf.mxu0
      %957 = vmatprep.mubr.bf16.mxu0 0
      %958 = vmatmul.mubr.bf16.gmra.mxu0 %v664
      %v959 = vpop.f32.mrf.mxu0
      %v960 = vadd.f32 0.0, %v959
      %v961 = vpop.f32.mrf.mxu0
      %v962 = vpop.f32.mrf.mxu0
      %v963 = vadd.f32 0.0, %v962
      %v964 = vpop.f32.mrf.mxu0
      %965 = vmatprep.mubr.bf16.mxu0 0
      %966 = vmatmul.mubr.bf16.gmra.mxu0 %v667
      %v967 = vpop.f32.mrf.mxu0
      %v968 = vadd.f32 0.0, %v967
      %v969 = vpop.f32.mrf.mxu0
      %v970 = vpop.f32.mrf.mxu0
      %v971 = vadd.f32 0.0, %v970
      %v972 = vpop.f32.mrf.mxu0
      %973 = vmatprep.mubr.bf16.mxu0 0
      %974 = vmatmul.mubr.bf16.gmra.mxu0 %v670
      %v975 = vpop.f32.mrf.mxu0
      %v976 = vadd.f32 0.0, %v975
      %v977 = vpop.f32.mrf.mxu0
      %v978 = vpop.f32.mrf.mxu0
      %v979 = vadd.f32 0.0, %v978
      %v980 = vpop.f32.mrf.mxu0
      %981 = vmatprep.mubr.bf16.mxu0 0
      %982 = vmatmul.mubr.bf16.gmra.mxu0 %v673
      %v983 = vpop.f32.mrf.mxu0
      %v984 = vadd.f32 0.0, %v983
      %v985 = vpop.f32.mrf.mxu0
      %v986 = vpop.f32.mrf.mxu0
      %v987 = vadd.f32 0.0, %v986
      %v988 = vpop.f32.mrf.mxu0
      %989 = vmatprep.mubr.bf16.mxu0 0
      %990 = vmatmul.mubr.bf16.gmra.mxu0 %v676
      %v991 = vpop.f32.mrf.mxu0
      %v992 = vadd.f32 0.0, %v991
      %v993 = vpop.f32.mrf.mxu0
      %v994 = vpop.f32.mrf.mxu0
      %v995 = vadd.f32 0.0, %v994
      %v996 = vpop.f32.mrf.mxu0
      %997 = vmatprep.mubr.bf16.mxu0 0
      %998 = vmatmul.mubr.bf16.gmra.mxu0 %v679
      %v999 = vpop.f32.mrf.mxu0
      %v1000 = vadd.f32 0.0, %v999
      %v1001 = vpop.f32.mrf.mxu0
      %v1002 = vpop.f32.mrf.mxu0
      %v1003 = vadd.f32 0.0, %v1002
      %v1004 = vpop.f32.mrf.mxu0
      %1005 = vmatprep.mubr.bf16.mxu0 0
      %1006 = vmatmul.mubr.bf16.gmra.mxu0 %v682
      %v1007 = vpop.f32.mrf.mxu0
      %v1008 = vadd.f32 0.0, %v1007
      %v1009 = vpop.f32.mrf.mxu0
      %v1010 = vpop.f32.mrf.mxu0
      %v1011 = vadd.f32 0.0, %v1010
      %v1012 = vpop.f32.mrf.mxu0
      %1013 = vmatprep.mubr.bf16.mxu0 0
      %1014 = vmatmul.mubr.bf16.gmra.mxu0 %v685
      %v1015 = vpop.f32.mrf.mxu0
      %v1016 = vadd.f32 0.0, %v1015
      %v1017 = vpop.f32.mrf.mxu0
      %v1018 = vpop.f32.mrf.mxu0
      %v1019 = vadd.f32 0.0, %v1018
      %v1020 = vpop.f32.mrf.mxu0
      %1021 = vmatprep.mubr.bf16.mxu0 0
      %1022 = vmatmul.mubr.bf16.gmra.mxu0 %v688
      %v1023 = vpop.f32.mrf.mxu0
      %v1024 = vadd.f32 0.0, %v1023
      %v1025 = vpop.f32.mrf.mxu0
      %v1026 = vpop.f32.mrf.mxu0
      %v1027 = vadd.f32 0.0, %v1026
      %v1028 = vpop.f32.mrf.mxu0
      %1029 = vmatprep.mubr.bf16.mxu0 0
      %1030 = vmatmul.mubr.bf16.gmra.mxu0 %v691
      %v1031 = vpop.f32.mrf.mxu0
      %v1032 = vadd.f32 0.0, %v1031
      %v1033 = vpop.f32.mrf.mxu0
      %v1034 = vpop.f32.mrf.mxu0
      %v1035 = vadd.f32 0.0, %v1034
      %v1036 = vpop.f32.mrf.mxu0
      %1037 = vmatprep.mubr.bf16.mxu0 0
      %1038 = vmatmul.mubr.bf16.gmra.mxu0 %v694
      %v1039 = vpop.f32.mrf.mxu0
      %v1040 = vadd.f32 0.0, %v1039
      %v1041 = vpop.f32.mrf.mxu0
      %v1042 = vpop.f32.mrf.mxu0
      %v1043 = vadd.f32 0.0, %v1042
      %v1044 = vpop.f32.mrf.mxu0
      %1045 = vmatprep.mubr.bf16.mxu0 0
      %1046 = vmatmul.mubr.bf16.gmra.mxu0 %v697
      %v1047 = vpop.f32.mrf.mxu0
      %v1048 = vadd.f32 0.0, %v1047
      %v1049 = vpop.f32.mrf.mxu0
      %v1050 = vpop.f32.mrf.mxu0
      %v1051 = vadd.f32 0.0, %v1050
      %v1052 = vpop.f32.mrf.mxu0
      %1053 = vmatprep.mubr.bf16.mxu0 0
      %1054 = vmatmul.mubr.bf16.gmra.mxu0 %v700
      %v1055 = vpop.f32.mrf.mxu0
      %v1056 = vadd.f32 0.0, %v1055
      %v1057 = vpop.f32.mrf.mxu0
      %v1058 = vpop.f32.mrf.mxu0
      %v1059 = vadd.f32 0.0, %v1058
      %v1060 = vpop.f32.mrf.mxu0
      %1061 = vmatprep.mubr.bf16.mxu0 0
      %1062 = vmatmul.mubr.bf16.gmra.mxu0 %v703
      %v1063 = vpop.f32.mrf.mxu0
      %v1064 = vadd.f32 0.0, %v1063
      %v1065 = vpop.f32.mrf.mxu0
      %v1066 = vpop.f32.mrf.mxu0
      %v1067 = vadd.f32 0.0, %v1066
      %v1068 = vpop.f32.mrf.mxu0
      %1069 = vmatprep.mubr.bf16.mxu0 0
      %1070 = vmatmul.mubr.bf16.gmra.mxu0 %v706
      %v1071 = vpop.f32.mrf.mxu0
      %v1072 = vadd.f32 0.0, %v1071
      %v1073 = vpop.f32.mrf.mxu0
      %v1074 = vpop.f32.mrf.mxu0
      %v1075 = vadd.f32 0.0, %v1074
      %v1076 = vpop.f32.mrf.mxu0
      %1077 = vmatprep.mubr.bf16.mxu0 0
      %1078 = vmatmul.mubr.bf16.gmra.mxu0 %v709
      %v1079 = vpop.f32.mrf.mxu0
      %v1080 = vadd.f32 0.0, %v1079
      %v1081 = vpop.f32.mrf.mxu0
      %v1082 = vpop.f32.mrf.mxu0
      %v1083 = vadd.f32 0.0, %v1082
      %v1084 = vpop.f32.mrf.mxu0
      %1085 = vmatprep.mubr.bf16.mxu0 0
      %1086 = vmatmul.mubr.bf16.gmra.mxu0 %v712
      %v1087 = vpop.f32.mrf.mxu0
      %v1088 = vadd.f32 0.0, %v1087
      %v1089 = vpop.f32.mrf.mxu0
      %v1090 = vpop.f32.mrf.mxu0
      %v1091 = vadd.f32 0.0, %v1090
      %v1092 = vpop.f32.mrf.mxu0
      %1093 = vmatprep.mubr.bf16.mxu0 0
      %1094 = vmatmul.mubr.bf16.gmra.mxu0 %v715
      %v1095 = vpop.f32.mrf.mxu0
      %v1096 = vadd.f32 0.0, %v1095
      %v1097 = vpop.f32.mrf.mxu0
      %v1098 = vpop.f32.mrf.mxu0
      %v1099 = vadd.f32 0.0, %v1098
      %v1100 = vpop.f32.mrf.mxu0
      %1101 = vmatprep.mubr.bf16.mxu0 0
      %1102 = vmatmul.mubr.bf16.gmra.mxu0 %v718
      %v1103 = vpop.f32.mrf.mxu0
      %v1104 = vadd.f32 0.0, %v1103
      %v1105 = vpop.f32.mrf.mxu0
      %v1106 = vpop.f32.mrf.mxu0
      %v1107 = vadd.f32 0.0, %v1106
      %v1108 = vpop.f32.mrf.mxu0
      %1109 = vmatprep.mubr.bf16.mxu0 0
      %1110 = vmatmul.mubr.bf16.gmra.mxu0 %v721
      %v1111 = vpop.f32.mrf.mxu0
      %v1112 = vadd.f32 0.0, %v1111
      %v1113 = vpop.f32.mrf.mxu0
      %v1114 = vpop.f32.mrf.mxu0
      %v1115 = vadd.f32 0.0, %v1114
      %v1116 = vpop.f32.mrf.mxu0
      %1117 = vmatprep.mubr.bf16.mxu0 0
      %1118 = vmatmul.mubr.bf16.gmra.mxu0 %v724
      %v1119 = vpop.f32.mrf.mxu0
      %v1120 = vadd.f32 0.0, %v1119
      %v1121 = vpop.f32.mrf.mxu0
      %v1122 = vpop.f32.mrf.mxu0
      %v1123 = vadd.f32 0.0, %v1122
      %v1124 = vpop.f32.mrf.mxu0
      %1125 = vmatprep.mubr.bf16.mxu0 0
      %1126 = vmatmul.mubr.bf16.gmra.mxu0 %v727
      %v1127 = vpop.f32.mrf.mxu0
      %v1128 = vadd.f32 0.0, %v1127
      %v1129 = vpop.f32.mrf.mxu0
      %v1130 = vpop.f32.mrf.mxu0
      %v1131 = vadd.f32 0.0, %v1130
      %v1132 = vpop.f32.mrf.mxu0
      %1133 = vmatprep.mubr.bf16.mxu0 0
      %1134 = vmatmul.mubr.bf16.gmra.mxu0 %v730
      %v1135 = vpop.f32.mrf.mxu0
      %v1136 = vadd.f32 0.0, %v1135
      %v1137 = vpop.f32.mrf.mxu0
      %v1138 = vpop.f32.mrf.mxu0
      %v1139 = vadd.f32 0.0, %v1138
      %v1140 = vpop.f32.mrf.mxu0
      %1141 = vmatprep.mubr.bf16.mxu0 0
      %1142 = vmatmul.mubr.bf16.gmra.mxu0 %v733
      %v1143 = vpop.f32.mrf.mxu0
      %v1144 = vadd.f32 0.0, %v1143
      %v1145 = vpop.f32.mrf.mxu0
      %v1146 = vpop.f32.mrf.mxu0
      %v1147 = vadd.f32 0.0, %v1146
      %v1148 = vpop.f32.mrf.mxu0
      %1149 = vmatprep.mubr.bf16.mxu0 0
      %1150 = vmatmul.mubr.bf16.gmra.mxu0 %v736
      %v1151 = vpop.f32.mrf.mxu0
      %v1152 = vadd.f32 0.0, %v1151
      %v1153 = vpop.f32.mrf.mxu0
      %v1154 = vpop.f32.mrf.mxu0
      %v1155 = vadd.f32 0.0, %v1154
      %v1156 = vpop.f32.mrf.mxu0
      %1157 = vmatprep.mubr.bf16.mxu0 0
      %1158 = vmatmul.mubr.bf16.gmra.mxu0 %v739
      %v1159 = vpop.f32.mrf.mxu0
      %v1160 = vadd.f32 0.0, %v1159
      %v1161 = vpop.f32.mrf.mxu0
      %v1162 = vpop.f32.mrf.mxu0
      %v1163 = vadd.f32 0.0, %v1162
      %v1164 = vpop.f32.mrf.mxu0
      %1165 = vmatprep.mubr.bf16.mxu0 0
      %1166 = vmatmul.mubr.bf16.gmra.mxu0 %v742
      %v1167 = vpop.f32.mrf.mxu0
      %v1168 = vadd.f32 0.0, %v1167
      %v1169 = vpop.f32.mrf.mxu0
      %v1170 = vpop.f32.mrf.mxu0
      %v1171 = vadd.f32 0.0, %v1170
      %v1172 = vpop.f32.mrf.mxu0
      %1173 = vmatprep.mubr.bf16.mxu0 0
      %1174 = vmatmul.mubr.bf16.gmra.mxu0 %v745
      %v1175 = vpop.f32.mrf.mxu0
      %v1176 = vadd.f32 0.0, %v1175
      %v1177 = vpop.f32.mrf.mxu0
      %v1178 = vpop.f32.mrf.mxu0
      %v1179 = vadd.f32 0.0, %v1178
      %v1180 = vpop.f32.mrf.mxu0
      %1181 = vmatprep.mubr.bf16.mxu0 0
      %1182 = vmatmul.mubr.bf16.gmra.mxu0 %v748
      %v1183 = vpop.f32.mrf.mxu0
      %v1184 = vadd.f32 0.0, %v1183
      %v1185 = vpop.f32.mrf.mxu0
      %v1186 = vpop.f32.mrf.mxu0
      %v1187 = vadd.f32 0.0, %v1186
      %v1188 = vpop.f32.mrf.mxu0
      %1189 = vmatprep.mubr.bf16.mxu0 0
      %1190 = vmatmul.mubr.bf16.gmra.mxu0 %v751
      %v1191 = vpop.f32.mrf.mxu0
      %v1192 = vadd.f32 0.0, %v1191
      %v1193 = vpop.f32.mrf.mxu0
      %v1194 = vpop.f32.mrf.mxu0
      %v1195 = vadd.f32 0.0, %v1194
      %v1196 = vpop.f32.mrf.mxu0
      %1197 = vmatprep.mubr.bf16.mxu0 0
      %1198 = vmatmul.mubr.bf16.gmra.mxu0 %v754
      %v1199 = vpop.f32.mrf.mxu0
      %v1200 = vadd.f32 0.0, %v1199
      %v1201 = vpop.f32.mrf.mxu0
      %v1202 = vpop.f32.mrf.mxu0
      %v1203 = vadd.f32 0.0, %v1202
      %v1204 = vpop.f32.mrf.mxu0
      %1205 = vmatprep.mubr.bf16.mxu0 0
      %1206 = vmatmul.mubr.bf16.gmra.mxu0 %v757
      %v1207 = vpop.f32.mrf.mxu0
      %v1208 = vadd.f32 0.0, %v1207
      %v1209 = vpop.f32.mrf.mxu0
      %v1210 = vpop.f32.mrf.mxu0
      %v1211 = vadd.f32 0.0, %v1210
      %v1212 = vpop.f32.mrf.mxu0
      %1213 = vmatprep.mubr.bf16.mxu0 0
      %1214 = vmatmul.mubr.bf16.gmra.mxu0 %v760
      %v1215 = vpop.f32.mrf.mxu0
      %v1216 = vadd.f32 0.0, %v1215
      %v1217 = vpop.f32.mrf.mxu0
      %v1218 = vpop.f32.mrf.mxu0
      %v1219 = vadd.f32 0.0, %v1218
      %v1220 = vpop.f32.mrf.mxu0
      %1221 = vmatprep.mubr.bf16.mxu0 0
      %1222 = vmatmul.mubr.bf16.gmra.mxu0 %v763
      %v1223 = vpop.f32.mrf.mxu0
      %v1224 = vadd.f32 0.0, %v1223
      %v1225 = vpop.f32.mrf.mxu0
      %v1226 = vpop.f32.mrf.mxu0
      %v1227 = vadd.f32 0.0, %v1226
      %v1228 = vpop.f32.mrf.mxu0
      %1229 = vmatprep.mubr.bf16.mxu0 0
      %1230 = vmatmul.mubr.bf16.gmra.mxu0 %v766
      %v1231 = vpop.f32.mrf.mxu0
      %v1232 = vadd.f32 0.0, %v1231
      %v1233 = vpop.f32.mrf.mxu0
      %v1234 = vpop.f32.mrf.mxu0
      %v1235 = vadd.f32 0.0, %v1234
      %v1236 = vpop.f32.mrf.mxu0
      %1237 = vmatprep.mubr.bf16.mxu0 0
      %1238 = vmatmul.mubr.bf16.gmra.mxu0 %v769
      %v1239 = vpop.f32.mrf.mxu0
      %v1240 = vadd.f32 0.0, %v1239
      %v1241 = vpop.f32.mrf.mxu0
      %v1242 = vpop.f32.mrf.mxu0
      %v1243 = vadd.f32 0.0, %v1242
      %v1244 = vpop.f32.mrf.mxu0
      %1245 = vmatprep.mubr.bf16.mxu0 0
      %1246 = vmatmul.mubr.bf16.gmra.mxu0 %v772
      %v1247 = vpop.f32.mrf.mxu0
      %v1248 = vadd.f32 0.0, %v1247
      %v1249 = vpop.f32.mrf.mxu0
      %v1250 = vpop.f32.mrf.mxu0
      %v1251 = vadd.f32 0.0, %v1250
      %v1252 = vpop.f32.mrf.mxu0
      %1253 = vmatprep.mubr.bf16.mxu0 0
      %1254 = vmatmul.mubr.bf16.gmra.mxu0 %v775
      %v1255 = vpop.f32.mrf.mxu0
      %v1256 = vadd.f32 0.0, %v1255
      %v1257 = vpop.f32.mrf.mxu0
      %v1258 = vpop.f32.mrf.mxu0
      %v1259 = vadd.f32 0.0, %v1258
      %v1260 = vpop.f32.mrf.mxu0
      %1261 = vmatprep.mubr.bf16.mxu0 0
      %1262 = vmatmul.mubr.bf16.gmra.mxu0 %v778
      %v1263 = vpop.f32.mrf.mxu0
      %v1264 = vadd.f32 0.0, %v1263
      %v1265 = vpop.f32.mrf.mxu0
      %v1266 = vpop.f32.mrf.mxu0
      %v1267 = vadd.f32 0.0, %v1266
      %v1268 = vpop.f32.mrf.mxu0
      %1269 = vmatprep.mubr.bf16.mxu0 0
      %1270 = vmatmul.mubr.bf16.gmra.mxu0 %v781
      %v1271 = vpop.f32.mrf.mxu0
      %v1272 = vadd.f32 0.0, %v1271
      %v1273 = vpop.f32.mrf.mxu0
      %v1274 = vpop.f32.mrf.mxu0
      %v1275 = vadd.f32 0.0, %v1274
      %v1276 = vpop.f32.mrf.mxu0
      %1277 = vmatprep.mubr.bf16.mxu0 0
      %1278 = vmatmul.mubr.bf16.gmra.mxu0 %v784
      %v1279 = vpop.f32.mrf.mxu0
      %v1280 = vadd.f32 0.0, %v1279
      %v1281 = vpop.f32.mrf.mxu0
      %v1282 = vpop.f32.mrf.mxu0
      %v1283 = vadd.f32 0.0, %v1282
      %v1284 = vpop.f32.mrf.mxu0
      %1285 = vmatprep.mubr.bf16.mxu0 0
      %1286 = vmatmul.mubr.bf16.gmra.mxu0 %v787
      %v1287 = vpop.f32.mrf.mxu0
      %v1288 = vadd.f32 0.0, %v1287
      %v1289 = vpop.f32.mrf.mxu0
      %v1290 = vpop.f32.mrf.mxu0
      %v1291 = vadd.f32 0.0, %v1290
      %v1292 = vpop.f32.mrf.mxu0
      %1293 = vmatprep.mubr.bf16.mxu0 0
      %1294 = vmatmul.mubr.bf16.gmra.mxu0 %v790
      %v1295 = vpop.f32.mrf.mxu0
      %v1296 = vadd.f32 0.0, %v1295
      %v1297 = vpop.f32.mrf.mxu0
      %v1298 = vpop.f32.mrf.mxu0
      %v1299 = vadd.f32 0.0, %v1298
      %v1300 = vpop.f32.mrf.mxu0
      %1301 = vmatprep.mubr.bf16.mxu0 0
      %1302 = vmatmul.mubr.bf16.gmra.mxu0 %v793
      %v1303 = vpop.f32.mrf.mxu0
      %v1304 = vadd.f32 0.0, %v1303
      %v1305 = vpop.f32.mrf.mxu0
      %v1306 = vpop.f32.mrf.mxu0
      %v1307 = vadd.f32 0.0, %v1306
      %v1308 = vpop.f32.mrf.mxu0
      %1309 = vmatprep.mubr.bf16.mxu0 0
      %1310 = vmatmul.mubr.bf16.gmra.mxu0 %v796
      %v1311 = vpop.f32.mrf.mxu0
      %v1312 = vadd.f32 0.0, %v1311
      %v1313 = vpop.f32.mrf.mxu0
      %v1314 = vpop.f32.mrf.mxu0
      %v1315 = vadd.f32 0.0, %v1314
      %v1316 = vpop.f32.mrf.mxu0
      %1317 = vmatprep.mubr.bf16.mxu0 0
      %1318 = vmatmul.mubr.bf16.gmra.mxu0 %v799
      %v1319 = vpop.f32.mrf.mxu0
      %v1320 = vadd.f32 0.0, %v1319
      %v1321 = vpop.f32.mrf.mxu0
      %v1322 = vpop.f32.mrf.mxu0
      %v1323 = vadd.f32 0.0, %v1322
      %v1324 = vpop.f32.mrf.mxu0
      %1325 = vmatprep.mubr.bf16.mxu0 0
      %1326 = vmatmul.mubr.bf16.gmra.mxu0 %v802
      %v1327 = vpop.f32.mrf.mxu0
      %v1328 = vadd.f32 0.0, %v1327
      %v1329 = vpop.f32.mrf.mxu0
      %v1330 = vpop.f32.mrf.mxu0
      %v1331 = vadd.f32 0.0, %v1330
      %v1332 = vpop.f32.mrf.mxu0
      %1333 = vmatprep.mubr.bf16.mxu0 0
      %1334 = vmatmul.mubr.bf16.gmra.mxu0 %v805
      %v1335 = vpop.f32.mrf.mxu0
      %v1336 = vadd.f32 0.0, %v1335
      %v1337 = vpop.f32.mrf.mxu0
      %v1338 = vpop.f32.mrf.mxu0
      %v1339 = vadd.f32 0.0, %v1338
      %v1340 = vpop.f32.mrf.mxu0
      %1341 = vmatprep.mubr.bf16.mxu0 0
      %1342 = vmatmul.mubr.bf16.gmra.mxu0 %v808
      %v1343 = vpop.f32.mrf.mxu0
      %v1344 = vadd.f32 0.0, %v1343
      %v1345 = vpop.f32.mrf.mxu0
      %v1346 = vpop.f32.mrf.mxu0
      %v1347 = vadd.f32 0.0, %v1346
      %v1348 = vpop.f32.mrf.mxu0
      %1349 = vmatprep.mubr.bf16.mxu0 0
      %1350 = vmatmul.mubr.bf16.gmra.mxu0 %v811
      %v1351 = vpop.f32.mrf.mxu0
      %v1352 = vadd.f32 0.0, %v1351
      %v1353 = vpop.f32.mrf.mxu0
      %v1354 = vpop.f32.mrf.mxu0
      %v1355 = vadd.f32 0.0, %v1354
      %v1356 = vpop.f32.mrf.mxu0
      %1357 = vdwg.mxu0
      %vm1358 = vcmp.gt.f32.partialorder %v848, 0.0
      %vm1359 = vcmp.gt.f32.partialorder %v851, 0.0
      %vm1360 = vcmp.gt.f32.partialorder %v856, 0.0
      %vm1361 = vcmp.gt.f32.partialorder %v859, 0.0
      %vm1362 = vcmp.gt.f32.partialorder %v864, 0.0
      %vm1363 = vcmp.gt.f32.partialorder %v867, 0.0
      %vm1364 = vcmp.gt.f32.partialorder %v872, 0.0
      %vm1365 = vcmp.gt.f32.partialorder %v875, 0.0
      %vm1366 = vcmp.gt.f32.partialorder %v880, 0.0
      %vm1367 = vcmp.gt.f32.partialorder %v883, 0.0
      %vm1368 = vcmp.gt.f32.partialorder %v888, 0.0
      %vm1369 = vcmp.gt.f32.partialorder %v891, 0.0
      %vm1370 = vcmp.gt.f32.partialorder %v896, 0.0
      %vm1371 = vcmp.gt.f32.partialorder %v899, 0.0
      %vm1372 = vcmp.gt.f32.partialorder %v904, 0.0
      %vm1373 = vcmp.gt.f32.partialorder %v907, 0.0
      %vm1374 = vcmp.gt.f32.partialorder %v912, 0.0
      %vm1375 = vcmp.gt.f32.partialorder %v915, 0.0
      %vm1376 = vcmp.gt.f32.partialorder %v920, 0.0
      %vm1377 = vcmp.gt.f32.partialorder %v923, 0.0
      %vm1378 = vcmp.gt.f32.partialorder %v928, 0.0
      %vm1379 = vcmp.gt.f32.partialorder %v931, 0.0
      %vm1380 = vcmp.gt.f32.partialorder %v936, 0.0
      %vm1381 = vcmp.gt.f32.partialorder %v939, 0.0
      %vm1382 = vcmp.gt.f32.partialorder %v944, 0.0
      %vm1383 = vcmp.gt.f32.partialorder %v947, 0.0
      %vm1384 = vcmp.gt.f32.partialorder %v952, 0.0
      %vm1385 = vcmp.gt.f32.partialorder %v955, 0.0
      %vm1386 = vcmp.gt.f32.partialorder %v960, 0.0
      %vm1387 = vcmp.gt.f32.partialorder %v963, 0.0
      %vm1388 = vcmp.gt.f32.partialorder %v968, 0.0
      %vm1389 = vcmp.gt.f32.partialorder %v971, 0.0
      %vm1390 = vcmp.gt.f32.partialorder %v976, 0.0
      %vm1391 = vcmp.gt.f32.partialorder %v979, 0.0
      %vm1392 = vcmp.gt.f32.partialorder %v984, 0.0
      %vm1393 = vcmp.gt.f32.partialorder %v987, 0.0
      %vm1394 = vcmp.gt.f32.partialorder %v992, 0.0
      %vm1395 = vcmp.gt.f32.partialorder %v995, 0.0
      %vm1396 = vcmp.gt.f32.partialorder %v1000, 0.0
      %vm1397 = vcmp.gt.f32.partialorder %v1003, 0.0
      %vm1398 = vcmp.gt.f32.partialorder %v1008, 0.0
      %vm1399 = vcmp.gt.f32.partialorder %v1011, 0.0
      %vm1400 = vcmp.gt.f32.partialorder %v1016, 0.0
      %vm1401 = vcmp.gt.f32.partialorder %v1019, 0.0
      %vm1402 = vcmp.gt.f32.partialorder %v1024, 0.0
      %vm1403 = vcmp.gt.f32.partialorder %v1027, 0.0
      %vm1404 = vcmp.gt.f32.partialorder %v1032, 0.0
      %vm1405 = vcmp.gt.f32.partialorder %v1035, 0.0
      %vm1406 = vcmp.gt.f32.partialorder %v1040, 0.0
      %vm1407 = vcmp.gt.f32.partialorder %v1043, 0.0
      %vm1408 = vcmp.gt.f32.partialorder %v1048, 0.0
      %vm1409 = vcmp.gt.f32.partialorder %v1051, 0.0
      %vm1410 = vcmp.gt.f32.partialorder %v1056, 0.0
      %vm1411 = vcmp.gt.f32.partialorder %v1059, 0.0
      %vm1412 = vcmp.gt.f32.partialorder %v1064, 0.0
      %vm1413 = vcmp.gt.f32.partialorder %v1067, 0.0
      %vm1414 = vcmp.gt.f32.partialorder %v1072, 0.0
      %vm1415 = vcmp.gt.f32.partialorder %v1075, 0.0
      %vm1416 = vcmp.gt.f32.partialorder %v1080, 0.0
      %vm1417 = vcmp.gt.f32.partialorder %v1083, 0.0
      %vm1418 = vcmp.gt.f32.partialorder %v1088, 0.0
      %vm1419 = vcmp.gt.f32.partialorder %v1091, 0.0
      %vm1420 = vcmp.gt.f32.partialorder %v1096, 0.0
      %vm1421 = vcmp.gt.f32.partialorder %v1099, 0.0
      %vm1422 = vcmp.gt.f32.partialorder %v1104, 0.0
      %vm1423 = vcmp.gt.f32.partialorder %v1107, 0.0
      %vm1424 = vcmp.gt.f32.partialorder %v1112, 0.0
      %vm1425 = vcmp.gt.f32.partialorder %v1115, 0.0
      %vm1426 = vcmp.gt.f32.partialorder %v1120, 0.0
      %vm1427 = vcmp.gt.f32.partialorder %v1123, 0.0
      %vm1428 = vcmp.gt.f32.partialorder %v1128, 0.0
      %vm1429 = vcmp.gt.f32.partialorder %v1131, 0.0
      %vm1430 = vcmp.gt.f32.partialorder %v1136, 0.0
      %vm1431 = vcmp.gt.f32.partialorder %v1139, 0.0
      %vm1432 = vcmp.gt.f32.partialorder %v1144, 0.0
      %vm1433 = vcmp.gt.f32.partialorder %v1147, 0.0
      %vm1434 = vcmp.gt.f32.partialorder %v1152, 0.0
      %vm1435 = vcmp.gt.f32.partialorder %v1155, 0.0
      %vm1436 = vcmp.gt.f32.partialorder %v1160, 0.0
      %vm1437 = vcmp.gt.f32.partialorder %v1163, 0.0
      %vm1438 = vcmp.gt.f32.partialorder %v1168, 0.0
      %vm1439 = vcmp.gt.f32.partialorder %v1171, 0.0
      %vm1440 = vcmp.gt.f32.partialorder %v1176, 0.0
      %vm1441 = vcmp.gt.f32.partialorder %v1179, 0.0
      %vm1442 = vcmp.gt.f32.partialorder %v1184, 0.0
      %vm1443 = vcmp.gt.f32.partialorder %v1187, 0.0
      %vm1444 = vcmp.gt.f32.partialorder %v1192, 0.0
      %vm1445 = vcmp.gt.f32.partialorder %v1195, 0.0
      %vm1446 = vcmp.gt.f32.partialorder %v1200, 0.0
      %vm1447 = vcmp.gt.f32.partialorder %v1203, 0.0
      %vm1448 = vcmp.gt.f32.partialorder %v1208, 0.0
      %vm1449 = vcmp.gt.f32.partialorder %v1211, 0.0
      %vm1450 = vcmp.gt.f32.partialorder %v1216, 0.0
      %vm1451 = vcmp.gt.f32.partialorder %v1219, 0.0
      %vm1452 = vcmp.gt.f32.partialorder %v1224, 0.0
      %vm1453 = vcmp.gt.f32.partialorder %v1227, 0.0
      %vm1454 = vcmp.gt.f32.partialorder %v1232, 0.0
      %vm1455 = vcmp.gt.f32.partialorder %v1235, 0.0
      %vm1456 = vcmp.gt.f32.partialorder %v1240, 0.0
      %vm1457 = vcmp.gt.f32.partialorder %v1243, 0.0
      %vm1458 = vcmp.gt.f32.partialorder %v1248, 0.0
      %vm1459 = vcmp.gt.f32.partialorder %v1251, 0.0
      %vm1460 = vcmp.gt.f32.partialorder %v1256, 0.0
      %vm1461 = vcmp.gt.f32.partialorder %v1259, 0.0
      %vm1462 = vcmp.gt.f32.partialorder %v1264, 0.0
      %vm1463 = vcmp.gt.f32.partialorder %v1267, 0.0
      %vm1464 = vcmp.gt.f32.partialorder %v1272, 0.0
      %vm1465 = vcmp.gt.f32.partialorder %v1275, 0.0
      %vm1466 = vcmp.gt.f32.partialorder %v1280, 0.0
      %vm1467 = vcmp.gt.f32.partialorder %v1283, 0.0
      %vm1468 = vcmp.gt.f32.partialorder %v1288, 0.0
      %vm1469 = vcmp.gt.f32.partialorder %v1291, 0.0
      %vm1470 = vcmp.gt.f32.partialorder %v1296, 0.0
      %vm1471 = vcmp.gt.f32.partialorder %v1299, 0.0
      %vm1472 = vcmp.gt.f32.partialorder %v1304, 0.0
      %vm1473 = vcmp.gt.f32.partialorder %v1307, 0.0
      %vm1474 = vcmp.gt.f32.partialorder %v1312, 0.0
      %vm1475 = vcmp.gt.f32.partialorder %v1315, 0.0
      %vm1476 = vcmp.gt.f32.partialorder %v1320, 0.0
      %vm1477 = vcmp.gt.f32.partialorder %v1323, 0.0
      %vm1478 = vcmp.gt.f32.partialorder %v1328, 0.0
      %vm1479 = vcmp.gt.f32.partialorder %v1331, 0.0
      %vm1480 = vcmp.gt.f32.partialorder %v1336, 0.0
      %vm1481 = vcmp.gt.f32.partialorder %v1339, 0.0
      %vm1482 = vcmp.gt.f32.partialorder %v1344, 0.0
      %vm1483 = vcmp.gt.f32.partialorder %v1347, 0.0
      %vm1484 = vcmp.gt.f32.partialorder %v1352, 0.0
      %vm1485 = vcmp.gt.f32.partialorder %v1355, 0.0
      %v1486 = vmul.f32 %v848, 0.2
      %v1487 = vmul.f32 %v851, 0.2
      %v1488 = vmul.f32 %v856, 0.2
      %v1489 = vmul.f32 %v859, 0.2
      %v1490 = vmul.f32 %v864, 0.2
      %v1491 = vmul.f32 %v867, 0.2
      %v1492 = vmul.f32 %v872, 0.2
      %v1493 = vmul.f32 %v875, 0.2
      %v1494 = vmul.f32 %v880, 0.2
      %v1495 = vmul.f32 %v883, 0.2
      %v1496 = vmul.f32 %v888, 0.2
      %v1497 = vmul.f32 %v891, 0.2
      %v1498 = vmul.f32 %v896, 0.2
      %v1499 = vmul.f32 %v899, 0.2
      %v1500 = vmul.f32 %v904, 0.2
      %v1501 = vmul.f32 %v907, 0.2
      %v1502 = vmul.f32 %v912, 0.2
      %v1503 = vmul.f32 %v915, 0.2
      %v1504 = vmul.f32 %v920, 0.2
      %v1505 = vmul.f32 %v923, 0.2
      %v1506 = vmul.f32 %v928, 0.2
      %v1507 = vmul.f32 %v931, 0.2
      %v1508 = vmul.f32 %v936, 0.2
      %v1509 = vmul.f32 %v939, 0.2
      %v1510 = vmul.f32 %v944, 0.2
      %v1511 = vmul.f32 %v947, 0.2
      %v1512 = vmul.f32 %v952, 0.2
      %v1513 = vmul.f32 %v955, 0.2
      %v1514 = vmul.f32 %v960, 0.2
      %v1515 = vmul.f32 %v963, 0.2
      %v1516 = vmul.f32 %v968, 0.2
      %v1517 = vmul.f32 %v971, 0.2
      %v1518 = vmul.f32 %v976, 0.2
      %v1519 = vmul.f32 %v979, 0.2
      %v1520 = vmul.f32 %v984, 0.2
      %v1521 = vmul.f32 %v987, 0.2
      %v1522 = vmul.f32 %v992, 0.2
      %v1523 = vmul.f32 %v995, 0.2
      %v1524 = vmul.f32 %v1000, 0.2
      %v1525 = vmul.f32 %v1003, 0.2
      %v1526 = vmul.f32 %v1008, 0.2
      %v1527 = vmul.f32 %v1011, 0.2
      %v1528 = vmul.f32 %v1016, 0.2
      %v1529 = vmul.f32 %v1019, 0.2
      %v1530 = vmul.f32 %v1024, 0.2
      %v1531 = vmul.f32 %v1027, 0.2
      %v1532 = vmul.f32 %v1032, 0.2
      %v1533 = vmul.f32 %v1035, 0.2
      %v1534 = vmul.f32 %v1040, 0.2
      %v1535 = vmul.f32 %v1043, 0.2
      %v1536 = vmul.f32 %v1048, 0.2
      %v1537 = vmul.f32 %v1051, 0.2
      %v1538 = vmul.f32 %v1056, 0.2
      %v1539 = vmul.f32 %v1059, 0.2
      %v1540 = vmul.f32 %v1064, 0.2
      %v1541 = vmul.f32 %v1067, 0.2
      %v1542 = vmul.f32 %v1072, 0.2
      %v1543 = vmul.f32 %v1075, 0.2
      %v1544 = vmul.f32 %v1080, 0.2
      %v1545 = vmul.f32 %v1083, 0.2
      %v1546 = vmul.f32 %v1088, 0.2
      %v1547 = vmul.f32 %v1091, 0.2
      %v1548 = vmul.f32 %v1096, 0.2
      %v1549 = vmul.f32 %v1099, 0.2
      %v1550 = vmul.f32 %v1104, 0.2
      %v1551 = vmul.f32 %v1107, 0.2
      %v1552 = vmul.f32 %v1112, 0.2
      %v1553 = vmul.f32 %v1115, 0.2
      %v1554 = vmul.f32 %v1120, 0.2
      %v1555 = vmul.f32 %v1123, 0.2
      %v1556 = vmul.f32 %v1128, 0.2
      %v1557 = vmul.f32 %v1131, 0.2
      %v1558 = vmul.f32 %v1136, 0.2
      %v1559 = vmul.f32 %v1139, 0.2
      %v1560 = vmul.f32 %v1144, 0.2
      %v1561 = vmul.f32 %v1147, 0.2
      %v1562 = vmul.f32 %v1152, 0.2
      %v1563 = vmul.f32 %v1155, 0.2
      %v1564 = vmul.f32 %v1160, 0.2
      %v1565 = vmul.f32 %v1163, 0.2
      %v1566 = vmul.f32 %v1168, 0.2
      %v1567 = vmul.f32 %v1171, 0.2
      %v1568 = vmul.f32 %v1176, 0.2
      %v1569 = vmul.f32 %v1179, 0.2
      %v1570 = vmul.f32 %v1184, 0.2
      %v1571 = vmul.f32 %v1187, 0.2
      %v1572 = vmul.f32 %v1192, 0.2
      %v1573 = vmul.f32 %v1195, 0.2
      %v1574 = vmul.f32 %v1200, 0.2
      %v1575 = vmul.f32 %v1203, 0.2
      %v1576 = vmul.f32 %v1208, 0.2
      %v1577 = vmul.f32 %v1211, 0.2
      %v1578 = vmul.f32 %v1216, 0.2
      %v1579 = vmul.f32 %v1219, 0.2
      %v1580 = vmul.f32 %v1224, 0.2
      %v1581 = vmul.f32 %v1227, 0.2
      %v1582 = vmul.f32 %v1232, 0.2
      %v1583 = vmul.f32 %v1235, 0.2
      %v1584 = vmul.f32 %v1240, 0.2
      %v1585 = vmul.f32 %v1243, 0.2
      %v1586 = vmul.f32 %v1248, 0.2
      %v1587 = vmul.f32 %v1251, 0.2
      %v1588 = vmul.f32 %v1256, 0.2
      %v1589 = vmul.f32 %v1259, 0.2
      %v1590 = vmul.f32 %v1264, 0.2
      %v1591 = vmul.f32 %v1267, 0.2
      %v1592 = vmul.f32 %v1272, 0.2
      %v1593 = vmul.f32 %v1275, 0.2
      %v1594 = vmul.f32 %v1280, 0.2
      %v1595 = vmul.f32 %v1283, 0.2
      %v1596 = vmul.f32 %v1288, 0.2
      %v1597 = vmul.f32 %v1291, 0.2
      %v1598 = vmul.f32 %v1296, 0.2
      %v1599 = vmul.f32 %v1299, 0.2
      %v1600 = vmul.f32 %v1304, 0.2
      %v1601 = vmul.f32 %v1307, 0.2
      %v1602 = vmul.f32 %v1312, 0.2
      %v1603 = vmul.f32 %v1315, 0.2
      %v1604 = vmul.f32 %v1320, 0.2
      %v1605 = vmul.f32 %v1323, 0.2
      %v1606 = vmul.f32 %v1328, 0.2
      %v1607 = vmul.f32 %v1331, 0.2
      %v1608 = vmul.f32 %v1336, 0.2
      %v1609 = vmul.f32 %v1339, 0.2
      %v1610 = vmul.f32 %v1344, 0.2
      %v1611 = vmul.f32 %v1347, 0.2
      %v1612 = vmul.f32 %v1352, 0.2
      %v1613 = vmul.f32 %v1355, 0.2
      %v1614 = vsel %vm1358, %v848, %v1486
      %v1615 = vsel %vm1359, %v851, %v1487
      %v1616 = vsel %vm1360, %v856, %v1488
      %v1617 = vsel %vm1361, %v859, %v1489
      %v1618 = vsel %vm1362, %v864, %v1490
      %v1619 = vsel %vm1363, %v867, %v1491
      %v1620 = vsel %vm1364, %v872, %v1492
      %v1621 = vsel %vm1365, %v875, %v1493
      %v1622 = vsel %vm1366, %v880, %v1494
      %v1623 = vsel %vm1367, %v883, %v1495
      %v1624 = vsel %vm1368, %v888, %v1496
      %v1625 = vsel %vm1369, %v891, %v1497
      %v1626 = vsel %vm1370, %v896, %v1498
      %v1627 = vsel %vm1371, %v899, %v1499
      %v1628 = vsel %vm1372, %v904, %v1500
      %v1629 = vsel %vm1373, %v907, %v1501
      %v1630 = vsel %vm1374, %v912, %v1502
      %v1631 = vsel %vm1375, %v915, %v1503
      %v1632 = vsel %vm1376, %v920, %v1504
      %v1633 = vsel %vm1377, %v923, %v1505
      %v1634 = vsel %vm1378, %v928, %v1506
      %v1635 = vsel %vm1379, %v931, %v1507
      %v1636 = vsel %vm1380, %v936, %v1508
      %v1637 = vsel %vm1381, %v939, %v1509
      %v1638 = vsel %vm1382, %v944, %v1510
      %v1639 = vsel %vm1383, %v947, %v1511
      %v1640 = vsel %vm1384, %v952, %v1512
      %v1641 = vsel %vm1385, %v955, %v1513
      %v1642 = vsel %vm1386, %v960, %v1514
      %v1643 = vsel %vm1387, %v963, %v1515
      %v1644 = vsel %vm1388, %v968, %v1516
      %v1645 = vsel %vm1389, %v971, %v1517
      %v1646 = vsel %vm1390, %v976, %v1518
      %v1647 = vsel %vm1391, %v979, %v1519
      %v1648 = vsel %vm1392, %v984, %v1520
      %v1649 = vsel %vm1393, %v987, %v1521
      %v1650 = vsel %vm1394, %v992, %v1522
      %v1651 = vsel %vm1395, %v995, %v1523
      %v1652 = vsel %vm1396, %v1000, %v1524
      %v1653 = vsel %vm1397, %v1003, %v1525
      %v1654 = vsel %vm1398, %v1008, %v1526
      %v1655 = vsel %vm1399, %v1011, %v1527
      %v1656 = vsel %vm1400, %v1016, %v1528
      %v1657 = vsel %vm1401, %v1019, %v1529
      %v1658 = vsel %vm1402, %v1024, %v1530
      %v1659 = vsel %vm1403, %v1027, %v1531
      %v1660 = vsel %vm1404, %v1032, %v1532
      %v1661 = vsel %vm1405, %v1035, %v1533
      %v1662 = vsel %vm1406, %v1040, %v1534
      %v1663 = vsel %vm1407, %v1043, %v1535
      %v1664 = vsel %vm1408, %v1048, %v1536
      %v1665 = vsel %vm1409, %v1051, %v1537
      %v1666 = vsel %vm1410, %v1056, %v1538
      %v1667 = vsel %vm1411, %v1059, %v1539
      %v1668 = vsel %vm1412, %v1064, %v1540
      %v1669 = vsel %vm1413, %v1067, %v1541
      %v1670 = vsel %vm1414, %v1072, %v1542
      %v1671 = vsel %vm1415, %v1075, %v1543
      %v1672 = vsel %vm1416, %v1080, %v1544
      %v1673 = vsel %vm1417, %v1083, %v1545
      %v1674 = vsel %vm1418, %v1088, %v1546
      %v1675 = vsel %vm1419, %v1091, %v1547
      %v1676 = vsel %vm1420, %v1096, %v1548
      %v1677 = vsel %vm1421, %v1099, %v1549
      %v1678 = vsel %vm1422, %v1104, %v1550
      %v1679 = vsel %vm1423, %v1107, %v1551
      %v1680 = vsel %vm1424, %v1112, %v1552
      %v1681 = vsel %vm1425, %v1115, %v1553
      %v1682 = vsel %vm1426, %v1120, %v1554
      %v1683 = vsel %vm1427, %v1123, %v1555
      %v1684 = vsel %vm1428, %v1128, %v1556
      %v1685 = vsel %vm1429, %v1131, %v1557
      %v1686 = vsel %vm1430, %v1136, %v1558
      %v1687 = vsel %vm1431, %v1139, %v1559
      %v1688 = vsel %vm1432, %v1144, %v1560
      %v1689 = vsel %vm1433, %v1147, %v1561
      %v1690 = vsel %vm1434, %v1152, %v1562
      %v1691 = vsel %vm1435, %v1155, %v1563
      %v1692 = vsel %vm1436, %v1160, %v1564
      %v1693 = vsel %vm1437, %v1163, %v1565
      %v1694 = vsel %vm1438, %v1168, %v1566
      %v1695 = vsel %vm1439, %v1171, %v1567
      %v1696 = vsel %vm1440, %v1176, %v1568
      %v1697 = vsel %vm1441, %v1179, %v1569
      %v1698 = vsel %vm1442, %v1184, %v1570
      %v1699 = vsel %vm1443, %v1187, %v1571
      %v1700 = vsel %vm1444, %v1192, %v1572
      %v1701 = vsel %vm1445, %v1195, %v1573
      %v1702 = vsel %vm1446, %v1200, %v1574
      %v1703 = vsel %vm1447, %v1203, %v1575
      %v1704 = vsel %vm1448, %v1208, %v1576
      %v1705 = vsel %vm1449, %v1211, %v1577
      %v1706 = vsel %vm1450, %v1216, %v1578
      %v1707 = vsel %vm1451, %v1219, %v1579
      %v1708 = vsel %vm1452, %v1224, %v1580
      %v1709 = vsel %vm1453, %v1227, %v1581
      %v1710 = vsel %vm1454, %v1232, %v1582
      %v1711 = vsel %vm1455, %v1235, %v1583
      %v1712 = vsel %vm1456, %v1240, %v1584
      %v1713 = vsel %vm1457, %v1243, %v1585
      %v1714 = vsel %vm1458, %v1248, %v1586
      %v1715 = vsel %vm1459, %v1251, %v1587
      %v1716 = vsel %vm1460, %v1256, %v1588
      %v1717 = vsel %vm1461, %v1259, %v1589
      %v1718 = vsel %vm1462, %v1264, %v1590
      %v1719 = vsel %vm1463, %v1267, %v1591
      %v1720 = vsel %vm1464, %v1272, %v1592
      %v1721 = vsel %vm1465, %v1275, %v1593
      %v1722 = vsel %vm1466, %v1280, %v1594
      %v1723 = vsel %vm1467, %v1283, %v1595
      %v1724 = vsel %vm1468, %v1288, %v1596
      %v1725 = vsel %vm1469, %v1291, %v1597
      %v1726 = vsel %vm1470, %v1296, %v1598
      %v1727 = vsel %vm1471, %v1299, %v1599
      %v1728 = vsel %vm1472, %v1304, %v1600
      %v1729 = vsel %vm1473, %v1307, %v1601
      %v1730 = vsel %vm1474, %v1312, %v1602
      %v1731 = vsel %vm1475, %v1315, %v1603
      %v1732 = vsel %vm1476, %v1320, %v1604
      %v1733 = vsel %vm1477, %v1323, %v1605
      %v1734 = vsel %vm1478, %v1328, %v1606
      %v1735 = vsel %vm1479, %v1331, %v1607
      %v1736 = vsel %vm1480, %v1336, %v1608
      %v1737 = vsel %vm1481, %v1339, %v1609
      %v1738 = vsel %vm1482, %v1344, %v1610
      %v1739 = vsel %vm1483, %v1347, %v1611
      %v1740 = vsel %vm1484, %v1352, %v1612
      %v1741 = vsel %vm1485, %v1355, %v1613
      %v1742 = vpack.c.bf16 %v1615, %v1614
      %v1743 = vpack.c.bf16 %v1617, %v1616
      %v1744 = vpack.c.bf16 %v1619, %v1618
      %v1745 = vpack.c.bf16 %v1621, %v1620
      %v1746 = vpack.c.bf16 %v1623, %v1622
      %v1747 = vpack.c.bf16 %v1625, %v1624
      %v1748 = vpack.c.bf16 %v1627, %v1626
      %v1749 = vpack.c.bf16 %v1629, %v1628
      %v1750 = vpack.c.bf16 %v1631, %v1630
      %v1751 = vpack.c.bf16 %v1633, %v1632
      %v1752 = vpack.c.bf16 %v1635, %v1634
      %v1753 = vpack.c.bf16 %v1637, %v1636
      %v1754 = vpack.c.bf16 %v1639, %v1638
      %v1755 = vpack.c.bf16 %v1641, %v1640
      %v1756 = vpack.c.bf16 %v1643, %v1642
      %v1757 = vpack.c.bf16 %v1645, %v1644
      %v1758 = vpack.c.bf16 %v1647, %v1646
      %v1759 = vpack.c.bf16 %v1649, %v1648
      %v1760 = vpack.c.bf16 %v1651, %v1650
      %v1761 = vpack.c.bf16 %v1653, %v1652
      %v1762 = vpack.c.bf16 %v1655, %v1654
      %v1763 = vpack.c.bf16 %v1657, %v1656
      %v1764 = vpack.c.bf16 %v1659, %v1658
      %v1765 = vpack.c.bf16 %v1661, %v1660
      %v1766 = vpack.c.bf16 %v1663, %v1662
      %v1767 = vpack.c.bf16 %v1665, %v1664
      %v1768 = vpack.c.bf16 %v1667, %v1666
      %v1769 = vpack.c.bf16 %v1669, %v1668
      %v1770 = vpack.c.bf16 %v1671, %v1670
      %v1771 = vpack.c.bf16 %v1673, %v1672
      %v1772 = vpack.c.bf16 %v1675, %v1674
      %v1773 = vpack.c.bf16 %v1677, %v1676
      %v1774 = vpack.c.bf16 %v1679, %v1678
      %v1775 = vpack.c.bf16 %v1681, %v1680
      %v1776 = vpack.c.bf16 %v1683, %v1682
      %v1777 = vpack.c.bf16 %v1685, %v1684
      %v1778 = vpack.c.bf16 %v1687, %v1686
      %v1779 = vpack.c.bf16 %v1689, %v1688
      %v1780 = vpack.c.bf16 %v1691, %v1690
      %v1781 = vpack.c.bf16 %v1693, %v1692
      %v1782 = vpack.c.bf16 %v1695, %v1694
      %v1783 = vpack.c.bf16 %v1697, %v1696
      %v1784 = vpack.c.bf16 %v1699, %v1698
      %v1785 = vpack.c.bf16 %v1701, %v1700
      %v1786 = vpack.c.bf16 %v1703, %v1702
      %v1787 = vpack.c.bf16 %v1705, %v1704
      %v1788 = vpack.c.bf16 %v1707, %v1706
      %v1789 = vpack.c.bf16 %v1709, %v1708
      %v1790 = vpack.c.bf16 %v1711, %v1710
      %v1791 = vpack.c.bf16 %v1713, %v1712
      %v1792 = vpack.c.bf16 %v1715, %v1714
      %v1793 = vpack.c.bf16 %v1717, %v1716
      %v1794 = vpack.c.bf16 %v1719, %v1718
      %v1795 = vpack.c.bf16 %v1721, %v1720
      %v1796 = vpack.c.bf16 %v1723, %v1722
      %v1797 = vpack.c.bf16 %v1725, %v1724
      %v1798 = vpack.c.bf16 %v1727, %v1726
      %v1799 = vpack.c.bf16 %v1729, %v1728
      %v1800 = vpack.c.bf16 %v1731, %v1730
      %v1801 = vpack.c.bf16 %v1733, %v1732
      %v1802 = vpack.c.bf16 %v1735, %v1734
      %v1803 = vpack.c.bf16 %v1737, %v1736
      %v1804 = vpack.c.bf16 %v1739, %v1738
      %v1805 = vpack.c.bf16 %v1741, %v1740
      %v1870 = vunpack.c.l.b16 %v1742
      %v1871 = vunpack.c.h.b16 %v1742
      %v1872 = vunpack.c.l.b16 %v1743
      %v1873 = vunpack.c.h.b16 %v1743
      %v1874 = vunpack.c.l.b16 %v1744
      %v1875 = vunpack.c.h.b16 %v1744
      %v1876 = vunpack.c.l.b16 %v1745
      %v1877 = vunpack.c.h.b16 %v1745
      %v1878 = vunpack.c.l.b16 %v1746
      %v1879 = vunpack.c.h.b16 %v1746
      %v1880 = vunpack.c.l.b16 %v1747
      %v1881 = vunpack.c.h.b16 %v1747
      %v1882 = vunpack.c.l.b16 %v1748
      %v1883 = vunpack.c.h.b16 %v1748
      %v1884 = vunpack.c.l.b16 %v1749
      %v1885 = vunpack.c.h.b16 %v1749
      %v1886 = vunpack.c.l.b16 %v1750
      %v1887 = vunpack.c.h.b16 %v1750
      %v1888 = vunpack.c.l.b16 %v1751
      %v1889 = vunpack.c.h.b16 %v1751
      %v1890 = vunpack.c.l.b16 %v1752
      %v1891 = vunpack.c.h.b16 %v1752
      %v1892 = vunpack.c.l.b16 %v1753
      %v1893 = vunpack.c.h.b16 %v1753
      %v1894 = vunpack.c.l.b16 %v1754
      %v1895 = vunpack.c.h.b16 %v1754
      %v1896 = vunpack.c.l.b16 %v1755
      %v1897 = vunpack.c.h.b16 %v1755
      %v1898 = vunpack.c.l.b16 %v1756
      %v1899 = vunpack.c.h.b16 %v1756
      %v1900 = vunpack.c.l.b16 %v1757
      %v1901 = vunpack.c.h.b16 %v1757
      %v1902 = vunpack.c.l.b16 %v1758
      %v1903 = vunpack.c.h.b16 %v1758
      %v1904 = vunpack.c.l.b16 %v1759
      %v1905 = vunpack.c.h.b16 %v1759
      %v1906 = vunpack.c.l.b16 %v1760
      %v1907 = vunpack.c.h.b16 %v1760
      %v1908 = vunpack.c.l.b16 %v1761
      %v1909 = vunpack.c.h.b16 %v1761
      %v1910 = vunpack.c.l.b16 %v1762
      %v1911 = vunpack.c.h.b16 %v1762
      %v1912 = vunpack.c.l.b16 %v1763
      %v1913 = vunpack.c.h.b16 %v1763
      %v1914 = vunpack.c.l.b16 %v1764
      %v1915 = vunpack.c.h.b16 %v1764
      %v1916 = vunpack.c.l.b16 %v1765
      %v1917 = vunpack.c.h.b16 %v1765
      %v1918 = vunpack.c.l.b16 %v1766
      %v1919 = vunpack.c.h.b16 %v1766
      %v1920 = vunpack.c.l.b16 %v1767
      %v1921 = vunpack.c.h.b16 %v1767
      %v1922 = vunpack.c.l.b16 %v1768
      %v1923 = vunpack.c.h.b16 %v1768
      %v1924 = vunpack.c.l.b16 %v1769
      %v1925 = vunpack.c.h.b16 %v1769
      %v1926 = vunpack.c.l.b16 %v1770
      %v1927 = vunpack.c.h.b16 %v1770
      %v1928 = vunpack.c.l.b16 %v1771
      %v1929 = vunpack.c.h.b16 %v1771
      %v1930 = vunpack.c.l.b16 %v1772
      %v1931 = vunpack.c.h.b16 %v1772
      %v1932 = vunpack.c.l.b16 %v1773
      %v1933 = vunpack.c.h.b16 %v1773
      %v1934 = vunpack.c.l.b16 %v1774
      %v1935 = vunpack.c.h.b16 %v1774
      %v1936 = vunpack.c.l.b16 %v1775
      %v1937 = vunpack.c.h.b16 %v1775
      %v1938 = vunpack.c.l.b16 %v1776
      %v1939 = vunpack.c.h.b16 %v1776
      %v1940 = vunpack.c.l.b16 %v1777
      %v1941 = vunpack.c.h.b16 %v1777
      %v1942 = vunpack.c.l.b16 %v1778
      %v1943 = vunpack.c.h.b16 %v1778
      %v1944 = vunpack.c.l.b16 %v1779
      %v1945 = vunpack.c.h.b16 %v1779
      %v1946 = vunpack.c.l.b16 %v1780
      %v1947 = vunpack.c.h.b16 %v1780
      %v1948 = vunpack.c.l.b16 %v1781
      %v1949 = vunpack.c.h.b16 %v1781
      %v1950 = vunpack.c.l.b16 %v1782
      %v1951 = vunpack.c.h.b16 %v1782
      %v1952 = vunpack.c.l.b16 %v1783
      %v1953 = vunpack.c.h.b16 %v1783
      %v1954 = vunpack.c.l.b16 %v1784
      %v1955 = vunpack.c.h.b16 %v1784
      %v1956 = vunpack.c.l.b16 %v1785
      %v1957 = vunpack.c.h.b16 %v1785
      %v1958 = vunpack.c.l.b16 %v1786
      %v1959 = vunpack.c.h.b16 %v1786
      %v1960 = vunpack.c.l.b16 %v1787
      %v1961 = vunpack.c.h.b16 %v1787
      %v1962 = vunpack.c.l.b16 %v1788
      %v1963 = vunpack.c.h.b16 %v1788
      %v1964 = vunpack.c.l.b16 %v1789
      %v1965 = vunpack.c.h.b16 %v1789
      %v1966 = vunpack.c.l.b16 %v1790
      %v1967 = vunpack.c.h.b16 %v1790
      %v1968 = vunpack.c.l.b16 %v1791
      %v1969 = vunpack.c.h.b16 %v1791
      %v1970 = vunpack.c.l.b16 %v1792
      %v1971 = vunpack.c.h.b16 %v1792
      %v1972 = vunpack.c.l.b16 %v1793
      %v1973 = vunpack.c.h.b16 %v1793
      %v1974 = vunpack.c.l.b16 %v1794
      %v1975 = vunpack.c.h.b16 %v1794
      %v1976 = vunpack.c.l.b16 %v1795
      %v1977 = vunpack.c.h.b16 %v1795
      %v1978 = vunpack.c.l.b16 %v1796
      %v1979 = vunpack.c.h.b16 %v1796
      %v1980 = vunpack.c.l.b16 %v1797
      %v1981 = vunpack.c.h.b16 %v1797
      %v1982 = vunpack.c.l.b16 %v1798
      %v1983 = vunpack.c.h.b16 %v1798
      %v1984 = vunpack.c.l.b16 %v1799
      %v1985 = vunpack.c.h.b16 %v1799
      %v1986 = vunpack.c.l.b16 %v1800
      %v1987 = vunpack.c.h.b16 %v1800
      %v1988 = vunpack.c.l.b16 %v1801
      %v1989 = vunpack.c.h.b16 %v1801
      %v1990 = vunpack.c.l.b16 %v1802
      %v1991 = vunpack.c.h.b16 %v1802
      %v1992 = vunpack.c.l.b16 %v1803
      %v1993 = vunpack.c.h.b16 %v1803
      %v1994 = vunpack.c.l.b16 %v1804
      %v1995 = vunpack.c.h.b16 %v1804
      %v1996 = vunpack.c.l.b16 %v1805
      %v1997 = vunpack.c.h.b16 %v1805
      %v1998 = vpack.c.b16 %v1870, %v1870
      %v1999 = vpack.c.b16 %v1871, %v1871
      %v2000 = vpack.c.b16 %v1872, %v1872
      %v2001 = vpack.c.b16 %v1873, %v1873
      %v2002 = vpack.c.b16 %v1874, %v1874
      %v2003 = vpack.c.b16 %v1875, %v1875
      %v2004 = vpack.c.b16 %v1876, %v1876
      %v2005 = vpack.c.b16 %v1877, %v1877
      %v2006 = vpack.c.b16 %v1878, %v1878
      %v2007 = vpack.c.b16 %v1879, %v1879
      %v2008 = vpack.c.b16 %v1880, %v1880
      %v2009 = vpack.c.b16 %v1881, %v1881
      %v2010 = vpack.c.b16 %v1882, %v1882
      %v2011 = vpack.c.b16 %v1883, %v1883
      %v2012 = vpack.c.b16 %v1884, %v1884
      %v2013 = vpack.c.b16 %v1885, %v1885
      %v2014 = vpack.c.b16 %v1886, %v1886
      %v2015 = vpack.c.b16 %v1887, %v1887
      %v2016 = vpack.c.b16 %v1888, %v1888
      %v2017 = vpack.c.b16 %v1889, %v1889
      %v2018 = vpack.c.b16 %v1890, %v1890
      %v2019 = vpack.c.b16 %v1891, %v1891
      %v2020 = vpack.c.b16 %v1892, %v1892
      %v2021 = vpack.c.b16 %v1893, %v1893
      %v2022 = vpack.c.b16 %v1894, %v1894
      %v2023 = vpack.c.b16 %v1895, %v1895
      %v2024 = vpack.c.b16 %v1896, %v1896
      %v2025 = vpack.c.b16 %v1897, %v1897
      %v2026 = vpack.c.b16 %v1898, %v1898
      %v2027 = vpack.c.b16 %v1899, %v1899
      %v2028 = vpack.c.b16 %v1900, %v1900
      %v2029 = vpack.c.b16 %v1901, %v1901
      %v2030 = vpack.c.b16 %v1902, %v1902
      %v2031 = vpack.c.b16 %v1903, %v1903
      %v2032 = vpack.c.b16 %v1904, %v1904
      %v2033 = vpack.c.b16 %v1905, %v1905
      %v2034 = vpack.c.b16 %v1906, %v1906
      %v2035 = vpack.c.b16 %v1907, %v1907
      %v2036 = vpack.c.b16 %v1908, %v1908
      %v2037 = vpack.c.b16 %v1909, %v1909
      %v2038 = vpack.c.b16 %v1910, %v1910
      %v2039 = vpack.c.b16 %v1911, %v1911
      %v2040 = vpack.c.b16 %v1912, %v1912
      %v2041 = vpack.c.b16 %v1913, %v1913
      %v2042 = vpack.c.b16 %v1914, %v1914
      %v2043 = vpack.c.b16 %v1915, %v1915
      %v2044 = vpack.c.b16 %v1916, %v1916
      %v2045 = vpack.c.b16 %v1917, %v1917
      %v2046 = vpack.c.b16 %v1918, %v1918
      %v2047 = vpack.c.b16 %v1919, %v1919
      %v2048 = vpack.c.b16 %v1920, %v1920
      %v2049 = vpack.c.b16 %v1921, %v1921
      %v2050 = vpack.c.b16 %v1922, %v1922
      %v2051 = vpack.c.b16 %v1923, %v1923
      %v2052 = vpack.c.b16 %v1924, %v1924
      %v2053 = vpack.c.b16 %v1925, %v1925
      %v2054 = vpack.c.b16 %v1926, %v1926
      %v2055 = vpack.c.b16 %v1927, %v1927
      %v2056 = vpack.c.b16 %v1928, %v1928
      %v2057 = vpack.c.b16 %v1929, %v1929
      %v2058 = vpack.c.b16 %v1930, %v1930
      %v2059 = vpack.c.b16 %v1931, %v1931
      %v2060 = vpack.c.b16 %v1932, %v1932
      %v2061 = vpack.c.b16 %v1933, %v1933
      %v2062 = vpack.c.b16 %v1934, %v1934
      %v2063 = vpack.c.b16 %v1935, %v1935
      %v2064 = vpack.c.b16 %v1936, %v1936
      %v2065 = vpack.c.b16 %v1937, %v1937
      %v2066 = vpack.c.b16 %v1938, %v1938
      %v2067 = vpack.c.b16 %v1939, %v1939
      %v2068 = vpack.c.b16 %v1940, %v1940
      %v2069 = vpack.c.b16 %v1941, %v1941
      %v2070 = vpack.c.b16 %v1942, %v1942
      %v2071 = vpack.c.b16 %v1943, %v1943
      %v2072 = vpack.c.b16 %v1944, %v1944
      %v2073 = vpack.c.b16 %v1945, %v1945
      %v2074 = vpack.c.b16 %v1946, %v1946
      %v2075 = vpack.c.b16 %v1947, %v1947
      %v2076 = vpack.c.b16 %v1948, %v1948
      %v2077 = vpack.c.b16 %v1949, %v1949
      %v2078 = vpack.c.b16 %v1950, %v1950
      %v2079 = vpack.c.b16 %v1951, %v1951
      %v2080 = vpack.c.b16 %v1952, %v1952
      %v2081 = vpack.c.b16 %v1953, %v1953
      %v2082 = vpack.c.b16 %v1954, %v1954
      %v2083 = vpack.c.b16 %v1955, %v1955
      %v2084 = vpack.c.b16 %v1956, %v1956
      %v2085 = vpack.c.b16 %v1957, %v1957
      %v2086 = vpack.c.b16 %v1958, %v1958
      %v2087 = vpack.c.b16 %v1959, %v1959
      %v2088 = vpack.c.b16 %v1960, %v1960
      %v2089 = vpack.c.b16 %v1961, %v1961
      %v2090 = vpack.c.b16 %v1962, %v1962
      %v2091 = vpack.c.b16 %v1963, %v1963
      %v2092 = vpack.c.b16 %v1964, %v1964
      %v2093 = vpack.c.b16 %v1965, %v1965
      %v2094 = vpack.c.b16 %v1966, %v1966
      %v2095 = vpack.c.b16 %v1967, %v1967
      %v2096 = vpack.c.b16 %v1968, %v1968
      %v2097 = vpack.c.b16 %v1969, %v1969
      %v2098 = vpack.c.b16 %v1970, %v1970
      %v2099 = vpack.c.b16 %v1971, %v1971
      %v2100 = vpack.c.b16 %v1972, %v1972
      %v2101 = vpack.c.b16 %v1973, %v1973
      %v2102 = vpack.c.b16 %v1974, %v1974
      %v2103 = vpack.c.b16 %v1975, %v1975
      %v2104 = vpack.c.b16 %v1976, %v1976
      %v2105 = vpack.c.b16 %v1977, %v1977
      %v2106 = vpack.c.b16 %v1978, %v1978
      %v2107 = vpack.c.b16 %v1979, %v1979
      %v2108 = vpack.c.b16 %v1980, %v1980
      %v2109 = vpack.c.b16 %v1981, %v1981
      %v2110 = vpack.c.b16 %v1982, %v1982
      %v2111 = vpack.c.b16 %v1983, %v1983
      %v2112 = vpack.c.b16 %v1984, %v1984
      %v2113 = vpack.c.b16 %v1985, %v1985
      %v2114 = vpack.c.b16 %v1986, %v1986
      %v2115 = vpack.c.b16 %v1987, %v1987
      %v2116 = vpack.c.b16 %v1988, %v1988
      %v2117 = vpack.c.b16 %v1989, %v1989
      %v2118 = vpack.c.b16 %v1990, %v1990
      %v2119 = vpack.c.b16 %v1991, %v1991
      %v2120 = vpack.c.b16 %v1992, %v1992
      %v2121 = vpack.c.b16 %v1993, %v1993
      %v2122 = vpack.c.b16 %v1994, %v1994
      %v2123 = vpack.c.b16 %v1995, %v1995
      %v2124 = vpack.c.b16 %v1996, %v1996
      %v2125 = vpack.c.b16 %v1997, %v1997
      %vm2254 = vcmask 60416
      %2255 = vst.msk [vmem:[%s145] sm:$0xf] %vm2254, %v1998
      %2256 = vst.msk [vmem:[%s145 + $0x4] sm:$0xf] %vm2254, %v1999
      %2257 = vst.msk [vmem:[%s145 + $0x8] sm:$0xf] %vm2254, %v2000
      %2258 = vst.msk [vmem:[%s145 + $0xc] sm:$0xf] %vm2254, %v2001
      %2259 = vst.msk [vmem:[%s145 + $0x10] sm:$0xf] %vm2254, %v2002
      %2260 = vst.msk [vmem:[%s145 + $0x14] sm:$0xf] %vm2254, %v2003
      %2261 = vst.msk [vmem:[%s145 + $0x18] sm:$0xf] %vm2254, %v2004
      %2262 = vst.msk [vmem:[%s145 + $0x1c] sm:$0xf] %vm2254, %v2005
      %2263 = vst.msk [vmem:[%s145 + $0x20] sm:$0xf] %vm2254, %v2006
      %2264 = vst.msk [vmem:[%s145 + $0x24] sm:$0xf] %vm2254, %v2007
      %2265 = vst.msk [vmem:[%s145 + $0x28] sm:$0xf] %vm2254, %v2008
      %2266 = vst.msk [vmem:[%s145 + $0x2c] sm:$0xf] %vm2254, %v2009
      %2267 = vst.msk [vmem:[%s145 + $0x30] sm:$0xf] %vm2254, %v2010
      %2268 = vst.msk [vmem:[%s145 + $0x34] sm:$0xf] %vm2254, %v2011
      %2269 = vst.msk [vmem:[%s145 + $0x38] sm:$0xf] %vm2254, %v2012
      %2270 = vst.msk [vmem:[%s145 + $0x3c] sm:$0xf] %vm2254, %v2013
      %2271 = vst.msk [vmem:[%s145 + $0x40] sm:$0xf] %vm2254, %v2014
      %2272 = vst.msk [vmem:[%s145 + $0x44] sm:$0xf] %vm2254, %v2015
      %2273 = vst.msk [vmem:[%s145 + $0x48] sm:$0xf] %vm2254, %v2016
      %2274 = vst.msk [vmem:[%s145 + $0x4c] sm:$0xf] %vm2254, %v2017
      %2275 = vst.msk [vmem:[%s145 + $0x50] sm:$0xf] %vm2254, %v2018
      %2276 = vst.msk [vmem:[%s145 + $0x54] sm:$0xf] %vm2254, %v2019
      %2277 = vst.msk [vmem:[%s145 + $0x58] sm:$0xf] %vm2254, %v2020
      %2278 = vst.msk [vmem:[%s145 + $0x5c] sm:$0xf] %vm2254, %v2021
      %2279 = vst.msk [vmem:[%s145 + $0x60] sm:$0xf] %vm2254, %v2022
      %2280 = vst.msk [vmem:[%s145 + $0x64] sm:$0xf] %vm2254, %v2023
      %2281 = vst.msk [vmem:[%s145 + $0x68] sm:$0xf] %vm2254, %v2024
      %2282 = vst.msk [vmem:[%s145 + $0x6c] sm:$0xf] %vm2254, %v2025
      %2283 = vst.msk [vmem:[%s145 + $0x70] sm:$0xf] %vm2254, %v2026
      %2284 = vst.msk [vmem:[%s145 + $0x74] sm:$0xf] %vm2254, %v2027
      %2285 = vst.msk [vmem:[%s145 + $0x78] sm:$0xf] %vm2254, %v2028
      %2286 = vst.msk [vmem:[%s145 + $0x7c] sm:$0xf] %vm2254, %v2029
      %2287 = vst.msk [vmem:[%s145 + $0x80] sm:$0xf] %vm2254, %v2030
      %2288 = vst.msk [vmem:[%s145 + $0x84] sm:$0xf] %vm2254, %v2031
      %2289 = vst.msk [vmem:[%s145 + $0x88] sm:$0xf] %vm2254, %v2032
      %2290 = vst.msk [vmem:[%s145 + $0x8c] sm:$0xf] %vm2254, %v2033
      %2291 = vst.msk [vmem:[%s145 + $0x90] sm:$0xf] %vm2254, %v2034
      %2292 = vst.msk [vmem:[%s145 + $0x94] sm:$0xf] %vm2254, %v2035
      %2293 = vst.msk [vmem:[%s145 + $0x98] sm:$0xf] %vm2254, %v2036
      %2294 = vst.msk [vmem:[%s145 + $0x9c] sm:$0xf] %vm2254, %v2037
      %2295 = vst.msk [vmem:[%s145 + $0xa0] sm:$0xf] %vm2254, %v2038
      %2296 = vst.msk [vmem:[%s145 + $0xa4] sm:$0xf] %vm2254, %v2039
      %2297 = vst.msk [vmem:[%s145 + $0xa8] sm:$0xf] %vm2254, %v2040
      %2298 = vst.msk [vmem:[%s145 + $0xac] sm:$0xf] %vm2254, %v2041
      %2299 = vst.msk [vmem:[%s145 + $0xb0] sm:$0xf] %vm2254, %v2042
      %2300 = vst.msk [vmem:[%s145 + $0xb4] sm:$0xf] %vm2254, %v2043
      %2301 = vst.msk [vmem:[%s145 + $0xb8] sm:$0xf] %vm2254, %v2044
      %2302 = vst.msk [vmem:[%s145 + $0xbc] sm:$0xf] %vm2254, %v2045
      %2303 = vst.msk [vmem:[%s145 + $0xc0] sm:$0xf] %vm2254, %v2046
      %2304 = vst.msk [vmem:[%s145 + $0xc4] sm:$0xf] %vm2254, %v2047
      %2305 = vst.msk [vmem:[%s145 + $0xc8] sm:$0xf] %vm2254, %v2048
      %2306 = vst.msk [vmem:[%s145 + $0xcc] sm:$0xf] %vm2254, %v2049
      %2307 = vst.msk [vmem:[%s145 + $0xd0] sm:$0xf] %vm2254, %v2050
      %2308 = vst.msk [vmem:[%s145 + $0xd4] sm:$0xf] %vm2254, %v2051
      %2309 = vst.msk [vmem:[%s145 + $0xd8] sm:$0xf] %vm2254, %v2052
      %2310 = vst.msk [vmem:[%s145 + $0xdc] sm:$0xf] %vm2254, %v2053
      %2311 = vst.msk [vmem:[%s145 + $0xe0] sm:$0xf] %vm2254, %v2054
      %2312 = vst.msk [vmem:[%s145 + $0xe4] sm:$0xf] %vm2254, %v2055
      %2313 = vst.msk [vmem:[%s145 + $0xe8] sm:$0xf] %vm2254, %v2056
      %2314 = vst.msk [vmem:[%s145 + $0xec] sm:$0xf] %vm2254, %v2057
      %2315 = vst.msk [vmem:[%s145 + $0xf0] sm:$0xf] %vm2254, %v2058
      %2316 = vst.msk [vmem:[%s145 + $0xf4] sm:$0xf] %vm2254, %v2059
      %2317 = vst.msk [vmem:[%s145 + $0xf8] sm:$0xf] %vm2254, %v2060
      %2318 = vst.msk [vmem:[%s145 + $0xfc] sm:$0xf] %vm2254, %v2061
      %2319 = vst.msk [vmem:[%s145 + $0x100] sm:$0xf] %vm2254, %v2062
      %2320 = vst.msk [vmem:[%s145 + $0x104] sm:$0xf] %vm2254, %v2063
      %2321 = vst.msk [vmem:[%s145 + $0x108] sm:$0xf] %vm2254, %v2064
      %2322 = vst.msk [vmem:[%s145 + $0x10c] sm:$0xf] %vm2254, %v2065
      %2323 = vst.msk [vmem:[%s145 + $0x110] sm:$0xf] %vm2254, %v2066
      %2324 = vst.msk [vmem:[%s145 + $0x114] sm:$0xf] %vm2254, %v2067
      %2325 = vst.msk [vmem:[%s145 + $0x118] sm:$0xf] %vm2254, %v2068
      %2326 = vst.msk [vmem:[%s145 + $0x11c] sm:$0xf] %vm2254, %v2069
      %2327 = vst.msk [vmem:[%s145 + $0x120] sm:$0xf] %vm2254, %v2070
      %2328 = vst.msk [vmem:[%s145 + $0x124] sm:$0xf] %vm2254, %v2071
      %2329 = vst.msk [vmem:[%s145 + $0x128] sm:$0xf] %vm2254, %v2072
      %2330 = vst.msk [vmem:[%s145 + $0x12c] sm:$0xf] %vm2254, %v2073
      %2331 = vst.msk [vmem:[%s145 + $0x130] sm:$0xf] %vm2254, %v2074
      %2332 = vst.msk [vmem:[%s145 + $0x134] sm:$0xf] %vm2254, %v2075
      %2333 = vst.msk [vmem:[%s145 + $0x138] sm:$0xf] %vm2254, %v2076
      %2334 = vst.msk [vmem:[%s145 + $0x13c] sm:$0xf] %vm2254, %v2077
      %2335 = vst.msk [vmem:[%s145 + $0x140] sm:$0xf] %vm2254, %v2078
      %2336 = vst.msk [vmem:[%s145 + $0x144] sm:$0xf] %vm2254, %v2079
      %2337 = vst.msk [vmem:[%s145 + $0x148] sm:$0xf] %vm2254, %v2080
      %2338 = vst.msk [vmem:[%s145 + $0x14c] sm:$0xf] %vm2254, %v2081
      %2339 = vst.msk [vmem:[%s145 + $0x150] sm:$0xf] %vm2254, %v2082
      %2340 = vst.msk [vmem:[%s145 + $0x154] sm:$0xf] %vm2254, %v2083
      %2341 = vst.msk [vmem:[%s145 + $0x158] sm:$0xf] %vm2254, %v2084
      %2342 = vst.msk [vmem:[%s145 + $0x15c] sm:$0xf] %vm2254, %v2085
      %2343 = vst.msk [vmem:[%s145 + $0x160] sm:$0xf] %vm2254, %v2086
      %2344 = vst.msk [vmem:[%s145 + $0x164] sm:$0xf] %vm2254, %v2087
      %2345 = vst.msk [vmem:[%s145 + $0x168] sm:$0xf] %vm2254, %v2088
      %2346 = vst.msk [vmem:[%s145 + $0x16c] sm:$0xf] %vm2254, %v2089
      %2347 = vst.msk [vmem:[%s145 + $0x170] sm:$0xf] %vm2254, %v2090
      %2348 = vst.msk [vmem:[%s145 + $0x174] sm:$0xf] %vm2254, %v2091
      %2349 = vst.msk [vmem:[%s145 + $0x178] sm:$0xf] %vm2254, %v2092
      %2350 = vst.msk [vmem:[%s145 + $0x17c] sm:$0xf] %vm2254, %v2093
      %2351 = vst.msk [vmem:[%s145 + $0x180] sm:$0xf] %vm2254, %v2094
      %2352 = vst.msk [vmem:[%s145 + $0x184] sm:$0xf] %vm2254, %v2095
      %2353 = vst.msk [vmem:[%s145 + $0x188] sm:$0xf] %vm2254, %v2096
      %2354 = vst.msk [vmem:[%s145 + $0x18c] sm:$0xf] %vm2254, %v2097
      %2355 = vst.msk [vmem:[%s145 + $0x190] sm:$0xf] %vm2254, %v2098
      %2356 = vst.msk [vmem:[%s145 + $0x194] sm:$0xf] %vm2254, %v2099
      %2357 = vst.msk [vmem:[%s145 + $0x198] sm:$0xf] %vm2254, %v2100
      %2358 = vst.msk [vmem:[%s145 + $0x19c] sm:$0xf] %vm2254, %v2101
      %2359 = vst.msk [vmem:[%s145 + $0x1a0] sm:$0xf] %vm2254, %v2102
      %2360 = vst.msk [vmem:[%s145 + $0x1a4] sm:$0xf] %vm2254, %v2103
      %2361 = vst.msk [vmem:[%s145 + $0x1a8] sm:$0xf] %vm2254, %v2104
      %2362 = vst.msk [vmem:[%s145 + $0x1ac] sm:$0xf] %vm2254, %v2105
      %2363 = vst.msk [vmem:[%s145 + $0x1b0] sm:$0xf] %vm2254, %v2106
      %2364 = vst.msk [vmem:[%s145 + $0x1b4] sm:$0xf] %vm2254, %v2107
      %2365 = vst.msk [vmem:[%s145 + $0x1b8] sm:$0xf] %vm2254, %v2108
      %2366 = vst.msk [vmem:[%s145 + $0x1bc] sm:$0xf] %vm2254, %v2109
      %2367 = vst.msk [vmem:[%s145 + $0x1c0] sm:$0xf] %vm2254, %v2110
      %2368 = vst.msk [vmem:[%s145 + $0x1c4] sm:$0xf] %vm2254, %v2111
      %2369 = vst.msk [vmem:[%s145 + $0x1c8] sm:$0xf] %vm2254, %v2112
      %2370 = vst.msk [vmem:[%s145 + $0x1cc] sm:$0xf] %vm2254, %v2113
      %2371 = vst.msk [vmem:[%s145 + $0x1d0] sm:$0xf] %vm2254, %v2114
      %2372 = vst.msk [vmem:[%s145 + $0x1d4] sm:$0xf] %vm2254, %v2115
      %2373 = vst.msk [vmem:[%s145 + $0x1d8] sm:$0xf] %vm2254, %v2116
      %2374 = vst.msk [vmem:[%s145 + $0x1dc] sm:$0xf] %vm2254, %v2117
      %2375 = vst.msk [vmem:[%s145 + $0x1e0] sm:$0xf] %vm2254, %v2118
      %2376 = vst.msk [vmem:[%s145 + $0x1e4] sm:$0xf] %vm2254, %v2119
      %2377 = vst.msk [vmem:[%s145 + $0x1e8] sm:$0xf] %vm2254, %v2120
      %2378 = vst.msk [vmem:[%s145 + $0x1ec] sm:$0xf] %vm2254, %v2121
      %2379 = vst.msk [vmem:[%s145 + $0x1f0] sm:$0xf] %vm2254, %v2122
      %2380 = vst.msk [vmem:[%s145 + $0x1f4] sm:$0xf] %vm2254, %v2123
      %2381 = vst.msk [vmem:[%s145 + $0x1f8] sm:$0xf] %vm2254, %v2124
      %2382 = vst.msk [vmem:[%s145 + $0x1fc] sm:$0xf] %vm2254, %v2125
      %s2383 = smul.u32 128, %s13
      %p2384 = scmp.lt.s32.totalorder %s2383, 255
      %s2385 = scalar_select %p2384, %s2383, 255
      %s2386 = smul.addr %s2385, 4
      %s2387 = scalar_lea.vmem %s2, %s2386
      // Predicated region
      $region29: #{discriminator_forward.7} parent=27 // pred_check
        %p2388 = pneg %p78
      $region30: #{discriminator_forward.7} parent=27 // pred_check_branch
        %2390 = sbr.rel (%p2388) target = $region32
      $region31: #{discriminator_forward.7} parent=27 // pred_region
        %s2391 = smul.u32 128, %s13
      $region32: #{discriminator_forward.7} parent=27 // pred_fallthru
        _
    $region28: #{discriminator_forward.7} parent=5 // pred_fallthru
      _
    %p2392 = scmp.le.s32.totalorder 2, %s8
    // Predicated region
    $region33: #{discriminator_forward.7} parent=5 // pred_check
      %p2393 = pneg %p2392
    $region34: #{discriminator_forward.7} parent=5 // pred_check_branch
      %2395 = sbr.rel (%p2393) target = $region36
    $region35: #{discriminator_forward.7} parent=5 // pred_region
      %s2396 = ssub.s32 %s8, 2
      // Predicated region
      $region37: #{discriminator_forward.7} parent=35 // pred_check
        %p2397 = pneg %p84
      $region38: #{discriminator_forward.7} parent=35 // pred_check_branch
        %2399 = sbr.rel (%p2397) target = $region40
      $region39: #{discriminator_forward.7} parent=35 // pred_region
        %s2400 = smul.u32 128, %s14
        %p2401 = scmp.lt.s32.totalorder %s2400, 255
        %s2402 = scalar_select %p2401, %s2400, 255
        %s2403 = smul.addr %s2402, 4
        %s2404 = scalar_lea.vmem %s2, %s2403
      $region40: #{discriminator_forward.7} parent=35 // pred_fallthru
        _
    $region36: #{discriminator_forward.7} parent=5 // pred_fallthru
      _
  $region6: #{discriminator_forward.7} parent=0 // loop_footer
    %s12 = sadd.s32 1, %s8
  $region7: #{discriminator_forward.7} parent=0 // loop_footer_branch
    %7 = sbr.rel target = $region3
  $region8: #{discriminator_forward.7} parent=0 // loop_exit
    _

// kernel: discriminator_forward.8
$region0: #{discriminator_forward.8}
  #allocation0 [shape = 'u32[]', space=smem, size = 0x4, offset = 0x4, fixed_abs, tag = 'smem constant byte address 0x4 - core index']
  #allocation1 [shape = 'u32[144,128]{1,0:T(1,128)}', space=vmem, size = 0x12000, scoped, tag = 'internal scratch']
  %s0 = inlined_call_operand.vmem [shape: bf16[512,128], index: 0, kind: input, shape index: {}]
  %s1 = inlined_call_operand.vmem [shape: bf16[128,16], index: 1, kind: input, shape index: {}]
  %s2 = inlined_call_operand.vmem [shape: bf16[512,16], index: 2, kind: output, shape index: {0}]
  %s3 = inlined_call_operand.vmem [shape: f32[2,2,16], index: 3, kind: output, shape index: {1}]
  %4 = xla_tuple %s2, %s3
  %s5 = sld [smem:[#allocation0]]
  $region49: #{discriminator_forward.8} parent=0
    _
  %s7 = ssub.s32 1, %s5
  %s8 = scalar_select 0, %s7, %s5
  loop: start=0, step=1, limit=4
  $region2: #{discriminator_forward.8} parent=0 // loop_pre_header
    _
  $region3: #{discriminator_forward.8} parent=0 // loop_header
    %s10 = sphi 0, %s14
    %p11 = scmp.ge.s32.totalorder %s10, 4
    %s20 = sphi 0, %s22
    %s23 = sphi 0, %s20
    %s24 = sphi 0, %s23
    %s40 = sphi 0, %s24
    %s44 = sphi 0, %s44
    %s46 = sphi 0, %s44
    %s47 = sphi 0, %s46
    %s61 = sphi 0, %s47
    %s67 = sphi 0, %s69
    %s70 = sphi 0, %s67
    %s71 = sphi 0, %s70
    %s87 = sphi 0, %s71
    %s93 = sphi 0, %s95
    %s96 = sphi 0, %s93
    %s97 = sphi 0, %s96
    %s113 = sphi 0, %s97
  $region4: #{discriminator_forward.8} parent=0 // loop_header_branch
    %13 = sbr.rel (%p11) target = $region8
  $region5: #{discriminator_forward.8} parent=0 // loop_body
    %s15 = ssub.s32 %s10, 1
    %s16 = ssub.s32 %s10, 2
    %s17 = sadd.s32 %s10, 1
    %s18 = ssub.s32 %s10, %s17
    %p19 = scmp.eq.s32.totalorder %s18, 0
    %s21 = sadd.s32 %s20, 1
    %s22 = scalar_select %p19, %s20, %s21
    %p25 = pneg %p19
    %p26 = scmp.eq.s32.totalorder %s10, 1
    %p27 = por %p25, %p26
    %p28 = scmp.ne.s32.totalorder %s20, %s23
    %p29 = scmp.eq.s32.totalorder %s10, 0
    %p30 = por %p28, %p29
    %p31 = scmp.ne.s32.totalorder %s20, %s23
    %p32 = scmp.eq.s32.totalorder %s15, 1
    %p33 = por %p31, %p32
    %p34 = scmp.ne.s32.totalorder %s23, %s24
    %p35 = scmp.eq.s32.totalorder %s15, 0
    %p36 = por %p34, %p35
    %p37 = scmp.ne.s32.totalorder %s23, %s24
    %p38 = scmp.eq.s32.totalorder %s16, 1
    %p39 = por %p37, %p38
    %p41 = scmp.ne.s32.totalorder %s24, %s40
    %p42 = scmp.eq.s32.totalorder %s16, 0
    %p43 = por %p41, %p42
    %s45 = sadd.s32 %s44, 1
    %p48 = scmp.eq.s32.totalorder %s10, 1
    %p49 = scmp.ne.s32.totalorder %s44, %s46
    %p50 = scmp.eq.s32.totalorder %s10, 0
    %p51 = por %p49, %p50
    %p52 = scmp.ne.s32.totalorder %s44, %s46
    %p53 = scmp.eq.s32.totalorder %s15, 1
    %p54 = por %p52, %p53
    %p55 = scmp.ne.s32.totalorder %s46, %s47
    %p56 = scmp.eq.s32.totalorder %s15, 0
    %p57 = por %p55, %p56
    %p58 = scmp.ne.s32.totalorder %s46, %s47
    %p59 = scmp.eq.s32.totalorder %s16, 1
    %p60 = por %p58, %p59
    %p62 = scmp.ne.s32.totalorder %s47, %s61
    %p63 = scmp.eq.s32.totalorder %s16, 0
    %p64 = por %p62, %p63
    %s65 = ssub.s32 %s10, %s17
    %p66 = scmp.eq.s32.totalorder %s65, 0
    %s68 = sadd.s32 %s67, 1
    %s69 = scalar_select %p66, %s67, %s68
    %p72 = pneg %p66
    %p73 = scmp.eq.s32.totalorder %s10, 1
    %p74 = por %p72, %p73
    %p75 = scmp.ne.s32.totalorder %s67, %s70
    %p76 = scmp.eq.s32.totalorder %s10, 0
    %p77 = por %p75, %p76
    %p78 = scmp.ne.s32.totalorder %s67, %s70
    %p79 = scmp.eq.s32.totalorder %s15, 1
    %p80 = por %p78, %p79
    %p81 = scmp.ne.s32.totalorder %s70, %s71
    %p82 = scmp.eq.s32.totalorder %s15, 0
    %p83 = por %p81, %p82
    %p84 = scmp.ne.s32.totalorder %s70, %s71
    %p85 = scmp.eq.s32.totalorder %s16, 1
    %p86 = por %p84, %p85
    %p88 = scmp.ne.s32.totalorder %s71, %s87
    %p89 = scmp.eq.s32.totalorder %s16, 0
    %p90 = por %p88, %p89
    %s91 = ssub.s32 %s10, %s17
    %p92 = scmp.eq.s32.totalorder %s91, 0
    %s94 = sadd.s32 %s93, 1
    %s95 = scalar_select %p92, %s93, %s94
    %p98 = pneg %p92
    %p99 = scmp.eq.s32.totalorder %s10, 1
    %p100 = por %p98, %p99
    %p101 = scmp.ne.s32.totalorder %s93, %s96
    %p102 = scmp.eq.s32.totalorder %s10, 0
    %p103 = por %p101, %p102
    %p104 = scmp.ne.s32.totalorder %s93, %s96
    %p105 = scmp.eq.s32.totalorder %s15, 1
    %p106 = por %p104, %p105
    %p107 = scmp.ne.s32.totalorder %s96, %s97
    %p108 = scmp.eq.s32.totalorder %s15, 0
    %p109 = por %p107, %p108
    %p110 = scmp.ne.s32.totalorder %s96, %s97
    %p111 = scmp.eq.s32.totalorder %s16, 1
    %p112 = por %p110, %p111
    %p114 = scmp.ne.s32.totalorder %s97, %s113
    %p115 = scmp.eq.s32.totalorder %s16, 0
    %p116 = por %p114, %p115
    %p117 = scmp.le.s32.totalorder 1, %s10
    %p118 = scmp.lt.s32.totalorder %s10, 3
    %p119 = pnand %p117, %p118
    %p120 = pneg %p119
    // Predicated region
    $region9: #{discriminator_forward.8} parent=5 // pred_check
      _
    $region10: #{discriminator_forward.8} parent=5 // pred_check_branch
      %122 = sbr.rel (%p119) target = $region12
    $region11: #{discriminator_forward.8} parent=5 // pred_region
      %s123 = ssub.s32 %s10, 1
      // Predicated region
      $region13: #{discriminator_forward.8} parent=11 // pred_check
        %p124 = pneg %p57
      $region14: #{discriminator_forward.8} parent=11 // pred_check_branch
        %126 = sbr.rel (%p124) target = $region16
      $region15: #{discriminator_forward.8} parent=11 // pred_region
        _
      $region16: #{discriminator_forward.8} parent=11 // pred_fallthru
        _
    $region12: #{discriminator_forward.8} parent=5 // pred_fallthru
      _
    %p127 = scmp.lt.s32.totalorder %s10, 2
    // Predicated region
    $region17: #{discriminator_forward.8} parent=5 // pred_check
      %p128 = pneg %p127
    $region18: #{discriminator_forward.8} parent=5 // pred_check_branch
      %130 = sbr.rel (%p128) target = $region20
    $region19: #{discriminator_forward.8} parent=5 // pred_region
      // Predicated region
      $region21: #{discriminator_forward.8} parent=19 // pred_check
        %p131 = pneg %p30
      $region22: #{discriminator_forward.8} parent=19 // pred_check_branch
        %133 = sbr.rel (%p131) target = $region24
      $region23: #{discriminator_forward.8} parent=19 // pred_region
        %s134 = smul.u32 32, %s10
        %p135 = scmp.lt.s32.totalorder %s134, 63
        %s136 = scalar_select %p135, %s134, 63
        %s137 = smul.addr %s136, 4
        %s138 = scalar_lea.vmem %s0, %s137
        %s139 = smul.u32 32, %s10
      $region24: #{discriminator_forward.8} parent=19 // pred_fallthru
        _
    $region20: #{discriminator_forward.8} parent=5 // pred_fallthru
      _
    %p140 = scmp.le.s32.totalorder 1, %s10
    %p141 = scmp.lt.s32.totalorder %s10, 3
    %p142 = pnand %p140, %p141
    %p143 = pneg %p142
    // Predicated region
    $region25: #{discriminator_forward.8} parent=5 // pred_check
      _
    $region26: #{discriminator_forward.8} parent=5 // pred_check_branch
      %145 = sbr.rel (%p142) target = $region28
    $region27: #{discriminator_forward.8} parent=5 // pred_region
      %s146 = ssub.s32 %s10, 1
      %s147 = smul.u32 32, %s15
      %p148 = scmp.lt.s32.totalorder %s147, 63
      %s149 = scalar_select %p148, %s147, 63
      %s150 = smul.addr %s149, 4
      %s151 = scalar_lea.vmem %s0, %s150
      %p152 = pneg %p36
      %p153 = pneg %p33
      %p154 = pneg %p57
      %p155 = pneg %p54
      %p156 = pneg %p83
      %p157 = pneg %p80
      %s158 = smul.u32 32, %s15
      %p159 = scmp.lt.s32.totalorder %s158, 63
      %s160 = scalar_select %p159, %s158, 63
      %s161 = smul.addr %s160, 4
      %s162 = scalar_lea.vmem %s2, %s161
      %p163 = pneg %p109
      %p164 = pneg %p106
      %p165 = scmp.lt.s32.totalorder %s15, 1
      %s166 = scalar_select %p165, %s15, 1
      %s167 = smul.addr %s166, 2
      %s168 = scalar_lea.vmem %s3, %s167
      %s169 = smul.u32 32, %s15
      %p170 = scmp.lt.s32.totalorder %s169, 63
      %s171 = scalar_select %p170, %s169, 63
      %s172 = smul.addr %s171, 4
      %s173 = scalar_lea.vmem %s0, %s172
      %s174 = smul.u32 32, %s15
      %s175 = smul.u32 32, %s15
      %p176 = scmp.lt.s32.totalorder %s175, 63
      %s177 = scalar_select %p176, %s175, 63
      %s178 = smul.addr %s177, 4
      %s179 = scalar_lea.vmem %s2, %s178
      %s180 = smul.u32 32, %s15
      %p181 = scmp.lt.s32.totalorder %s15, 1
      %s182 = scalar_select %p181, %s15, 1
      %s183 = smul.addr %s182, 2
      %s184 = scalar_lea.vmem %s3, %s183
      %v186 = vld [vmem:[%s173] sm:$0xf]
      %v187 = vld [vmem:[%s173 + $0x4] sm:$0xf]
      %v188 = vld [vmem:[%s173 + $0x8] sm:$0xf]
      %v189 = vld [vmem:[%s173 + $0xc] sm:$0xf]
      %v190 = vld [vmem:[%s173 + $0x10] sm:$0xf]
      %v191 = vld [vmem:[%s173 + $0x14] sm:$0xf]
      %v192 = vld [vmem:[%s173 + $0x18] sm:$0xf]
      %v193 = vld [vmem:[%s173 + $0x1c] sm:$0xf]
      %v194 = vld [vmem:[%s173 + $0x20] sm:$0xf]
      %v195 = vld [vmem:[%s173 + $0x24] sm:$0xf]
      %v196 = vld [vmem:[%s173 + $0x28] sm:$0xf]
      %v197 = vld [vmem:[%s173 + $0x2c] sm:$0xf]
      %v198 = vld [vmem:[%s173 + $0x30] sm:$0xf]
      %v199 = vld [vmem:[%s173 + $0x34] sm:$0xf]
      %v200 = vld [vmem:[%s173 + $0x38] sm:$0xf]
      %v201 = vld [vmem:[%s173 + $0x3c] sm:$0xf]
      %v202 = vld [vmem:[%s173 + $0x40] sm:$0xf]
      %v203 = vld [vmem:[%s173 + $0x44] sm:$0xf]
      %v204 = vld [vmem:[%s173 + $0x48] sm:$0xf]
      %v205 = vld [vmem:[%s173 + $0x4c] sm:$0xf]
      %v206 = vld [vmem:[%s173 + $0x50] sm:$0xf]
      %v207 = vld [vmem:[%s173 + $0x54] sm:$0xf]
      %v208 = vld [vmem:[%s173 + $0x58] sm:$0xf]
      %v209 = vld [vmem:[%s173 + $0x5c] sm:$0xf]
      %v210 = vld [vmem:[%s173 + $0x60] sm:$0xf]
      %v211 = vld [vmem:[%s173 + $0x64] sm:$0xf]
      %v212 = vld [vmem:[%s173 + $0x68] sm:$0xf]
      %v213 = vld [vmem:[%s173 + $0x6c] sm:$0xf]
      %v214 = vld [vmem:[%s173 + $0x70] sm:$0xf]
      %v215 = vld [vmem:[%s173 + $0x74] sm:$0xf]
      %v216 = vld [vmem:[%s173 + $0x78] sm:$0xf]
      %v217 = vld [vmem:[%s173 + $0x7c] sm:$0xf]
      %v218 = vld [vmem:[%s1] sm:$0xf]
      %v219 = vld [vmem:[%s1 + $0x4] sm:$0xf]
      %v220 = vld [vmem:[%s1 + $0x8] sm:$0xf]
      %v221 = vld [vmem:[%s1 + $0xc] sm:$0xf]
      %v222 = vld [vmem:[%s1 + $0x10] sm:$0xf]
      %v223 = vld [vmem:[%s1 + $0x14] sm:$0xf]
      %v224 = vld [vmem:[%s1 + $0x18] sm:$0xf]
      %v225 = vld [vmem:[%s1 + $0x1c] sm:$0xf]
      %v226 = vld [vmem:[%s1 + $0x20] sm:$0xf]
      %v227 = vld [vmem:[%s1 + $0x24] sm:$0xf]
      %v228 = vld [vmem:[%s1 + $0x28] sm:$0xf]
      %v229 = vld [vmem:[%s1 + $0x2c] sm:$0xf]
      %v230 = vld [vmem:[%s1 + $0x30] sm:$0xf]
      %v231 = vld [vmem:[%s1 + $0x34] sm:$0xf]
      %v232 = vld [vmem:[%s1 + $0x38] sm:$0xf]
      %v233 = vld [vmem:[%s1 + $0x3c] sm:$0xf]
      %v266 = vunpack.c.l.b16 %v186
      %v267 = vunpack.c.l.b16 %v187
      %v268 = vunpack.c.l.b16 %v188
      %v269 = vunpack.c.l.b16 %v189
      %v270 = vunpack.c.l.b16 %v190
      %v271 = vunpack.c.l.b16 %v191
      %v272 = vunpack.c.l.b16 %v192
      %v273 = vunpack.c.l.b16 %v193
      %v274 = vunpack.c.l.b16 %v194
      %v275 = vunpack.c.l.b16 %v195
      %v276 = vunpack.c.l.b16 %v196
      %v277 = vunpack.c.l.b16 %v197
      %v278 = vunpack.c.l.b16 %v198
      %v279 = vunpack.c.l.b16 %v199
      %v280 = vunpack.c.l.b16 %v200
      %v281 = vunpack.c.l.b16 %v201
      %v282 = vunpack.c.l.b16 %v202
      %v283 = vunpack.c.l.b16 %v203
      %v284 = vunpack.c.l.b16 %v204
      %v285 = vunpack.c.l.b16 %v205
      %v286 = vunpack.c.l.b16 %v206
      %v287 = vunpack.c.l.b16 %v207
      %v288 = vunpack.c.l.b16 %v208
      %v289 = vunpack.c.l.b16 %v209
      %v290 = vunpack.c.l.b16 %v210
      %v291 = vunpack.c.l.b16 %v211
      %v292 = vunpack.c.l.b16 %v212
      %v293 = vunpack.c.l.b16 %v213
      %v294 = vunpack.c.l.b16 %v214
      %v295 = vunpack.c.l.b16 %v215
      %v296 = vunpack.c.l.b16 %v216
      %v297 = vunpack.c.l.b16 %v217
      %v298 = vpack.c.b16 %v267, %v266
      %v299 = vpack.c.b16 %v269, %v268
      %v300 = vpack.c.b16 %v271, %v270
      %v301 = vpack.c.b16 %v273, %v272
      %v302 = vpack.c.b16 %v275, %v274
      %v303 = vpack.c.b16 %v277, %v276
      %v304 = vpack.c.b16 %v279, %v278
      %v305 = vpack.c.b16 %v281, %v280
      %v306 = vpack.c.b16 %v283, %v282
      %v307 = vpack.c.b16 %v285, %v284
      %v308 = vpack.c.b16 %v287, %v286
      %v309 = vpack.c.b16 %v289, %v288
      %v310 = vpack.c.b16 %v291, %v290
      %v311 = vpack.c.b16 %v293, %v292
      %v312 = vpack.c.b16 %v295, %v294
      %v313 = vpack.c.b16 %v297, %v296
      %v346 = vunpack.c.l.b16 %v218
      %v347 = vunpack.c.l.b16 %v219
      %v348 = vunpack.c.l.b16 %v220
      %v349 = vunpack.c.l.b16 %v221
      %v350 = vunpack.c.l.b16 %v222
      %v351 = vunpack.c.l.b16 %v223
      %v352 = vunpack.c.l.b16 %v224
      %v353 = vunpack.c.l.b16 %v225
      %v354 = vunpack.c.l.b16 %v226
      %v355 = vunpack.c.l.b16 %v227
      %v356 = vunpack.c.l.b16 %v228
      %v357 = vunpack.c.l.b16 %v229
      %v358 = vunpack.c.l.b16 %v230
      %v359 = vunpack.c.l.b16 %v231
      %v360 = vunpack.c.l.b16 %v232
      %v361 = vunpack.c.l.b16 %v233
      %v362 = vpack.c.b16 %v347, %v346
      %v363 = vpack.c.b16 %v349, %v348
      %v364 = vpack.c.b16 %v351, %v350
      %v365 = vpack.c.b16 %v353, %v352
      %v366 = vpack.c.b16 %v355, %v354
      %v367 = vpack.c.b16 %v357, %v356
      %v368 = vpack.c.b16 %v359, %v358
      %v369 = vpack.c.b16 %v361, %v360
      %378 = vmatprep.subr.bf16.mxu0 0
      %379 = vmatpush1.bf16.msra.mxu0 %v369
      %380 = vmatprep.subr.bf16.mxu0 0
      %381 = vmatpush1.bf16.msra.mxu0 %v368
      %382 = vmatprep.subr.bf16.mxu0 0
      %383 = vmatpush1.bf16.msra.mxu0 %v367
      %384 = vmatprep.subr.bf16.mxu0 0
      %385 = vmatpush1.bf16.msra.mxu0 %v366
      %386 = vmatprep.subr.bf16.mxu0 0
      %387 = vmatpush1.bf16.msra.mxu0 %v365
      %388 = vmatprep.subr.bf16.mxu0 0
      %389 = vmatpush1.bf16.msra.mxu0 %v364
      %390 = vmatprep.subr.bf16.mxu0 0
      %391 = vmatpush1.bf16.msra.mxu0 %v363
      %392 = vmatprep.subr.bf16.mxu0 0
      %393 = vmatpush1.bf16.msra.mxu0 %v362
      %394 = vmatprep.subr.bf16.mxu0 0
      %395 = vmatpush2.bf16.msra.mxu0 0
      %396 = vmatprep.subr.bf16.mxu0 0
      %397 = vmatpush2.bf16.msra.mxu0 0
      %398 = vmatprep.subr.bf16.mxu0 0
      %399 = vmatpush2.bf16.msra.mxu0 0
      %400 = vmatprep.subr.bf16.mxu0 0
      %401 = vmatpush2.bf16.msra.mxu0 0
      %402 = vmatprep.subr.bf16.mxu0 0
      %403 = vmatpush2.bf16.msra.mxu0 0
      %404 = vmatprep.subr.bf16.mxu0 0
      %405 = vmatpush2.bf16.msra.mxu0 0
      %406 = vmatprep.subr.bf16.mxu0 0
      %407 = vmatpush2.bf16.msra.mxu0 0
      %408 = vmatprep.subr.bf16.mxu0 0
      %409 = vmatpush2.bf16.msra.mxu0 0
      %410 = vmatprep.mubr.bf16.mxu0 0
      %411 = vmatmul.mubr.bf16.gmra.mxu0 %v298
      %v412 = vpop.f32.mrf.mxu0
      %v413 = vadd.f32 0.0, %v412
      %v414 = vpop.f32.mrf.mxu0
      %v415 = vpop.f32.mrf.mxu0
      %v416 = vadd.f32 0.0, %v415
      %v417 = vpop.f32.mrf.mxu0
      %418 = vmatprep.mubr.bf16.mxu0 0
      %419 = vmatmul.mubr.bf16.gmra.mxu0 %v299
      %v420 = vpop.f32.mrf.mxu0
      %v421 = vadd.f32 0.0, %v420
      %v422 = vpop.f32.mrf.mxu0
      %v423 = vpop.f32.mrf.mxu0
      %v424 = vadd.f32 0.0, %v423
      %v425 = vpop.f32.mrf.mxu0
      %426 = vmatprep.mubr.bf16.mxu0 0
      %427 = vmatmul.mubr.bf16.gmra.mxu0 %v300
      %v428 = vpop.f32.mrf.mxu0
      %v429 = vadd.f32 0.0, %v428
      %v430 = vpop.f32.mrf.mxu0
      %v431 = vpop.f32.mrf.mxu0
      %v432 = vadd.f32 0.0, %v431
      %v433 = vpop.f32.mrf.mxu0
      %434 = vmatprep.mubr.bf16.mxu0 0
      %435 = vmatmul.mubr.bf16.gmra.mxu0 %v301
      %v436 = vpop.f32.mrf.mxu0
      %v437 = vadd.f32 0.0, %v436
      %v438 = vpop.f32.mrf.mxu0
      %v439 = vpop.f32.mrf.mxu0
      %v440 = vadd.f32 0.0, %v439
      %v441 = vpop.f32.mrf.mxu0
      %442 = vmatprep.mubr.bf16.mxu0 0
      %443 = vmatmul.mubr.bf16.gmra.mxu0 %v302
      %v444 = vpop.f32.mrf.mxu0
      %v445 = vadd.f32 0.0, %v444
      %v446 = vpop.f32.mrf.mxu0
      %v447 = vpop.f32.mrf.mxu0
      %v448 = vadd.f32 0.0, %v447
      %v449 = vpop.f32.mrf.mxu0
      %450 = vmatprep.mubr.bf16.mxu0 0
      %451 = vmatmul.mubr.bf16.gmra.mxu0 %v303
      %v452 = vpop.f32.mrf.mxu0
      %v453 = vadd.f32 0.0, %v452
      %v454 = vpop.f32.mrf.mxu0
      %v455 = vpop.f32.mrf.mxu0
      %v456 = vadd.f32 0.0, %v455
      %v457 = vpop.f32.mrf.mxu0
      %458 = vmatprep.mubr.bf16.mxu0 0
      %459 = vmatmul.mubr.bf16.gmra.mxu0 %v304
      %v460 = vpop.f32.mrf.mxu0
      %v461 = vadd.f32 0.0, %v460
      %v462 = vpop.f32.mrf.mxu0
      %v463 = vpop.f32.mrf.mxu0
      %v464 = vadd.f32 0.0, %v463
      %v465 = vpop.f32.mrf.mxu0
      %466 = vmatprep.mubr.bf16.mxu0 0
      %467 = vmatmul.mubr.bf16.gmra.mxu0 %v305
      %v468 = vpop.f32.mrf.mxu0
      %v469 = vadd.f32 0.0, %v468
      %v470 = vpop.f32.mrf.mxu0
      %v471 = vpop.f32.mrf.mxu0
      %v472 = vadd.f32 0.0, %v471
      %v473 = vpop.f32.mrf.mxu0
      %474 = vmatprep.mubr.bf16.mxu0 0
      %475 = vmatmul.mubr.bf16.gmra.mxu0 %v306
      %v476 = vpop.f32.mrf.mxu0
      %v477 = vadd.f32 0.0, %v476
      %v478 = vpop.f32.mrf.mxu0
      %v479 = vpop.f32.mrf.mxu0
      %v480 = vadd.f32 0.0, %v479
      %v481 = vpop.f32.mrf.mxu0
      %482 = vmatprep.mubr.bf16.mxu0 0
      %483 = vmatmul.mubr.bf16.gmra.mxu0 %v307
      %v484 = vpop.f32.mrf.mxu0
      %v485 = vadd.f32 0.0, %v484
      %v486 = vpop.f32.mrf.mxu0
      %v487 = vpop.f32.mrf.mxu0
      %v488 = vadd.f32 0.0, %v487
      %v489 = vpop.f32.mrf.mxu0
      %490 = vmatprep.mubr.bf16.mxu0 0
      %491 = vmatmul.mubr.bf16.gmra.mxu0 %v308
      %v492 = vpop.f32.mrf.mxu0
      %v493 = vadd.f32 0.0, %v492
      %v494 = vpop.f32.mrf.mxu0
      %v495 = vpop.f32.mrf.mxu0
      %v496 = vadd.f32 0.0, %v495
      %v497 = vpop.f32.mrf.mxu0
      %498 = vmatprep.mubr.bf16.mxu0 0
      %499 = vmatmul.mubr.bf16.gmra.mxu0 %v309
      %v500 = vpop.f32.mrf.mxu0
      %v501 = vadd.f32 0.0, %v500
      %v502 = vpop.f32.mrf.mxu0
      %v503 = vpop.f32.mrf.mxu0
      %v504 = vadd.f32 0.0, %v503
      %v505 = vpop.f32.mrf.mxu0
      %506 = vmatprep.mubr.bf16.mxu0 0
      %507 = vmatmul.mubr.bf16.gmra.mxu0 %v310
      %v508 = vpop.f32.mrf.mxu0
      %v509 = vadd.f32 0.0, %v508
      %v510 = vpop.f32.mrf.mxu0
      %v511 = vpop.f32.mrf.mxu0
      %v512 = vadd.f32 0.0, %v511
      %v513 = vpop.f32.mrf.mxu0
      %514 = vmatprep.mubr.bf16.mxu0 0
      %515 = vmatmul.mubr.bf16.gmra.mxu0 %v311
      %v516 = vpop.f32.mrf.mxu0
      %v517 = vadd.f32 0.0, %v516
      %v518 = vpop.f32.mrf.mxu0
      %v519 = vpop.f32.mrf.mxu0
      %v520 = vadd.f32 0.0, %v519
      %v521 = vpop.f32.mrf.mxu0
      %522 = vmatprep.mubr.bf16.mxu0 0
      %523 = vmatmul.mubr.bf16.gmra.mxu0 %v312
      %v524 = vpop.f32.mrf.mxu0
      %v525 = vadd.f32 0.0, %v524
      %v526 = vpop.f32.mrf.mxu0
      %v527 = vpop.f32.mrf.mxu0
      %v528 = vadd.f32 0.0, %v527
      %v529 = vpop.f32.mrf.mxu0
      %530 = vmatprep.mubr.bf16.mxu0 0
      %531 = vmatmul.mubr.bf16.gmra.mxu0 %v313
      %v532 = vpop.f32.mrf.mxu0
      %v533 = vadd.f32 0.0, %v532
      %v534 = vpop.f32.mrf.mxu0
      %v535 = vpop.f32.mrf.mxu0
      %v536 = vadd.f32 0.0, %v535
      %v537 = vpop.f32.mrf.mxu0
      %538 = vdwg.mxu0
      %vm539 = vcmask 130048
      %v540 = vsel %vm539, %v413, 0.0
      %v541 = vsel %vm539, %v416, 0.0
      %v542 = vadd.f32 %v540, %v541
      %v543 = vsel %vm539, %v421, 0.0
      %v544 = vadd.f32 %v542, %v543
      %v545 = vsel %vm539, %v424, 0.0
      %v546 = vadd.f32 %v544, %v545
      %v547 = vsel %vm539, %v429, 0.0
      %v548 = vadd.f32 %v546, %v547
      %v549 = vsel %vm539, %v432, 0.0
      %v550 = vadd.f32 %v548, %v549
      %v551 = vsel %vm539, %v437, 0.0
      %v552 = vadd.f32 %v550, %v551
      %v553 = vsel %vm539, %v440, 0.0
      %v554 = vadd.f32 %v552, %v553
      %v555 = vsel %vm539, %v445, 0.0
      %v556 = vadd.f32 %v554, %v555
      %v557 = vsel %vm539, %v448, 0.0
      %v558 = vadd.f32 %v556, %v557
      %v559 = vsel %vm539, %v453, 0.0
      %v560 = vadd.f32 %v558, %v559
      %v561 = vsel %vm539, %v456, 0.0
      %v562 = vadd.f32 %v560, %v561
      %v563 = vsel %vm539, %v461, 0.0
      %v564 = vadd.f32 %v562, %v563
      %v565 = vsel %vm539, %v464, 0.0
      %v566 = vadd.f32 %v564, %v565
      %v567 = vsel %vm539, %v469, 0.0
      %v568 = vadd.f32 %v566, %v567
      %v569 = vsel %vm539, %v472, 0.0
      %v570 = vadd.f32 %v568, %v569
      %v571 = vsel %vm539, %v477, 0.0
      %v572 = vadd.f32 %v570, %v571
      %v573 = vsel %vm539, %v480, 0.0
      %v574 = vadd.f32 %v572, %v573
      %v575 = vsel %vm539, %v485, 0.0
      %v576 = vadd.f32 %v574, %v575
      %v577 = vsel %vm539, %v488, 0.0
      %v578 = vadd.f32 %v576, %v577
      %v579 = vsel %vm539, %v493, 0.0
      %v580 = vadd.f32 %v578, %v579
      %v581 = vsel %vm539, %v496, 0.0
      %v582 = vadd.f32 %v580, %v581
      %v583 = vsel %vm539, %v501, 0.0
      %v584 = vadd.f32 %v582, %v583
      %v585 = vsel %vm539, %v504, 0.0
      %v586 = vadd.f32 %v584, %v585
      %v587 = vsel %vm539, %v509, 0.0
      %v588 = vadd.f32 %v586, %v587
      %v589 = vsel %vm539, %v512, 0.0
      %v590 = vadd.f32 %v588, %v589
      %v591 = vsel %vm539, %v517, 0.0
      %v592 = vadd.f32 %v590, %v591
      %v593 = vsel %vm539, %v520, 0.0
      %v594 = vadd.f32 %v592, %v593
      %v595 = vsel %vm539, %v525, 0.0
      %v596 = vadd.f32 %v594, %v595
      %v597 = vsel %vm539, %v528, 0.0
      %v598 = vadd.f32 %v596, %v597
      %v599 = vsel %vm539, %v533, 0.0
      %v600 = vadd.f32 %v598, %v599
      %v601 = vsel %vm539, %v536, 0.0
      %v602 = vadd.f32 %v600, %v601
      %v603 = vrot.slane %v602, 4
      %v604 = vadd.f32 %v602, %v603
      %v605 = vrot.slane %v604, 2
      %v606 = vadd.f32 %v604, %v605
      %v607 = vrot.slane %v606, 1
      %v608 = vadd.f32 %v606, %v607
      %v609 = vmul.f32 %v413, %v413
      %v610 = vmul.f32 %v416, %v416
      %v611 = vmul.f32 %v421, %v421
      %v612 = vmul.f32 %v424, %v424
      %v613 = vmul.f32 %v429, %v429
      %v614 = vmul.f32 %v432, %v432
      %v615 = vmul.f32 %v437, %v437
      %v616 = vmul.f32 %v440, %v440
      %v617 = vmul.f32 %v445, %v445
      %v618 = vmul.f32 %v448, %v448
      %v619 = vmul.f32 %v453, %v453
      %v620 = vmul.f32 %v456, %v456
      %v621 = vmul.f32 %v461, %v461
      %v622 = vmul.f32 %v464, %v464
      %v623 = vmul.f32 %v469, %v469
      %v624 = vmul.f32 %v472, %v472
      %v625 = vmul.f32 %v477, %v477
      %v626 = vmul.f32 %v480, %v480
      %v627 = vmul.f32 %v485, %v485
      %v628 = vmul.f32 %v488, %v488
      %v629 = vmul.f32 %v493, %v493
      %v630 = vmul.f32 %v496, %v496
      %v631 = vmul.f32 %v501, %v501
      %v632 = vmul.f32 %v504, %v504
      %v633 = vmul.f32 %v509, %v509
      %v634 = vmul.f32 %v512, %v512
      %v635 = vmul.f32 %v517, %v517
      %v636 = vmul.f32 %v520, %v520
      %v637 = vmul.f32 %v525, %v525
      %v638 = vmul.f32 %v528, %v528
      %v639 = vmul.f32 %v533, %v533
      %v640 = vmul.f32 %v536, %v536
      %v641 = vsel %vm539, %v609, 0.0
      %v642 = vsel %vm539, %v610, 0.0
      %v643 = vadd.f32 %v641, %v642
      %v644 = vsel %vm539, %v611, 0.0
      %v645 = vadd.f32 %v643, %v644
      %v646 = vsel %vm539, %v612, 0.0
      %v647 = vadd.f32 %v645, %v646
      %v648 = vsel %vm539, %v613, 0.0
      %v649 = vadd.f32 %v647, %v648
      %v650 = vsel %vm539, %v614, 0.0
      %v651 = vadd.f32 %v649, %v650
      %v652 = vsel %vm539, %v615, 0.0
      %v653 = vadd.f32 %v651, %v652
      %v654 = vsel %vm539, %v616, 0.0
      %v655 = vadd.f32 %v653, %v654
      %v656 = vsel %vm539, %v617, 0.0
      %v657 = vadd.f32 %v655, %v656
      %v658 = vsel %vm539, %v618, 0.0
      %v659 = vadd.f32 %v657, %v658
      %v660 = vsel %vm539, %v619, 0.0
      %v661 = vadd.f32 %v659, %v660
      %v662 = vsel %vm539, %v620, 0.0
      %v663 = vadd.f32 %v661, %v662
      %v664 = vsel %vm539, %v621, 0.0
      %v665 = vadd.f32 %v663, %v664
      %v666 = vsel %vm539, %v622, 0.0
      %v667 = vadd.f32 %v665, %v666
      %v668 = vsel %vm539, %v623, 0.0
      %v669 = vadd.f32 %v667, %v668
      %v670 = vsel %vm539, %v624, 0.0
      %v671 = vadd.f32 %v669, %v670
      %v672 = vsel %vm539, %v625, 0.0
      %v673 = vadd.f32 %v671, %v672
      %v674 = vsel %vm539, %v626, 0.0
      %v675 = vadd.f32 %v673, %v674
      %v676 = vsel %vm539, %v627, 0.0
      %v677 = vadd.f32 %v675, %v676
      %v678 = vsel %vm539, %v628, 0.0
      %v679 = vadd.f32 %v677, %v678
      %v680 = vsel %vm539, %v629, 0.0
      %v681 = vadd.f32 %v679, %v680
      %v682 = vsel %vm539, %v630, 0.0
      %v683 = vadd.f32 %v681, %v682
      %v684 = vsel %vm539, %v631, 0.0
      %v685 = vadd.f32 %v683, %v684
      %v686 = vsel %vm539, %v632, 0.0
      %v687 = vadd.f32 %v685, %v686
      %v688 = vsel %vm539, %v633, 0.0
      %v689 = vadd.f32 %v687, %v688
      %v690 = vsel %vm539, %v634, 0.0
      %v691 = vadd.f32 %v689, %v690
      %v692 = vsel %vm539, %v635, 0.0
      %v693 = vadd.f32 %v691, %v692
      %v694 = vsel %vm539, %v636, 0.0
      %v695 = vadd.f32 %v693, %v694
      %v696 = vsel %vm539, %v637, 0.0
      %v697 = vadd.f32 %v695, %v696
      %v698 = vsel %vm539, %v638, 0.0
      %v699 = vadd.f32 %v697, %v698
      %v700 = vsel %vm539, %v639, 0.0
      %v701 = vadd.f32 %v699, %v700
      %v702 = vsel %vm539, %v640, 0.0
      %v703 = vadd.f32 %v701, %v702
      %v704 = vrot.slane %v703, 4
      %v705 = vadd.f32 %v703, %v704
      %v706 = vrot.slane %v705, 2
      %v707 = vadd.f32 %v705, %v706
      %v708 = vrot.slane %v707, 1
      %v709 = vadd.f32 %v707, %v708
      %vm710 = vcmask 1040384
      %v711 = vsel %vm710, %v608, %v709
      %vm712 = vcmask 123904
      %713 = vst.msk [vmem:[%s184] sm:$0x3] %vm712, %v711
      %v714 = vpack.c.bf16 %v416, %v413
      %v715 = vpack.c.bf16 %v424, %v421
      %v716 = vpack.c.bf16 %v432, %v429
      %v717 = vpack.c.bf16 %v440, %v437
      %v718 = vpack.c.bf16 %v448, %v445
      %v719 = vpack.c.bf16 %v456, %v453
      %v720 = vpack.c.bf16 %v464, %v461
      %v721 = vpack.c.bf16 %v472, %v469
      %v722 = vpack.c.bf16 %v480, %v477
      %v723 = vpack.c.bf16 %v488, %v485
      %v724 = vpack.c.bf16 %v496, %v493
      %v725 = vpack.c.bf16 %v504, %v501
      %v726 = vpack.c.bf16 %v512, %v509
      %v727 = vpack.c.bf16 %v520, %v517
      %v728 = vpack.c.bf16 %v528, %v525
      %v729 = vpack.c.bf16 %v536, %v533
      %v746 = vunpack.c.l.b16 %v714
      %v747 = vunpack.c.h.b16 %v714
      %v748 = vunpack.c.l.b16 %v715
      %v749 = vunpack.c.h.b16 %v715
      %v750 = vunpack.c.l.b16 %v716
      %v751 = vunpack.c.h.b16 %v716
      %v752 = vunpack.c.l.b16 %v717
      %v753 = vunpack.c.h.b16 %v717
      %v754 = vunpack.c.l.b16 %v718
      %v755 = vunpack.c.h.b16 %v718
      %v756 = vunpack.c.l.b16 %v719
      %v757 = vunpack.c.h.b16 %v719
      %v758 = vunpack.c.l.b16 %v720
      %v759 = vunpack.c.h.b16 %v720
      %v760 = vunpack.c.l.b16 %v721
      %v761 = vunpack.c.h.b16 %v721
      %v762 = vunpack.c.l.b16 %v722
      %v763 = vunpack.c.h.b16 %v722
      %v764 = vunpack.c.l.b16 %v723
      %v765 = vunpack.c.h.b16 %v723
      %v766 = vunpack.c.l.b16 %v724
      %v767 = vunpack.c.h.b16 %v724
      %v768 = vunpack.c.l.b16 %v725
      %v769 = vunpack.c.h.b16 %v725
      %v770 = vunpack.c.l.b16 %v726
      %v771 = vunpack.c.h.b16 %v726
      %v772 = vunpack.c.l.b16 %v727
      %v773 = vunpack.c.h.b16 %v727
      %v774 = vunpack.c.l.b16 %v728
      %v775 = vunpack.c.h.b16 %v728
      %v776 = vunpack.c.l.b16 %v729
      %v777 = vunpack.c.h.b16 %v729
      %v778 = vpack.c.b16 %v746, %v746
      %v779 = vpack.c.b16 %v747, %v747
      %v780 = vpack.c.b16 %v748, %v748
      %v781 = vpack.c.b16 %v749, %v749
      %v782 = vpack.c.b16 %v750, %v750
      %v783 = vpack.c.b16 %v751, %v751
      %v784 = vpack.c.b16 %v752, %v752
      %v785 = vpack.c.b16 %v753, %v753
      %v786 = vpack.c.b16 %v754, %v754
      %v787 = vpack.c.b16 %v755, %v755
      %v788 = vpack.c.b16 %v756, %v756
      %v789 = vpack.c.b16 %v757, %v757
      %v790 = vpack.c.b16 %v758, %v758
      %v791 = vpack.c.b16 %v759, %v759
      %v792 = vpack.c.b16 %v760, %v760
      %v793 = vpack.c.b16 %v761, %v761
      %v794 = vpack.c.b16 %v762, %v762
      %v795 = vpack.c.b16 %v763, %v763
      %v796 = vpack.c.b16 %v764, %v764
      %v797 = vpack.c.b16 %v765, %v765
      %v798 = vpack.c.b16 %v766, %v766
      %v799 = vpack.c.b16 %v767, %v767
      %v800 = vpack.c.b16 %v768, %v768
      %v801 = vpack.c.b16 %v769, %v769
      %v802 = vpack.c.b16 %v770, %v770
      %v803 = vpack.c.b16 %v771, %v771
      %v804 = vpack.c.b16 %v772, %v772
      %v805 = vpack.c.b16 %v773, %v773
      %v806 = vpack.c.b16 %v774, %v774
      %v807 = vpack.c.b16 %v775, %v775
      %v808 = vpack.c.b16 %v776, %v776
      %v809 = vpack.c.b16 %v777, %v777
      %vm842 = vcmask 125952
      %843 = vst.msk [vmem:[%s179] sm:$0xf] %vm842, %v778
      %844 = vst.msk [vmem:[%s179 + $0x4] sm:$0xf] %vm842, %v779
      %845 = vst.msk [vmem:[%s179 + $0x8] sm:$0xf] %vm842, %v780
      %846 = vst.msk [vmem:[%s179 + $0xc] sm:$0xf] %vm842, %v781
      %847 = vst.msk [vmem:[%s179 + $0x10] sm:$0xf] %vm842, %v782
      %848 = vst.msk [vmem:[%s179 + $0x14] sm:$0xf] %vm842, %v783
      %849 = vst.msk [vmem:[%s179 + $0x18] sm:$0xf] %vm842, %v784
      %850 = vst.msk [vmem:[%s179 + $0x1c] sm:$0xf] %vm842, %v785
      %851 = vst.msk [vmem:[%s179 + $0x20] sm:$0xf] %vm842, %v786
      %852 = vst.msk [vmem:[%s179 + $0x24] sm:$0xf] %vm842, %v787
      %853 = vst.msk [vmem:[%s179 + $0x28] sm:$0xf] %vm842, %v788
      %854 = vst.msk [vmem:[%s179 + $0x2c] sm:$0xf] %vm842, %v789
      %855 = vst.msk [vmem:[%s179 + $0x30] sm:$0xf] %vm842, %v790
      %856 = vst.msk [vmem:[%s179 + $0x34] sm:$0xf] %vm842, %v791
      %857 = vst.msk [vmem:[%s179 + $0x38] sm:$0xf] %vm842, %v792
      %858 = vst.msk [vmem:[%s179 + $0x3c] sm:$0xf] %vm842, %v793
      %859 = vst.msk [vmem:[%s179 + $0x40] sm:$0xf] %vm842, %v794
      %860 = vst.msk [vmem:[%s179 + $0x44] sm:$0xf] %vm842, %v795
      %861 = vst.msk [vmem:[%s179 + $0x48] sm:$0xf] %vm842, %v796
      %862 = vst.msk [vmem:[%s179 + $0x4c] sm:$0xf] %vm842, %v797
      %863 = vst.msk [vmem:[%s179 + $0x50] sm:$0xf] %vm842, %v798
      %864 = vst.msk [vmem:[%s179 + $0x54] sm:$0xf] %vm842, %v799
      %865 = vst.msk [vmem:[%s179 + $0x58] sm:$0xf] %vm842, %v800
      %866 = vst.msk [vmem:[%s179 + $0x5c] sm:$0xf] %vm842, %v801
      %867 = vst.msk [vmem:[%s179 + $0x60] sm:$0xf] %vm842, %v802
      %868 = vst.msk [vmem:[%s179 + $0x64] sm:$0xf] %vm842, %v803
      %869 = vst.msk [vmem:[%s179 + $0x68] sm:$0xf] %vm842, %v804
      %870 = vst.msk [vmem:[%s179 + $0x6c] sm:$0xf] %vm842, %v805
      %871 = vst.msk [vmem:[%s179 + $0x70] sm:$0xf] %vm842, %v806
      %872 = vst.msk [vmem:[%s179 + $0x74] sm:$0xf] %vm842, %v807
      %873 = vst.msk [vmem:[%s179 + $0x78] sm:$0xf] %vm842, %v808
      %874 = vst.msk [vmem:[%s179 + $0x7c] sm:$0xf] %vm842, %v809
      %s875 = smul.u32 32, %s15
      %p876 = scmp.lt.s32.totalorder %s875, 63
      %s877 = scalar_select %p876, %s875, 63
      %s878 = smul.addr %s877, 4
      %s879 = scalar_lea.vmem %s2, %s878
      %p880 = scmp.lt.s32.totalorder %s15, 1
      %s881 = scalar_select %p880, %s15, 1
      %s882 = smul.addr %s881, 2
      %s883 = scalar_lea.vmem %s3, %s882
      // Predicated region
      $region29: #{discriminator_forward.8} parent=27 // pred_check
        %p884 = pneg %p80
      $region30: #{discriminator_forward.8} parent=27 // pred_check_branch
        %886 = sbr.rel (%p884) target = $region32
      $region31: #{discriminator_forward.8} parent=27 // pred_region
        %s887 = smul.u32 32, %s15
      $region32: #{discriminator_forward.8} parent=27 // pred_fallthru
        _
      // Predicated region
      $region33: #{discriminator_forward.8} parent=27 // pred_check
        %p888 = pneg %p106
      $region34: #{discriminator_forward.8} parent=27 // pred_check_branch
        %890 = sbr.rel (%p888) target = $region36
      $region35: #{discriminator_forward.8} parent=27 // pred_region
        _
      $region36: #{discriminator_forward.8} parent=27 // pred_fallthru
        _
    $region28: #{discriminator_forward.8} parent=5 // pred_fallthru
      _
    %p891 = scmp.le.s32.totalorder 2, %s10
    // Predicated region
    $region37: #{discriminator_forward.8} parent=5 // pred_check
      %p892 = pneg %p891
    $region38: #{discriminator_forward.8} parent=5 // pred_check_branch
      %894 = sbr.rel (%p892) target = $region40
    $region39: #{discriminator_forward.8} parent=5 // pred_region
      %s895 = ssub.s32 %s10, 2
      // Predicated region
      $region41: #{discriminator_forward.8} parent=39 // pred_check
        %p896 = pneg %p86
      $region42: #{discriminator_forward.8} parent=39 // pred_check_branch
        %898 = sbr.rel (%p896) target = $region44
      $region43: #{discriminator_forward.8} parent=39 // pred_region
        %s899 = smul.u32 32, %s16
        %p900 = scmp.lt.s32.totalorder %s899, 63
        %s901 = scalar_select %p900, %s899, 63
        %s902 = smul.addr %s901, 4
        %s903 = scalar_lea.vmem %s2, %s902
      $region44: #{discriminator_forward.8} parent=39 // pred_fallthru
        _
      // Predicated region
      $region45: #{discriminator_forward.8} parent=39 // pred_check
        %p904 = pneg %p112
      $region46: #{discriminator_forward.8} parent=39 // pred_check_branch
        %906 = sbr.rel (%p904) target = $region48
      $region47: #{discriminator_forward.8} parent=39 // pred_region
        %p907 = scmp.lt.s32.totalorder %s16, 1
        %s908 = scalar_select %p907, %s16, 1
        %s909 = smul.addr %s908, 2
        %s910 = scalar_lea.vmem %s3, %s909
      $region48: #{discriminator_forward.8} parent=39 // pred_fallthru
        _
    $region40: #{discriminator_forward.8} parent=5 // pred_fallthru
      _
  $region6: #{discriminator_forward.8} parent=0 // loop_footer
    %s14 = sadd.s32 1, %s10
  $region7: #{discriminator_forward.8} parent=0 // loop_footer_branch
    %9 = sbr.rel target = $region3
  $region8: #{discriminator_forward.8} parent=0 // loop_exit
    _

// kernel: discriminator_forward.9
$region0: #{discriminator_forward.9}
  #allocation0 [shape = 'u32[]', space=smem, size = 0x4, offset = 0x4, fixed_abs, tag = 'smem constant byte address 0x4 - core index']
  #allocation1 [shape = 'u32[144,128]{1,0:T(1,128)}', space=vmem, size = 0x12000, scoped, tag = 'internal scratch']
  %s0 = inlined_call_operand.vmem [shape: bf16[512,16], index: 0, kind: input, shape index: {}]
  %s1 = inlined_call_operand.vmem [shape: f32[1,16], index: 1, kind: input, shape index: {}]
  %s2 = inlined_call_operand.vmem [shape: f32[1,16], index: 2, kind: input, shape index: {}]
  %s3 = inlined_call_operand.vmem [shape: bf16[512,16], index: 3, kind: output, shape index: {}]
  %s4 = sld [smem:[#allocation0]]
  $region45: #{discriminator_forward.9} parent=0
    _
  %s6 = ssub.s32 1, %s4
  %s7 = scalar_select 0, %s6, %s4
  loop: start=0, step=1, limit=4
  $region2: #{discriminator_forward.9} parent=0 // loop_pre_header
    _
  $region3: #{discriminator_forward.9} parent=0 // loop_header
    %s9 = sphi 0, %s13
    %p10 = scmp.ge.s32.totalorder %s9, 4
    %s19 = sphi 0, %s21
    %s22 = sphi 0, %s19
    %s23 = sphi 0, %s22
    %s39 = sphi 0, %s23
    %s43 = sphi 0, %s43
    %s45 = sphi 0, %s43
    %s46 = sphi 0, %s45
    %s60 = sphi 0, %s46
    %s64 = sphi 0, %s64
    %s66 = sphi 0, %s64
    %s67 = sphi 0, %s66
    %s81 = sphi 0, %s67
    %s87 = sphi 0, %s89
    %s90 = sphi 0, %s87
    %s91 = sphi 0, %s90
    %s107 = sphi 0, %s91
  $region4: #{discriminator_forward.9} parent=0 // loop_header_branch
    %12 = sbr.rel (%p10) target = $region8
  $region5: #{discriminator_forward.9} parent=0 // loop_body
    %s14 = ssub.s32 %s9, 1
    %s15 = ssub.s32 %s9, 2
    %s16 = sadd.s32 %s9, 1
    %s17 = ssub.s32 %s9, %s16
    %p18 = scmp.eq.s32.totalorder %s17, 0
    %s20 = sadd.s32 %s19, 1
    %s21 = scalar_select %p18, %s19, %s20
    %p24 = pneg %p18
    %p25 = scmp.eq.s32.totalorder %s9, 1
    %p26 = por %p24, %p25
    %p27 = scmp.ne.s32.totalorder %s19, %s22
    %p28 = scmp.eq.s32.totalorder %s9, 0
    %p29 = por %p27, %p28
    %p30 = scmp.ne.s32.totalorder %s19, %s22
    %p31 = scmp.eq.s32.totalorder %s14, 1
    %p32 = por %p30, %p31
    %p33 = scmp.ne.s32.totalorder %s22, %s23
    %p34 = scmp.eq.s32.totalorder %s14, 0
    %p35 = por %p33, %p34
    %p36 = scmp.ne.s32.totalorder %s22, %s23
    %p37 = scmp.eq.s32.totalorder %s15, 1
    %p38 = por %p36, %p37
    %p40 = scmp.ne.s32.totalorder %s23, %s39
    %p41 = scmp.eq.s32.totalorder %s15, 0
    %p42 = por %p40, %p41
    %s44 = sadd.s32 %s43, 1
    %p47 = scmp.eq.s32.totalorder %s9, 1
    %p48 = scmp.ne.s32.totalorder %s43, %s45
    %p49 = scmp.eq.s32.totalorder %s9, 0
    %p50 = por %p48, %p49
    %p51 = scmp.ne.s32.totalorder %s43, %s45
    %p52 = scmp.eq.s32.totalorder %s14, 1
    %p53 = por %p51, %p52
    %p54 = scmp.ne.s32.totalorder %s45, %s46
    %p55 = scmp.eq.s32.totalorder %s14, 0
    %p56 = por %p54, %p55
    %p57 = scmp.ne.s32.totalorder %s45, %s46
    %p58 = scmp.eq.s32.totalorder %s15, 1
    %p59 = por %p57, %p58
    %p61 = scmp.ne.s32.totalorder %s46, %s60
    %p62 = scmp.eq.s32.totalorder %s15, 0
    %p63 = por %p61, %p62
    %s65 = sadd.s32 %s64, 1
    %p68 = scmp.eq.s32.totalorder %s9, 1
    %p69 = scmp.ne.s32.totalorder %s64, %s66
    %p70 = scmp.eq.s32.totalorder %s9, 0
    %p71 = por %p69, %p70
    %p72 = scmp.ne.s32.totalorder %s64, %s66
    %p73 = scmp.eq.s32.totalorder %s14, 1
    %p74 = por %p72, %p73
    %p75 = scmp.ne.s32.totalorder %s66, %s67
    %p76 = scmp.eq.s32.totalorder %s14, 0
    %p77 = por %p75, %p76
    %p78 = scmp.ne.s32.totalorder %s66, %s67
    %p79 = scmp.eq.s32.totalorder %s15, 1
    %p80 = por %p78, %p79
    %p82 = scmp.ne.s32.totalorder %s67, %s81
    %p83 = scmp.eq.s32.totalorder %s15, 0
    %p84 = por %p82, %p83
    %s85 = ssub.s32 %s9, %s16
    %p86 = scmp.eq.s32.totalorder %s85, 0
    %s88 = sadd.s32 %s87, 1
    %s89 = scalar_select %p86, %s87, %s88
    %p92 = pneg %p86
    %p93 = scmp.eq.s32.totalorder %s9, 1
    %p94 = por %p92, %p93
    %p95 = scmp.ne.s32.totalorder %s87, %s90
    %p96 = scmp.eq.s32.totalorder %s9, 0
    %p97 = por %p95, %p96
    %p98 = scmp.ne.s32.totalorder %s87, %s90
    %p99 = scmp.eq.s32.totalorder %s14, 1
    %p100 = por %p98, %p99
    %p101 = scmp.ne.s32.totalorder %s90, %s91
    %p102 = scmp.eq.s32.totalorder %s14, 0
    %p103 = por %p101, %p102
    %p104 = scmp.ne.s32.totalorder %s90, %s91
    %p105 = scmp.eq.s32.totalorder %s15, 1
    %p106 = por %p104, %p105
    %p108 = scmp.ne.s32.totalorder %s91, %s107
    %p109 = scmp.eq.s32.totalorder %s15, 0
    %p110 = por %p108, %p109
    %p111 = scmp.le.s32.totalorder 1, %s9
    %p112 = scmp.lt.s32.totalorder %s9, 3
    %p113 = pnand %p111, %p112
    %p114 = pneg %p113
    // Predicated region
    $region9: #{discriminator_forward.9} parent=5 // pred_check
      _
    $region10: #{discriminator_forward.9} parent=5 // pred_check_branch
      %116 = sbr.rel (%p113) target = $region12
    $region11: #{discriminator_forward.9} parent=5 // pred_region
      %s117 = ssub.s32 %s9, 1
      // Predicated region
      $region13: #{discriminator_forward.9} parent=11 // pred_check
        %p118 = pneg %p56
      $region14: #{discriminator_forward.9} parent=11 // pred_check_branch
        %120 = sbr.rel (%p118) target = $region16
      $region15: #{discriminator_forward.9} parent=11 // pred_region
        _
      $region16: #{discriminator_forward.9} parent=11 // pred_fallthru
        _
      // Predicated region
      $region17: #{discriminator_forward.9} parent=11 // pred_check
        %p121 = pneg %p77
      $region18: #{discriminator_forward.9} parent=11 // pred_check_branch
        %123 = sbr.rel (%p121) target = $region20
      $region19: #{discriminator_forward.9} parent=11 // pred_region
        _
      $region20: #{discriminator_forward.9} parent=11 // pred_fallthru
        _
    $region12: #{discriminator_forward.9} parent=5 // pred_fallthru
      _
    %p124 = scmp.lt.s32.totalorder %s9, 2
    // Predicated region
    $region21: #{discriminator_forward.9} parent=5 // pred_check
      %p125 = pneg %p124
    $region22: #{discriminator_forward.9} parent=5 // pred_check_branch
      %127 = sbr.rel (%p125) target = $region24
    $region23: #{discriminator_forward.9} parent=5 // pred_region
      // Predicated region
      $region25: #{discriminator_forward.9} parent=23 // pred_check
        %p128 = pneg %p29
      $region26: #{discriminator_forward.9} parent=23 // pred_check_branch
        %130 = sbr.rel (%p128) target = $region28
      $region27: #{discriminator_forward.9} parent=23 // pred_region
        %s131 = smul.u32 32, %s9
        %p132 = scmp.lt.s32.totalorder %s131, 63
        %s133 = scalar_select %p132, %s131, 63
        %s134 = smul.addr %s133, 4
        %s135 = scalar_lea.vmem %s0, %s134
        %s136 = smul.u32 32, %s9
      $region28: #{discriminator_forward.9} parent=23 // pred_fallthru
        _
    $region24: #{discriminator_forward.9} parent=5 // pred_fallthru
      _
    %p137 = scmp.le.s32.totalorder 1, %s9
    %p138 = scmp.lt.s32.totalorder %s9, 3
    %p139 = pnand %p137, %p138
    %p140 = pneg %p139
    // Predicated region
    $region29: #{discriminator_forward.9} parent=5 // pred_check
      _
    $region30: #{discriminator_forward.9} parent=5 // pred_check_branch
      %142 = sbr.rel (%p139) target = $region32
    $region31: #{discriminator_forward.9} parent=5 // pred_region
      %s143 = ssub.s32 %s9, 1
      %s144 = smul.u32 32, %s14
      %p145 = scmp.lt.s32.totalorder %s144, 63
      %s146 = scalar_select %p145, %s144, 63
      %s147 = smul.addr %s146, 4
      %s148 = scalar_lea.vmem %s0, %s147
      %p149 = pneg %p35
      %p150 = pneg %p32
      %p151 = pneg %p56
      %p152 = pneg %p53
      %p153 = pneg %p77
      %p154 = pneg %p74
      %p155 = pneg %p103
      %p156 = pneg %p100
      %s157 = smul.u32 32, %s14
      %p158 = scmp.lt.s32.totalorder %s157, 63
      %s159 = scalar_select %p158, %s157, 63
      %s160 = smul.addr %s159, 4
      %s161 = scalar_lea.vmem %s3, %s160
      %s162 = smul.u32 32, %s14
      %p163 = scmp.lt.s32.totalorder %s162, 63
      %s164 = scalar_select %p163, %s162, 63
      %s165 = smul.addr %s164, 4
      %s166 = scalar_lea.vmem %s0, %s165
      %s167 = smul.u32 32, %s14
      %s168 = smul.u32 32, %s14
      %p169 = scmp.lt.s32.totalorder %s168, 63
      %s170 = scalar_select %p169, %s168, 63
      %s171 = smul.addr %s170, 4
      %s172 = scalar_lea.vmem %s3, %s171
      %s173 = smul.u32 32, %s14
      %v174 = vld [vmem:[%s166] sm:$0xf]
      %v175 = vld [vmem:[%s166 + $0x4] sm:$0xf]
      %v176 = vld [vmem:[%s166 + $0x8] sm:$0xf]
      %v177 = vld [vmem:[%s166 + $0xc] sm:$0xf]
      %v178 = vld [vmem:[%s166 + $0x10] sm:$0xf]
      %v179 = vld [vmem:[%s166 + $0x14] sm:$0xf]
      %v180 = vld [vmem:[%s166 + $0x18] sm:$0xf]
      %v181 = vld [vmem:[%s166 + $0x1c] sm:$0xf]
      %v182 = vld [vmem:[%s166 + $0x20] sm:$0xf]
      %v183 = vld [vmem:[%s166 + $0x24] sm:$0xf]
      %v184 = vld [vmem:[%s166 + $0x28] sm:$0xf]
      %v185 = vld [vmem:[%s166 + $0x2c] sm:$0xf]
      %v186 = vld [vmem:[%s166 + $0x30] sm:$0xf]
      %v187 = vld [vmem:[%s166 + $0x34] sm:$0xf]
      %v188 = vld [vmem:[%s166 + $0x38] sm:$0xf]
      %v189 = vld [vmem:[%s166 + $0x3c] sm:$0xf]
      %v190 = vld [vmem:[%s166 + $0x40] sm:$0xf]
      %v191 = vld [vmem:[%s166 + $0x44] sm:$0xf]
      %v192 = vld [vmem:[%s166 + $0x48] sm:$0xf]
      %v193 = vld [vmem:[%s166 + $0x4c] sm:$0xf]
      %v194 = vld [vmem:[%s166 + $0x50] sm:$0xf]
      %v195 = vld [vmem:[%s166 + $0x54] sm:$0xf]
      %v196 = vld [vmem:[%s166 + $0x58] sm:$0xf]
      %v197 = vld [vmem:[%s166 + $0x5c] sm:$0xf]
      %v198 = vld [vmem:[%s166 + $0x60] sm:$0xf]
      %v199 = vld [vmem:[%s166 + $0x64] sm:$0xf]
      %v200 = vld [vmem:[%s166 + $0x68] sm:$0xf]
      %v201 = vld [vmem:[%s166 + $0x6c] sm:$0xf]
      %v202 = vld [vmem:[%s166 + $0x70] sm:$0xf]
      %v203 = vld [vmem:[%s166 + $0x74] sm:$0xf]
      %v204 = vld [vmem:[%s166 + $0x78] sm:$0xf]
      %v205 = vld [vmem:[%s166 + $0x7c] sm:$0xf]
      %v206 = vunpack.c.l.bf16 %v174
      %v207 = vunpack.c.l.bf16 %v175
      %v208 = vunpack.c.l.bf16 %v176
      %v209 = vunpack.c.l.bf16 %v177
      %v210 = vunpack.c.l.bf16 %v178
      %v211 = vunpack.c.l.bf16 %v179
      %v212 = vunpack.c.l.bf16 %v180
      %v213 = vunpack.c.l.bf16 %v181
      %v214 = vunpack.c.l.bf16 %v182
      %v215 = vunpack.c.l.bf16 %v183
      %v216 = vunpack.c.l.bf16 %v184
      %v217 = vunpack.c.l.bf16 %v185
      %v218 = vunpack.c.l.bf16 %v186
      %v219 = vunpack.c.l.bf16 %v187
      %v220 = vunpack.c.l.bf16 %v188
      %v221 = vunpack.c.l.bf16 %v189
      %v222 = vunpack.c.l.bf16 %v190
      %v223 = vunpack.c.l.bf16 %v191
      %v224 = vunpack.c.l.bf16 %v192
      %v225 = vunpack.c.l.bf16 %v193
      %v226 = vunpack.c.l.bf16 %v194
      %v227 = vunpack.c.l.bf16 %v195
      %v228 = vunpack.c.l.bf16 %v196
      %v229 = vunpack.c.l.bf16 %v197
      %v230 = vunpack.c.l.bf16 %v198
      %v231 = vunpack.c.l.bf16 %v199
      %v232 = vunpack.c.l.bf16 %v200
      %v233 = vunpack.c.l.bf16 %v201
      %v234 = vunpack.c.l.bf16 %v202
      %v235 = vunpack.c.l.bf16 %v203
      %v236 = vunpack.c.l.bf16 %v204
      %v237 = vunpack.c.l.bf16 %v205
      %v238 = vld [vmem:[%s1] sm:$0x1]
      %v240 = vlaneseq
      %v241 = vshrl.u32 %v240, 7
      %v242 = vsub.s32 0, %v241
      %v243 = vrot.slane %v238, %v242
      %v245 = vmul.f32 %v206, %v243
      %v246 = vmul.f32 %v207, %v243
      %v247 = vmul.f32 %v208, %v243
      %v248 = vmul.f32 %v209, %v243
      %v249 = vmul.f32 %v210, %v243
      %v250 = vmul.f32 %v211, %v243
      %v251 = vmul.f32 %v212, %v243
      %v252 = vmul.f32 %v213, %v243
      %v253 = vmul.f32 %v214, %v243
      %v254 = vmul.f32 %v215, %v243
      %v255 = vmul.f32 %v216, %v243
      %v256 = vmul.f32 %v217, %v243
      %v257 = vmul.f32 %v218, %v243
      %v258 = vmul.f32 %v219, %v243
      %v259 = vmul.f32 %v220, %v243
      %v260 = vmul.f32 %v221, %v243
      %v261 = vmul.f32 %v222, %v243
      %v262 = vmul.f32 %v223, %v243
      %v263 = vmul.f32 %v224, %v243
      %v264 = vmul.f32 %v225, %v243
      %v265 = vmul.f32 %v226, %v243
      %v266 = vmul.f32 %v227, %v243
      %v267 = vmul.f32 %v228, %v243
      %v268 = vmul.f32 %v229, %v243
      %v269 = vmul.f32 %v230, %v243
      %v270 = vmul.f32 %v231, %v243
      %v271 = vmul.f32 %v232, %v243
      %v272 = vmul.f32 %v233, %v243
      %v273 = vmul.f32 %v234, %v243
      %v274 = vmul.f32 %v235, %v243
      %v275 = vmul.f32 %v236, %v243
      %v276 = vmul.f32 %v237, %v243
      %v277 = vld [vmem:[%s2] sm:$0x1]
      %v279 = vlaneseq
      %v280 = vshrl.u32 %v279, 7
      %v281 = vsub.s32 0, %v280
      %v282 = vrot.slane %v277, %v281
      %v284 = vadd.f32 %v245, %v282
      %v285 = vadd.f32 %v246, %v282
      %v286 = vadd.f32 %v247, %v282
      %v287 = vadd.f32 %v248, %v282
      %v288 = vadd.f32 %v249, %v282
      %v289 = vadd.f32 %v250, %v282
      %v290 = vadd.f32 %v251, %v282
      %v291 = vadd.f32 %v252, %v282
      %v292 = vadd.f32 %v253, %v282
      %v293 = vadd.f32 %v254, %v282
      %v294 = vadd.f32 %v255, %v282
      %v295 = vadd.f32 %v256, %v282
      %v296 = vadd.f32 %v257, %v282
      %v297 = vadd.f32 %v258, %v282
      %v298 = vadd.f32 %v259, %v282
      %v299 = vadd.f32 %v260, %v282
      %v300 = vadd.f32 %v261, %v282
      %v301 = vadd.f32 %v262, %v282
      %v302 = vadd.f32 %v263, %v282
      %v303 = vadd.f32 %v264, %v282
      %v304 = vadd.f32 %v265, %v282
      %v305 = vadd.f32 %v266, %v282
      %v306 = vadd.f32 %v267, %v282
      %v307 = vadd.f32 %v268, %v282
      %v308 = vadd.f32 %v269, %v282
      %v309 = vadd.f32 %v270, %v282
      %v310 = vadd.f32 %v271, %v282
      %v311 = vadd.f32 %v272, %v282
      %v312 = vadd.f32 %v273, %v282
      %v313 = vadd.f32 %v274, %v282
      %v314 = vadd.f32 %v275, %v282
      %v315 = vadd.f32 %v276, %v282
      %vm316 = vcmp.gt.f32.partialorder %v284, 0.0
      %vm317 = vcmp.gt.f32.partialorder %v285, 0.0
      %vm318 = vcmp.gt.f32.partialorder %v286, 0.0
      %vm319 = vcmp.gt.f32.partialorder %v287, 0.0
      %vm320 = vcmp.gt.f32.partialorder %v288, 0.0
      %vm321 = vcmp.gt.f32.partialorder %v289, 0.0
      %vm322 = vcmp.gt.f32.partialorder %v290, 0.0
      %vm323 = vcmp.gt.f32.partialorder %v291, 0.0
      %vm324 = vcmp.gt.f32.partialorder %v292, 0.0
      %vm325 = vcmp.gt.f32.partialorder %v293, 0.0
      %vm326 = vcmp.gt.f32.partialorder %v294, 0.0
      %vm327 = vcmp.gt.f32.partialorder %v295, 0.0
      %vm328 = vcmp.gt.f32.partialorder %v296, 0.0
      %vm329 = vcmp.gt.f32.partialorder %v297, 0.0
      %vm330 = vcmp.gt.f32.partialorder %v298, 0.0
      %vm331 = vcmp.gt.f32.partialorder %v299, 0.0
      %vm332 = vcmp.gt.f32.partialorder %v300, 0.0
      %vm333 = vcmp.gt.f32.partialorder %v301, 0.0
      %vm334 = vcmp.gt.f32.partialorder %v302, 0.0
      %vm335 = vcmp.gt.f32.partialorder %v303, 0.0
      %vm336 = vcmp.gt.f32.partialorder %v304, 0.0
      %vm337 = vcmp.gt.f32.partialorder %v305, 0.0
      %vm338 = vcmp.gt.f32.partialorder %v306, 0.0
      %vm339 = vcmp.gt.f32.partialorder %v307, 0.0
      %vm340 = vcmp.gt.f32.partialorder %v308, 0.0
      %vm341 = vcmp.gt.f32.partialorder %v309, 0.0
      %vm342 = vcmp.gt.f32.partialorder %v310, 0.0
      %vm343 = vcmp.gt.f32.partialorder %v311, 0.0
      %vm344 = vcmp.gt.f32.partialorder %v312, 0.0
      %vm345 = vcmp.gt.f32.partialorder %v313, 0.0
      %vm346 = vcmp.gt.f32.partialorder %v314, 0.0
      %vm347 = vcmp.gt.f32.partialorder %v315, 0.0
      %v348 = vmul.f32 %v284, 0.2
      %v349 = vmul.f32 %v285, 0.2
      %v350 = vmul.f32 %v286, 0.2
      %v351 = vmul.f32 %v287, 0.2
      %v352 = vmul.f32 %v288, 0.2
      %v353 = vmul.f32 %v289, 0.2
      %v354 = vmul.f32 %v290, 0.2
      %v355 = vmul.f32 %v291, 0.2
      %v356 = vmul.f32 %v292, 0.2
      %v357 = vmul.f32 %v293, 0.2
      %v358 = vmul.f32 %v294, 0.2
      %v359 = vmul.f32 %v295, 0.2
      %v360 = vmul.f32 %v296, 0.2
      %v361 = vmul.f32 %v297, 0.2
      %v362 = vmul.f32 %v298, 0.2
      %v363 = vmul.f32 %v299, 0.2
      %v364 = vmul.f32 %v300, 0.2
      %v365 = vmul.f32 %v301, 0.2
      %v366 = vmul.f32 %v302, 0.2
      %v367 = vmul.f32 %v303, 0.2
      %v368 = vmul.f32 %v304, 0.2
      %v369 = vmul.f32 %v305, 0.2
      %v370 = vmul.f32 %v306, 0.2
      %v371 = vmul.f32 %v307, 0.2
      %v372 = vmul.f32 %v308, 0.2
      %v373 = vmul.f32 %v309, 0.2
      %v374 = vmul.f32 %v310, 0.2
      %v375 = vmul.f32 %v311, 0.2
      %v376 = vmul.f32 %v312, 0.2
      %v377 = vmul.f32 %v313, 0.2
      %v378 = vmul.f32 %v314, 0.2
      %v379 = vmul.f32 %v315, 0.2
      %v380 = vsel %vm316, %v284, %v348
      %v381 = vsel %vm317, %v285, %v349
      %v382 = vsel %vm318, %v286, %v350
      %v383 = vsel %vm319, %v287, %v351
      %v384 = vsel %vm320, %v288, %v352
      %v385 = vsel %vm321, %v289, %v353
      %v386 = vsel %vm322, %v290, %v354
      %v387 = vsel %vm323, %v291, %v355
      %v388 = vsel %vm324, %v292, %v356
      %v389 = vsel %vm325, %v293, %v357
      %v390 = vsel %vm326, %v294, %v358
      %v391 = vsel %vm327, %v295, %v359
      %v392 = vsel %vm328, %v296, %v360
      %v393 = vsel %vm329, %v297, %v361
      %v394 = vsel %vm330, %v298, %v362
      %v395 = vsel %vm331, %v299, %v363
      %v396 = vsel %vm332, %v300, %v364
      %v397 = vsel %vm333, %v301, %v365
      %v398 = vsel %vm334, %v302, %v366
      %v399 = vsel %vm335, %v303, %v367
      %v400 = vsel %vm336, %v304, %v368
      %v401 = vsel %vm337, %v305, %v369
      %v402 = vsel %vm338, %v306, %v370
      %v403 = vsel %vm339, %v307, %v371
      %v404 = vsel %vm340, %v308, %v372
      %v405 = vsel %vm341, %v309, %v373
      %v406 = vsel %vm342, %v310, %v374
      %v407 = vsel %vm343, %v311, %v375
      %v408 = vsel %vm344, %v312, %v376
      %v409 = vsel %vm345, %v313, %v377
      %v410 = vsel %vm346, %v314, %v378
      %v411 = vsel %vm347, %v315, %v379
      %v412 = vpack.c.bf16 %v381, %v380
      %v413 = vpack.c.bf16 %v383, %v382
      %v414 = vpack.c.bf16 %v385, %v384
      %v415 = vpack.c.bf16 %v387, %v386
      %v416 = vpack.c.bf16 %v389, %v388
      %v417 = vpack.c.bf16 %v391, %v390
      %v418 = vpack.c.bf16 %v393, %v392
      %v419 = vpack.c.bf16 %v395, %v394
      %v420 = vpack.c.bf16 %v397, %v396
      %v421 = vpack.c.bf16 %v399, %v398
      %v422 = vpack.c.bf16 %v401, %v400
      %v423 = vpack.c.bf16 %v403, %v402
      %v424 = vpack.c.bf16 %v405, %v404
      %v425 = vpack.c.bf16 %v407, %v406
      %v426 = vpack.c.bf16 %v409, %v408
      %v427 = vpack.c.bf16 %v411, %v410
      %v444 = vunpack.c.l.b16 %v412
      %v445 = vunpack.c.h.b16 %v412
      %v446 = vunpack.c.l.b16 %v413
      %v447 = vunpack.c.h.b16 %v413
      %v448 = vunpack.c.l.b16 %v414
      %v449 = vunpack.c.h.b16 %v414
      %v450 = vunpack.c.l.b16 %v415
      %v451 = vunpack.c.h.b16 %v415
      %v452 = vunpack.c.l.b16 %v416
      %v453 = vunpack.c.h.b16 %v416
      %v454 = vunpack.c.l.b16 %v417
      %v455 = vunpack.c.h.b16 %v417
      %v456 = vunpack.c.l.b16 %v418
      %v457 = vunpack.c.h.b16 %v418
      %v458 = vunpack.c.l.b16 %v419
      %v459 = vunpack.c.h.b16 %v419
      %v460 = vunpack.c.l.b16 %v420
      %v461 = vunpack.c.h.b16 %v420
      %v462 = vunpack.c.l.b16 %v421
      %v463 = vunpack.c.h.b16 %v421
      %v464 = vunpack.c.l.b16 %v422
      %v465 = vunpack.c.h.b16 %v422
      %v466 = vunpack.c.l.b16 %v423
      %v467 = vunpack.c.h.b16 %v423
      %v468 = vunpack.c.l.b16 %v424
      %v469 = vunpack.c.h.b16 %v424
      %v470 = vunpack.c.l.b16 %v425
      %v471 = vunpack.c.h.b16 %v425
      %v472 = vunpack.c.l.b16 %v426
      %v473 = vunpack.c.h.b16 %v426
      %v474 = vunpack.c.l.b16 %v427
      %v475 = vunpack.c.h.b16 %v427
      %v476 = vpack.c.b16 %v444, %v444
      %v477 = vpack.c.b16 %v445, %v445
      %v478 = vpack.c.b16 %v446, %v446
      %v479 = vpack.c.b16 %v447, %v447
      %v480 = vpack.c.b16 %v448, %v448
      %v481 = vpack.c.b16 %v449, %v449
      %v482 = vpack.c.b16 %v450, %v450
      %v483 = vpack.c.b16 %v451, %v451
      %v484 = vpack.c.b16 %v452, %v452
      %v485 = vpack.c.b16 %v453, %v453
      %v486 = vpack.c.b16 %v454, %v454
      %v487 = vpack.c.b16 %v455, %v455
      %v488 = vpack.c.b16 %v456, %v456
      %v489 = vpack.c.b16 %v457, %v457
      %v490 = vpack.c.b16 %v458, %v458
      %v491 = vpack.c.b16 %v459, %v459
      %v492 = vpack.c.b16 %v460, %v460
      %v493 = vpack.c.b16 %v461, %v461
      %v494 = vpack.c.b16 %v462, %v462
      %v495 = vpack.c.b16 %v463, %v463
      %v496 = vpack.c.b16 %v464, %v464
      %v497 = vpack.c.b16 %v465, %v465
      %v498 = vpack.c.b16 %v466, %v466
      %v499 = vpack.c.b16 %v467, %v467
      %v500 = vpack.c.b16 %v468, %v468
      %v501 = vpack.c.b16 %v469, %v469
      %v502 = vpack.c.b16 %v470, %v470
      %v503 = vpack.c.b16 %v471, %v471
      %v504 = vpack.c.b16 %v472, %v472
      %v505 = vpack.c.b16 %v473, %v473
      %v506 = vpack.c.b16 %v474, %v474
      %v507 = vpack.c.b16 %v475, %v475
      %vm540 = vcmask 125952
      %541 = vst.msk [vmem:[%s172] sm:$0xf] %vm540, %v476
      %542 = vst.msk [vmem:[%s172 + $0x4] sm:$0xf] %vm540, %v477
      %543 = vst.msk [vmem:[%s172 + $0x8] sm:$0xf] %vm540, %v478
      %544 = vst.msk [vmem:[%s172 + $0xc] sm:$0xf] %vm540, %v479
      %545 = vst.msk [vmem:[%s172 + $0x10] sm:$0xf] %vm540, %v480
      %546 = vst.msk [vmem:[%s172 + $0x14] sm:$0xf] %vm540, %v481
      %547 = vst.msk [vmem:[%s172 + $0x18] sm:$0xf] %vm540, %v482
      %548 = vst.msk [vmem:[%s172 + $0x1c] sm:$0xf] %vm540, %v483
      %549 = vst.msk [vmem:[%s172 + $0x20] sm:$0xf] %vm540, %v484
      %550 = vst.msk [vmem:[%s172 + $0x24] sm:$0xf] %vm540, %v485
      %551 = vst.msk [vmem:[%s172 + $0x28] sm:$0xf] %vm540, %v486
      %552 = vst.msk [vmem:[%s172 + $0x2c] sm:$0xf] %vm540, %v487
      %553 = vst.msk [vmem:[%s172 + $0x30] sm:$0xf] %vm540, %v488
      %554 = vst.msk [vmem:[%s172 + $0x34] sm:$0xf] %vm540, %v489
      %555 = vst.msk [vmem:[%s172 + $0x38] sm:$0xf] %vm540, %v490
      %556 = vst.msk [vmem:[%s172 + $0x3c] sm:$0xf] %vm540, %v491
      %557 = vst.msk [vmem:[%s172 + $0x40] sm:$0xf] %vm540, %v492
      %558 = vst.msk [vmem:[%s172 + $0x44] sm:$0xf] %vm540, %v493
      %559 = vst.msk [vmem:[%s172 + $0x48] sm:$0xf] %vm540, %v494
      %560 = vst.msk [vmem:[%s172 + $0x4c] sm:$0xf] %vm540, %v495
      %561 = vst.msk [vmem:[%s172 + $0x50] sm:$0xf] %vm540, %v496
      %562 = vst.msk [vmem:[%s172 + $0x54] sm:$0xf] %vm540, %v497
      %563 = vst.msk [vmem:[%s172 + $0x58] sm:$0xf] %vm540, %v498
      %564 = vst.msk [vmem:[%s172 + $0x5c] sm:$0xf] %vm540, %v499
      %565 = vst.msk [vmem:[%s172 + $0x60] sm:$0xf] %vm540, %v500
      %566 = vst.msk [vmem:[%s172 + $0x64] sm:$0xf] %vm540, %v501
      %567 = vst.msk [vmem:[%s172 + $0x68] sm:$0xf] %vm540, %v502
      %568 = vst.msk [vmem:[%s172 + $0x6c] sm:$0xf] %vm540, %v503
      %569 = vst.msk [vmem:[%s172 + $0x70] sm:$0xf] %vm540, %v504
      %570 = vst.msk [vmem:[%s172 + $0x74] sm:$0xf] %vm540, %v505
      %571 = vst.msk [vmem:[%s172 + $0x78] sm:$0xf] %vm540, %v506
      %572 = vst.msk [vmem:[%s172 + $0x7c] sm:$0xf] %vm540, %v507
      %s573 = smul.u32 32, %s14
      %p574 = scmp.lt.s32.totalorder %s573, 63
      %s575 = scalar_select %p574, %s573, 63
      %s576 = smul.addr %s575, 4
      %s577 = scalar_lea.vmem %s3, %s576
      // Predicated region
      $region33: #{discriminator_forward.9} parent=31 // pred_check
        %p578 = pneg %p100
      $region34: #{discriminator_forward.9} parent=31 // pred_check_branch
        %580 = sbr.rel (%p578) target = $region36
      $region35: #{discriminator_forward.9} parent=31 // pred_region
        %s581 = smul.u32 32, %s14
      $region36: #{discriminator_forward.9} parent=31 // pred_fallthru
        _
    $region32: #{discriminator_forward.9} parent=5 // pred_fallthru
      _
    %p582 = scmp.le.s32.totalorder 2, %s9
    // Predicated region
    $region37: #{discriminator_forward.9} parent=5 // pred_check
      %p583 = pneg %p582
    $region38: #{discriminator_forward.9} parent=5 // pred_check_branch
      %585 = sbr.rel (%p583) target = $region40
    $region39: #{discriminator_forward.9} parent=5 // pred_region
      %s586 = ssub.s32 %s9, 2
      // Predicated region
      $region41: #{discriminator_forward.9} parent=39 // pred_check
        %p587 = pneg %p106
      $region42: #{discriminator_forward.9} parent=39 // pred_check_branch
        %589 = sbr.rel (%p587) target = $region44
      $region43: #{discriminator_forward.9} parent=39 // pred_region
        %s590 = smul.u32 32, %s15
        %p591 = scmp.lt.s32.totalorder %s590, 63
        %s592 = scalar_select %p591, %s590, 63
        %s593 = smul.addr %s592, 4
        %s594 = scalar_lea.vmem %s3, %s593
      $region44: #{discriminator_forward.9} parent=39 // pred_fallthru
        _
    $region40: #{discriminator_forward.9} parent=5 // pred_fallthru
      _
  $region6: #{discriminator_forward.9} parent=0 // loop_footer
    %s13 = sadd.s32 1, %s9
  $region7: #{discriminator_forward.9} parent=0 // loop_footer_branch
    %8 = sbr.rel target = $region3
  $region8: #{discriminator_forward.9} parent=0 // loop_exit
    _

// kernel: discriminator_forward.10
$region0: #{discriminator_forward.10}
  #allocation0 [shape = 'u32[]', space=smem, size = 0x4, offset = 0x4, fixed_abs, tag = 'smem constant byte address 0x4 - core index']
  #allocation1 [shape = 'u32[144,128]{1,0:T(1,128)}', space=vmem, size = 0x12000, scoped, tag = 'internal scratch']
  %s0 = inlined_call_operand.vmem [shape: bf16[128,256], index: 0, kind: input, shape index: {}]
  %s1 = inlined_call_operand.vmem [shape: bf16[256,32], index: 1, kind: input, shape index: {}]
  %s2 = inlined_call_operand.vmem [shape: bf16[128,32], index: 2, kind: output, shape index: {0}]
  %s3 = inlined_call_operand.vmem [shape: f32[1,2,32], index: 3, kind: output, shape index: {1}]
  %4 = xla_tuple %s2, %s3
  %s5 = sld [smem:[#allocation0]]
  $region26: #{discriminator_forward.10} parent=0
    _
  %s7 = ssub.s32 1, %s5
  %s8 = scalar_select 0, %s7, %s5
  // Predicated region
  $region2: #{discriminator_forward.10} parent=0 // pred_check
    _
  $region3: #{discriminator_forward.10} parent=0 // pred_check_branch
    %10 = sbr.rel (0) target = $region5
  $region4: #{discriminator_forward.10} parent=0 // pred_region
    _
  $region5: #{discriminator_forward.10} parent=0 // pred_fallthru
    _
  // Predicated region
  $region6: #{discriminator_forward.10} parent=0 // pred_check
    _
  $region7: #{discriminator_forward.10} parent=0 // pred_check_branch
    %12 = sbr.rel (0) target = $region9
  $region8: #{discriminator_forward.10} parent=0 // pred_region
    _
  $region9: #{discriminator_forward.10} parent=0 // pred_fallthru
    _
  %v14 = vld [vmem:[%s0] sm:$0xff]
  %v15 = vld [vmem:[%s0 + $0x8] sm:$0xff]
  %v16 = vld [vmem:[%s0 + $0x10] sm:$0xff]
  %v17 = vld [vmem:[%s0 + $0x18] sm:$0xff]
  %v18 = vld [vmem:[%s0 + $0x20] sm:$0xff]
  %v19 = vld [vmem:[%s0 + $0x28] sm:$0xff]
  %v20 = vld [vmem:[%s0 + $0x30] sm:$0xff]
  %v21 = vld [vmem:[%s0 + $0x38] sm:$0xff]
  %v22 = vld [vmem:[%s0 + $0x40] sm:$0xff]
  %v23 = vld [vmem:[%s0 + $0x48] sm:$0xff]
  %v24 = vld [vmem:[%s0 + $0x50] sm:$0xff]
  %v25 = vld [vmem:[%s0 + $0x58] sm:$0xff]
  %v26 = vld [vmem:[%s0 + $0x60] sm:$0xff]
  %v27 = vld [vmem:[%s0 + $0x68] sm:$0xff]
  %v28 = vld [vmem:[%s0 + $0x70] sm:$0xff]
  %v29 = vld [vmem:[%s0 + $0x78] sm:$0xff]
  %v30 = vld [vmem:[%s1] sm:$0xf]
  %v31 = vld [vmem:[%s1 + $0x4] sm:$0xf]
  %v32 = vld [vmem:[%s1 + $0x8] sm:$0xf]
  %v33 = vld [vmem:[%s1 + $0xc] sm:$0xf]
  %v34 = vld [vmem:[%s1 + $0x10] sm:$0xf]
  %v35 = vld [vmem:[%s1 + $0x14] sm:$0xf]
  %v36 = vld [vmem:[%s1 + $0x18] sm:$0xf]
  %v37 = vld [vmem:[%s1 + $0x1c] sm:$0xf]
  %v38 = vld [vmem:[%s1 + $0x20] sm:$0xf]
  %v39 = vld [vmem:[%s1 + $0x24] sm:$0xf]
  %v40 = vld [vmem:[%s1 + $0x28] sm:$0xf]
  %v41 = vld [vmem:[%s1 + $0x2c] sm:$0xf]
  %v42 = vld [vmem:[%s1 + $0x30] sm:$0xf]
  %v43 = vld [vmem:[%s1 + $0x34] sm:$0xf]
  %v44 = vld [vmem:[%s1 + $0x38] sm:$0xf]
  %v45 = vld [vmem:[%s1 + $0x3c] sm:$0xf]
  %v46 = vld [vmem:[%s1 + $0x40] sm:$0xf]
  %v47 = vld [vmem:[%s1 + $0x44] sm:$0xf]
  %v48 = vld [vmem:[%s1 + $0x48] sm:$0xf]
  %v49 = vld [vmem:[%s1 + $0x4c] sm:$0xf]
  %v50 = vld [vmem:[%s1 + $0x50] sm:$0xf]
  %v51 = vld [vmem:[%s1 + $0x54] sm:$0xf]
  %v52 = vld [vmem:[%s1 + $0x58] sm:$0xf]
  %v53 = vld [vmem:[%s1 + $0x5c] sm:$0xf]
  %v54 = vld [vmem:[%s1 + $0x60] sm:$0xf]
  %v55 = vld [vmem:[%s1 + $0x64] sm:$0xf]
  %v56 = vld [vmem:[%s1 + $0x68] sm:$0xf]
  %v57 = vld [vmem:[%s1 + $0x6c] sm:$0xf]
  %v58 = vld [vmem:[%s1 + $0x70] sm:$0xf]
  %v59 = vld [vmem:[%s1 + $0x74] sm:$0xf]
  %v60 = vld [vmem:[%s1 + $0x78] sm:$0xf]
  %v61 = vld [vmem:[%s1 + $0x7c] sm:$0xf]
  %v78 = vunpack.c.l.b16 %v14
  %v79 = vunpack.c.h.b16 %v14
  %v80 = vunpack.c.l.b16 %v15
  %v81 = vunpack.c.h.b16 %v15
  %v82 = vunpack.c.l.b16 %v16
  %v83 = vunpack.c.h.b16 %v16
  %v84 = vunpack.c.l.b16 %v17
  %v85 = vunpack.c.h.b16 %v17
  %v86 = vunpack.c.l.b16 %v18
  %v87 = vunpack.c.h.b16 %v18
  %v88 = vunpack.c.l.b16 %v19
  %v89 = vunpack.c.h.b16 %v19
  %v90 = vunpack.c.l.b16 %v20
  %v91 = vunpack.c.h.b16 %v20
  %v92 = vunpack.c.l.b16 %v21
  %v93 = vunpack.c.h.b16 %v21
  %v94 = vunpack.c.l.b16 %v22
  %v95 = vunpack.c.h.b16 %v22
  %v96 = vunpack.c.l.b16 %v23
  %v97 = vunpack.c.h.b16 %v23
  %v98 = vunpack.c.l.b16 %v24
  %v99 = vunpack.c.h.b16 %v24
  %v100 = vunpack.c.l.b16 %v25
  %v101 = vunpack.c.h.b16 %v25
  %v102 = vunpack.c.l.b16 %v26
  %v103 = vunpack.c.h.b16 %v26
  %v104 = vunpack.c.l.b16 %v27
  %v105 = vunpack.c.h.b16 %v27
  %v106 = vunpack.c.l.b16 %v28
  %v107 = vunpack.c.h.b16 %v28
  %v108 = vunpack.c.l.b16 %v29
  %v109 = vunpack.c.h.b16 %v29
  %v110 = vpack.c.b16 %v80, %v78
  %v111 = vpack.c.b16 %v81, %v79
  %v112 = vpack.c.b16 %v84, %v82
  %v113 = vpack.c.b16 %v85, %v83
  %v114 = vpack.c.b16 %v88, %v86
  %v115 = vpack.c.b16 %v89, %v87
  %v116 = vpack.c.b16 %v92, %v90
  %v117 = vpack.c.b16 %v93, %v91
  %v118 = vpack.c.b16 %v96, %v94
  %v119 = vpack.c.b16 %v97, %v95
  %v120 = vpack.c.b16 %v100, %v98
  %v121 = vpack.c.b16 %v101, %v99
  %v122 = vpack.c.b16 %v104, %v102
  %v123 = vpack.c.b16 %v105, %v103
  %v124 = vpack.c.b16 %v108, %v106
  %v125 = vpack.c.b16 %v109, %v107
  %v174 = vunpack.c.l.b16 %v30
  %v175 = vunpack.c.l.b16 %v31
  %v176 = vunpack.c.l.b16 %v32
  %v177 = vunpack.c.l.b16 %v33
  %v178 = vunpack.c.l.b16 %v34
  %v179 = vunpack.c.l.b16 %v35
  %v180 = vunpack.c.l.b16 %v36
  %v181 = vunpack.c.l.b16 %v37
  %v182 = vunpack.c.l.b16 %v38
  %v183 = vunpack.c.l.b16 %v39
  %v184 = vunpack.c.l.b16 %v40
  %v185 = vunpack.c.l.b16 %v41
  %v186 = vunpack.c.l.b16 %v42
  %v187 = vunpack.c.l.b16 %v43
  %v188 = vunpack.c.l.b16 %v44
  %v189 = vunpack.c.l.b16 %v45
  %v190 = vunpack.c.l.b16 %v46
  %v191 = vunpack.c.l.b16 %v47
  %v192 = vunpack.c.l.b16 %v48
  %v193 = vunpack.c.l.b16 %v49
  %v194 = vunpack.c.l.b16 %v50
  %v195 = vunpack.c.l.b16 %v51
  %v196 = vunpack.c.l.b16 %v52
  %v197 = vunpack.c.l.b16 %v53
  %v198 = vunpack.c.l.b16 %v54
  %v199 = vunpack.c.l.b16 %v55
  %v200 = vunpack.c.l.b16 %v56
  %v201 = vunpack.c.l.b16 %v57
  %v202 = vunpack.c.l.b16 %v58
  %v203 = vunpack.c.l.b16 %v59
  %v204 = vunpack.c.l.b16 %v60
  %v205 = vunpack.c.l.b16 %v61
  %v206 = vpack.c.b16 %v175, %v174
  %v207 = vpack.c.b16 %v177, %v176
  %v208 = vpack.c.b16 %v179, %v178
  %v209 = vpack.c.b16 %v181, %v180
  %v210 = vpack.c.b16 %v183, %v182
  %v211 = vpack.c.b16 %v185, %v184
  %v212 = vpack.c.b16 %v187, %v186
  %v213 = vpack.c.b16 %v189, %v188
  %v214 = vpack.c.b16 %v191, %v190
  %v215 = vpack.c.b16 %v193, %v192
  %v216 = vpack.c.b16 %v195, %v194
  %v217 = vpack.c.b16 %v197, %v196
  %v218 = vpack.c.b16 %v199, %v198
  %v219 = vpack.c.b16 %v201, %v200
  %v220 = vpack.c.b16 %v203, %v202
  %v221 = vpack.c.b16 %v205, %v204
  %238 = vmatprep.subr.bf16.mxu0 0
  %239 = vmatpush1.bf16.msra.mxu0 %v213
  %240 = vmatprep.subr.bf16.mxu0 0
  %241 = vmatpush1.bf16.msra.mxu0 %v212
  %242 = vmatprep.subr.bf16.mxu0 0
  %243 = vmatpush1.bf16.msra.mxu0 %v211
  %244 = vmatprep.subr.bf16.mxu0 0
  %245 = vmatpush1.bf16.msra.mxu0 %v210
  %246 = vmatprep.subr.bf16.mxu0 0
  %247 = vmatpush1.bf16.msra.mxu0 %v209
  %248 = vmatprep.subr.bf16.mxu0 0
  %249 = vmatpush1.bf16.msra.mxu0 %v208
  %250 = vmatprep.subr.bf16.mxu0 0
  %251 = vmatpush1.bf16.msra.mxu0 %v207
  %252 = vmatprep.subr.bf16.mxu0 0
  %253 = vmatpush1.bf16.msra.mxu0 %v206
  %254 = vmatprep.subr.bf16.mxu0 0
  %255 = vmatpush2.bf16.msra.mxu0 %v221
  %256 = vmatprep.subr.bf16.mxu0 0
  %257 = vmatpush2.bf16.msra.mxu0 %v220
  %258 = vmatprep.subr.bf16.mxu0 0
  %259 = vmatpush2.bf16.msra.mxu0 %v219
  %260 = vmatprep.subr.bf16.mxu0 0
  %261 = vmatpush2.bf16.msra.mxu0 %v218
  %262 = vmatprep.subr.bf16.mxu0 0
  %263 = vmatpush2.bf16.msra.mxu0 %v217
  %264 = vmatprep.subr.bf16.mxu0 0
  %265 = vmatpush2.bf16.msra.mxu0 %v216
  %266 = vmatprep.subr.bf16.mxu0 0
  %267 = vmatpush2.bf16.msra.mxu0 %v215
  %268 = vmatprep.subr.bf16.mxu0 0
  %269 = vmatpush2.bf16.msra.mxu0 %v214
  %270 = vmatprep.mubr.bf16.mxu0 %v111
  %271 = vmatmul.mubr.bf16.gmra.mxu0 %v110
  %v272 = vpop.f32.mrf.mxu0
  %v273 = vadd.f32 0.0, %v272
  %v274 = vpop.f32.mrf.mxu0
  %v275 = vpop.f32.mrf.mxu0
  %v276 = vadd.f32 0.0, %v275
  %v277 = vpop.f32.mrf.mxu0
  %278 = vmatprep.mubr.bf16.mxu0 %v113
  %279 = vmatmul.mubr.bf16.gmra.mxu0 %v112
  %v280 = vpop.f32.mrf.mxu0
  %v281 = vadd.f32 0.0, %v280
  %v282 = vpop.f32.mrf.mxu0
  %v283 = vpop.f32.mrf.mxu0
  %v284 = vadd.f32 0.0, %v283
  %v285 = vpop.f32.mrf.mxu0
  %286 = vmatprep.mubr.bf16.mxu0 %v115
  %287 = vmatmul.mubr.bf16.gmra.mxu0 %v114
  %v288 = vpop.f32.mrf.mxu0
  %v289 = vadd.f32 0.0, %v288
  %v290 = vpop.f32.mrf.mxu0
  %v291 = vpop.f32.mrf.mxu0
  %v292 = vadd.f32 0.0, %v291
  %v293 = vpop.f32.mrf.mxu0
  %294 = vmatprep.mubr.bf16.mxu0 %v117
  %295 = vmatmul.mubr.bf16.gmra.mxu0 %v116
  %v296 = vpop.f32.mrf.mxu0
  %v297 = vadd.f32 0.0, %v296
  %v298 = vpop.f32.mrf.mxu0
  %v299 = vpop.f32.mrf.mxu0
  %v300 = vadd.f32 0.0, %v299
  %v301 = vpop.f32.mrf.mxu0
  %302 = vmatprep.mubr.bf16.mxu0 %v119
  %303 = vmatmul.mubr.bf16.gmra.mxu0 %v118
  %v304 = vpop.f32.mrf.mxu0
  %v305 = vadd.f32 0.0, %v304
  %v306 = vpop.f32.mrf.mxu0
  %v307 = vpop.f32.mrf.mxu0
  %v308 = vadd.f32 0.0, %v307
  %v309 = vpop.f32.mrf.mxu0
  %310 = vmatprep.mubr.bf16.mxu0 %v121
  %311 = vmatmul.mubr.bf16.gmra.mxu0 %v120
  %v312 = vpop.f32.mrf.mxu0
  %v313 = vadd.f32 0.0, %v312
  %v314 = vpop.f32.mrf.mxu0
  %v315 = vpop.f32.mrf.mxu0
  %v316 = vadd.f32 0.0, %v315
  %v317 = vpop.f32.mrf.mxu0
  %318 = vmatprep.mubr.bf16.mxu0 %v123
  %319 = vmatmul.mubr.bf16.gmra.mxu0 %v122
  %v320 = vpop.f32.mrf.mxu0
  %v321 = vadd.f32 0.0, %v320
  %v322 = vpop.f32.mrf.mxu0
  %v323 = vpop.f32.mrf.mxu0
  %v324 = vadd.f32 0.0, %v323
  %v325 = vpop.f32.mrf.mxu0
  %326 = vmatprep.mubr.bf16.mxu0 %v125
  %327 = vmatmul.mubr.bf16.gmra.mxu0 %v124
  %v328 = vpop.f32.mrf.mxu0
  %v329 = vadd.f32 0.0, %v328
  %v330 = vpop.f32.mrf.mxu0
  %v331 = vpop.f32.mrf.mxu0
  %v332 = vadd.f32 0.0, %v331
  %v333 = vpop.f32.mrf.mxu0
  %334 = vdwg.mxu0
  %vm335 = vcmask 261120
  %v336 = vsel %vm335, %v273, 0.0
  %v337 = vsel %vm335, %v276, 0.0
  %v338 = vadd.f32 %v336, %v337
  %v339 = vsel %vm335, %v281, 0.0
  %v340 = vadd.f32 %v338, %v339
  %v341 = vsel %vm335, %v284, 0.0
  %v342 = vadd.f32 %v340, %v341
  %v343 = vsel %vm335, %v289, 0.0
  %v344 = vadd.f32 %v342, %v343
  %v345 = vsel %vm335, %v292, 0.0
  %v346 = vadd.f32 %v344, %v345
  %v347 = vsel %vm335, %v297, 0.0
  %v348 = vadd.f32 %v346, %v347
  %v349 = vsel %vm335, %v300, 0.0
  %v350 = vadd.f32 %v348, %v349
  %v351 = vsel %vm335, %v305, 0.0
  %v352 = vadd.f32 %v350, %v351
  %v353 = vsel %vm335, %v308, 0.0
  %v354 = vadd.f32 %v352, %v353
  %v355 = vsel %vm335, %v313, 0.0
  %v356 = vadd.f32 %v354, %v355
  %v357 = vsel %vm335, %v316, 0.0
  %v358 = vadd.f32 %v356, %v357
  %v359 = vsel %vm335, %v321, 0.0
  %v360 = vadd.f32 %v358, %v359
  %v361 = vsel %vm335, %v324, 0.0
  %v362 = vadd.f32 %v360, %v361
  %v363 = vsel %vm335, %v329, 0.0
  %v364 = vadd.f32 %v362, %v363
  %v365 = vsel %vm335, %v332, 0.0
  %v366 = vadd.f32 %v364, %v365
  %v367 = vrot.slane %v366, 4
  %v368 = vadd.f32 %v366, %v367
  %v369 = vrot.slane %v368, 2
  %v370 = vadd.f32 %v368, %v369
  %v371 = vrot.slane %v370, 1
  %v372 = vadd.f32 %v370, %v371
  %v373 = vmul.f32 %v273, %v273
  %v374 = vmul.f32 %v276, %v276
  %v375 = vmul.f32 %v281, %v281
  %v376 = vmul.f32 %v284, %v284
  %v377 = vmul.f32 %v289, %v289
  %v378 = vmul.f32 %v292, %v292
  %v379 = vmul.f32 %v297, %v297
  %v380 = vmul.f32 %v300, %v300
  %v381 = vmul.f32 %v305, %v305
  %v382 = vmul.f32 %v308, %v308
  %v383 = vmul.f32 %v313, %v313
  %v384 = vmul.f32 %v316, %v316
  %v385 = vmul.f32 %v321, %v321
  %v386 = vmul.f32 %v324, %v324
  %v387 = vmul.f32 %v329, %v329
  %v388 = vmul.f32 %v332, %v332
  %v389 = vsel %vm335, %v373, 0.0
  %v390 = vsel %vm335, %v374, 0.0
  %v391 = vadd.f32 %v389, %v390
  %v392 = vsel %vm335, %v375, 0.0
  %v393 = vadd.f32 %v391, %v392
  %v394 = vsel %vm335, %v376, 0.0
  %v395 = vadd.f32 %v393, %v394
  %v396 = vsel %vm335, %v377, 0.0
  %v397 = vadd.f32 %v395, %v396
  %v398 = vsel %vm335, %v378, 0.0
  %v399 = vadd.f32 %v397, %v398
  %v400 = vsel %vm335, %v379, 0.0
  %v401 = vadd.f32 %v399, %v400
  %v402 = vsel %vm335, %v380, 0.0
  %v403 = vadd.f32 %v401, %v402
  %v404 = vsel %vm335, %v381, 0.0
  %v405 = vadd.f32 %v403, %v404
  %v406 = vsel %vm335, %v382, 0.0
  %v407 = vadd.f32 %v405, %v406
  %v408 = vsel %vm335, %v383, 0.0
  %v409 = vadd.f32 %v407, %v408
  %v410 = vsel %vm335, %v384, 0.0
  %v411 = vadd.f32 %v409, %v410
  %v412 = vsel %vm335, %v385, 0.0
  %v413 = vadd.f32 %v411, %v412
  %v414 = vsel %vm335, %v386, 0.0
  %v415 = vadd.f32 %v413, %v414
  %v416 = vsel %vm335, %v387, 0.0
  %v417 = vadd.f32 %v415, %v416
  %v418 = vsel %vm335, %v388, 0.0
  %v419 = vadd.f32 %v417, %v418
  %v420 = vrot.slane %v419, 4
  %v421 = vadd.f32 %v419, %v420
  %v422 = vrot.slane %v421, 2
  %v423 = vadd.f32 %v421, %v422
  %v424 = vrot.slane %v423, 1
  %v425 = vadd.f32 %v423, %v424
  %vm426 = vcmask 1040384
  %v427 = vsel %vm426, %v372, %v425
  %vm428 = vcmask 254976
  %429 = vst.msk [vmem:[%s3] sm:$0x3] %vm428, %v427
  %v430 = vpack.c.bf16 %v276, %v273
  %v431 = vpack.c.bf16 %v284, %v281
  %v432 = vpack.c.bf16 %v292, %v289
  %v433 = vpack.c.bf16 %v300, %v297
  %v434 = vpack.c.bf16 %v308, %v305
  %v435 = vpack.c.bf16 %v316, %v313
  %v436 = vpack.c.bf16 %v324, %v321
  %v437 = vpack.c.bf16 %v332, %v329
  %v446 = vunpack.c.l.b16 %v430
  %v447 = vunpack.c.h.b16 %v430
  %v448 = vunpack.c.l.b16 %v431
  %v449 = vunpack.c.h.b16 %v431
  %v450 = vunpack.c.l.b16 %v432
  %v451 = vunpack.c.h.b16 %v432
  %v452 = vunpack.c.l.b16 %v433
  %v453 = vunpack.c.h.b16 %v433
  %v454 = vunpack.c.l.b16 %v434
  %v455 = vunpack.c.h.b16 %v434
  %v456 = vunpack.c.l.b16 %v435
  %v457 = vunpack.c.h.b16 %v435
  %v458 = vunpack.c.l.b16 %v436
  %v459 = vunpack.c.h.b16 %v436
  %v460 = vunpack.c.l.b16 %v437
  %v461 = vunpack.c.h.b16 %v437
  %v462 = vpack.c.b16 %v446, %v446
  %v463 = vpack.c.b16 %v447, %v447
  %v464 = vpack.c.b16 %v448, %v448
  %v465 = vpack.c.b16 %v449, %v449
  %v466 = vpack.c.b16 %v450, %v450
  %v467 = vpack.c.b16 %v451, %v451
  %v468 = vpack.c.b16 %v452, %v452
  %v469 = vpack.c.b16 %v453, %v453
  %v470 = vpack.c.b16 %v454, %v454
  %v471 = vpack.c.b16 %v455, %v455
  %v472 = vpack.c.b16 %v456, %v456
  %v473 = vpack.c.b16 %v457, %v457
  %v474 = vpack.c.b16 %v458, %v458
  %v475 = vpack.c.b16 %v459, %v459
  %v476 = vpack.c.b16 %v460, %v460
  %v477 = vpack.c.b16 %v461, %v461
  %vm494 = vcmask 257024
  %495 = vst.msk [vmem:[%s2] sm:$0xf] %vm494, %v462
  %496 = vst.msk [vmem:[%s2 + $0x4] sm:$0xf] %vm494, %v463
  %497 = vst.msk [vmem:[%s2 + $0x8] sm:$0xf] %vm494, %v464
  %498 = vst.msk [vmem:[%s2 + $0xc] sm:$0xf] %vm494, %v465
  %499 = vst.msk [vmem:[%s2 + $0x10] sm:$0xf] %vm494, %v466
  %500 = vst.msk [vmem:[%s2 + $0x14] sm:$0xf] %vm494, %v467
  %501 = vst.msk [vmem:[%s2 + $0x18] sm:$0xf] %vm494, %v468
  %502 = vst.msk [vmem:[%s2 + $0x1c] sm:$0xf] %vm494, %v469
  %503 = vst.msk [vmem:[%s2 + $0x20] sm:$0xf] %vm494, %v470
  %504 = vst.msk [vmem:[%s2 + $0x24] sm:$0xf] %vm494, %v471
  %505 = vst.msk [vmem:[%s2 + $0x28] sm:$0xf] %vm494, %v472
  %506 = vst.msk [vmem:[%s2 + $0x2c] sm:$0xf] %vm494, %v473
  %507 = vst.msk [vmem:[%s2 + $0x30] sm:$0xf] %vm494, %v474
  %508 = vst.msk [vmem:[%s2 + $0x34] sm:$0xf] %vm494, %v475
  %509 = vst.msk [vmem:[%s2 + $0x38] sm:$0xf] %vm494, %v476
  %510 = vst.msk [vmem:[%s2 + $0x3c] sm:$0xf] %vm494, %v477
  // Predicated region
  $region10: #{discriminator_forward.10} parent=0 // pred_check
    _
  $region11: #{discriminator_forward.10} parent=0 // pred_check_branch
    %512 = sbr.rel (0) target = $region13
  $region12: #{discriminator_forward.10} parent=0 // pred_region
    _
  $region13: #{discriminator_forward.10} parent=0 // pred_fallthru
    _
  // Predicated region
  $region14: #{discriminator_forward.10} parent=0 // pred_check
    _
  $region15: #{discriminator_forward.10} parent=0 // pred_check_branch
    %514 = sbr.rel (0) target = $region17
  $region16: #{discriminator_forward.10} parent=0 // pred_region
    _
  $region17: #{discriminator_forward.10} parent=0 // pred_fallthru
    _
  // Predicated region
  $region18: #{discriminator_forward.10} parent=0 // pred_check
    _
  $region19: #{discriminator_forward.10} parent=0 // pred_check_branch
    %516 = sbr.rel (0) target = $region21
  $region20: #{discriminator_forward.10} parent=0 // pred_region
    _
  $region21: #{discriminator_forward.10} parent=0 // pred_fallthru
    _
  // Predicated region
  $region22: #{discriminator_forward.10} parent=0 // pred_check
    _
  $region23: #{discriminator_forward.10} parent=0 // pred_check_branch
    %518 = sbr.rel (0) target = $region25
  $region24: #{discriminator_forward.10} parent=0 // pred_region
    _
  $region25: #{discriminator_forward.10} parent=0 // pred_fallthru
    _

// kernel: discriminator_forward.11
$region0: #{discriminator_forward.11}
  #allocation0 [shape = 'u32[]', space=smem, size = 0x4, offset = 0x4, fixed_abs, tag = 'smem constant byte address 0x4 - core index']
  #allocation1 [shape = 'u32[144,128]{1,0:T(1,128)}', space=vmem, size = 0x12000, scoped, tag = 'internal scratch']
  %s0 = inlined_call_operand.vmem [shape: bf16[128,32], index: 0, kind: input, shape index: {}]
  %s1 = inlined_call_operand.vmem [shape: f32[1,32], index: 1, kind: input, shape index: {}]
  %s2 = inlined_call_operand.vmem [shape: f32[1,32], index: 2, kind: input, shape index: {}]
  %s3 = inlined_call_operand.vmem [shape: bf16[128,32], index: 3, kind: output, shape index: {}]
  %s4 = sld [smem:[#allocation0]]
  $region22: #{discriminator_forward.11} parent=0
    _
  %s6 = ssub.s32 1, %s4
  %s7 = scalar_select 0, %s6, %s4
  // Predicated region
  $region2: #{discriminator_forward.11} parent=0 // pred_check
    _
  $region3: #{discriminator_forward.11} parent=0 // pred_check_branch
    %9 = sbr.rel (0) target = $region5
  $region4: #{discriminator_forward.11} parent=0 // pred_region
    _
  $region5: #{discriminator_forward.11} parent=0 // pred_fallthru
    _
  // Predicated region
  $region6: #{discriminator_forward.11} parent=0 // pred_check
    _
  $region7: #{discriminator_forward.11} parent=0 // pred_check_branch
    %11 = sbr.rel (0) target = $region9
  $region8: #{discriminator_forward.11} parent=0 // pred_region
    _
  $region9: #{discriminator_forward.11} parent=0 // pred_fallthru
    _
  // Predicated region
  $region10: #{discriminator_forward.11} parent=0 // pred_check
    _
  $region11: #{discriminator_forward.11} parent=0 // pred_check_branch
    %13 = sbr.rel (0) target = $region13
  $region12: #{discriminator_forward.11} parent=0 // pred_region
    _
  $region13: #{discriminator_forward.11} parent=0 // pred_fallthru
    _
  %v14 = vld [vmem:[%s0] sm:$0xf]
  %v15 = vld [vmem:[%s0 + $0x4] sm:$0xf]
  %v16 = vld [vmem:[%s0 + $0x8] sm:$0xf]
  %v17 = vld [vmem:[%s0 + $0xc] sm:$0xf]
  %v18 = vld [vmem:[%s0 + $0x10] sm:$0xf]
  %v19 = vld [vmem:[%s0 + $0x14] sm:$0xf]
  %v20 = vld [vmem:[%s0 + $0x18] sm:$0xf]
  %v21 = vld [vmem:[%s0 + $0x1c] sm:$0xf]
  %v22 = vld [vmem:[%s0 + $0x20] sm:$0xf]
  %v23 = vld [vmem:[%s0 + $0x24] sm:$0xf]
  %v24 = vld [vmem:[%s0 + $0x28] sm:$0xf]
  %v25 = vld [vmem:[%s0 + $0x2c] sm:$0xf]
  %v26 = vld [vmem:[%s0 + $0x30] sm:$0xf]
  %v27 = vld [vmem:[%s0 + $0x34] sm:$0xf]
  %v28 = vld [vmem:[%s0 + $0x38] sm:$0xf]
  %v29 = vld [vmem:[%s0 + $0x3c] sm:$0xf]
  %v30 = vunpack.c.l.bf16 %v14
  %v31 = vunpack.c.l.bf16 %v15
  %v32 = vunpack.c.l.bf16 %v16
  %v33 = vunpack.c.l.bf16 %v17
  %v34 = vunpack.c.l.bf16 %v18
  %v35 = vunpack.c.l.bf16 %v19
  %v36 = vunpack.c.l.bf16 %v20
  %v37 = vunpack.c.l.bf16 %v21
  %v38 = vunpack.c.l.bf16 %v22
  %v39 = vunpack.c.l.bf16 %v23
  %v40 = vunpack.c.l.bf16 %v24
  %v41 = vunpack.c.l.bf16 %v25
  %v42 = vunpack.c.l.bf16 %v26
  %v43 = vunpack.c.l.bf16 %v27
  %v44 = vunpack.c.l.bf16 %v28
  %v45 = vunpack.c.l.bf16 %v29
  %v46 = vld [vmem:[%s1] sm:$0x1]
  %v48 = vlaneseq
  %v49 = vshrl.u32 %v48, 7
  %v50 = vsub.s32 0, %v49
  %v51 = vrot.slane %v46, %v50
  %v53 = vmul.f32 %v30, %v51
  %v54 = vmul.f32 %v31, %v51
  %v55 = vmul.f32 %v32, %v51
  %v56 = vmul.f32 %v33, %v51
  %v57 = vmul.f32 %v34, %v51
  %v58 = vmul.f32 %v35, %v51
  %v59 = vmul.f32 %v36, %v51
  %v60 = vmul.f32 %v37, %v51
  %v61 = vmul.f32 %v38, %v51
  %v62 = vmul.f32 %v39, %v51
  %v63 = vmul.f32 %v40, %v51
  %v64 = vmul.f32 %v41, %v51
  %v65 = vmul.f32 %v42, %v51
  %v66 = vmul.f32 %v43, %v51
  %v67 = vmul.f32 %v44, %v51
  %v68 = vmul.f32 %v45, %v51
  %v69 = vld [vmem:[%s2] sm:$0x1]
  %v71 = vlaneseq
  %v72 = vshrl.u32 %v71, 7
  %v73 = vsub.s32 0, %v72
  %v74 = vrot.slane %v69, %v73
  %v76 = vadd.f32 %v53, %v74
  %v77 = vadd.f32 %v54, %v74
  %v78 = vadd.f32 %v55, %v74
  %v79 = vadd.f32 %v56, %v74
  %v80 = vadd.f32 %v57, %v74
  %v81 = vadd.f32 %v58, %v74
  %v82 = vadd.f32 %v59, %v74
  %v83 = vadd.f32 %v60, %v74
  %v84 = vadd.f32 %v61, %v74
  %v85 = vadd.f32 %v62, %v74
  %v86 = vadd.f32 %v63, %v74
  %v87 = vadd.f32 %v64, %v74
  %v88 = vadd.f32 %v65, %v74
  %v89 = vadd.f32 %v66, %v74
  %v90 = vadd.f32 %v67, %v74
  %v91 = vadd.f32 %v68, %v74
  %vm92 = vcmp.gt.f32.partialorder %v76, 0.0
  %vm93 = vcmp.gt.f32.partialorder %v77, 0.0
  %vm94 = vcmp.gt.f32.partialorder %v78, 0.0
  %vm95 = vcmp.gt.f32.partialorder %v79, 0.0
  %vm96 = vcmp.gt.f32.partialorder %v80, 0.0
  %vm97 = vcmp.gt.f32.partialorder %v81, 0.0
  %vm98 = vcmp.gt.f32.partialorder %v82, 0.0
  %vm99 = vcmp.gt.f32.partialorder %v83, 0.0
  %vm100 = vcmp.gt.f32.partialorder %v84, 0.0
  %vm101 = vcmp.gt.f32.partialorder %v85, 0.0
  %vm102 = vcmp.gt.f32.partialorder %v86, 0.0
  %vm103 = vcmp.gt.f32.partialorder %v87, 0.0
  %vm104 = vcmp.gt.f32.partialorder %v88, 0.0
  %vm105 = vcmp.gt.f32.partialorder %v89, 0.0
  %vm106 = vcmp.gt.f32.partialorder %v90, 0.0
  %vm107 = vcmp.gt.f32.partialorder %v91, 0.0
  %v108 = vmul.f32 %v76, 0.2
  %v109 = vmul.f32 %v77, 0.2
  %v110 = vmul.f32 %v78, 0.2
  %v111 = vmul.f32 %v79, 0.2
  %v112 = vmul.f32 %v80, 0.2
  %v113 = vmul.f32 %v81, 0.2
  %v114 = vmul.f32 %v82, 0.2
  %v115 = vmul.f32 %v83, 0.2
  %v116 = vmul.f32 %v84, 0.2
  %v117 = vmul.f32 %v85, 0.2
  %v118 = vmul.f32 %v86, 0.2
  %v119 = vmul.f32 %v87, 0.2
  %v120 = vmul.f32 %v88, 0.2
  %v121 = vmul.f32 %v89, 0.2
  %v122 = vmul.f32 %v90, 0.2
  %v123 = vmul.f32 %v91, 0.2
  %v124 = vsel %vm92, %v76, %v108
  %v125 = vsel %vm93, %v77, %v109
  %v126 = vsel %vm94, %v78, %v110
  %v127 = vsel %vm95, %v79, %v111
  %v128 = vsel %vm96, %v80, %v112
  %v129 = vsel %vm97, %v81, %v113
  %v130 = vsel %vm98, %v82, %v114
  %v131 = vsel %vm99, %v83, %v115
  %v132 = vsel %vm100, %v84, %v116
  %v133 = vsel %vm101, %v85, %v117
  %v134 = vsel %vm102, %v86, %v118
  %v135 = vsel %vm103, %v87, %v119
  %v136 = vsel %vm104, %v88, %v120
  %v137 = vsel %vm105, %v89, %v121
  %v138 = vsel %vm106, %v90, %v122
  %v139 = vsel %vm107, %v91, %v123
  %v140 = vpack.c.bf16 %v125, %v124
  %v141 = vpack.c.bf16 %v127, %v126
  %v142 = vpack.c.bf16 %v129, %v128
  %v143 = vpack.c.bf16 %v131, %v130
  %v144 = vpack.c.bf16 %v133, %v132
  %v145 = vpack.c.bf16 %v135, %v134
  %v146 = vpack.c.bf16 %v137, %v136
  %v147 = vpack.c.bf16 %v139, %v138
  %v156 = vunpack.c.l.b16 %v140
  %v157 = vunpack.c.h.b16 %v140
  %v158 = vunpack.c.l.b16 %v141
  %v159 = vunpack.c.h.b16 %v141
  %v160 = vunpack.c.l.b16 %v142
  %v161 = vunpack.c.h.b16 %v142
  %v162 = vunpack.c.l.b16 %v143
  %v163 = vunpack.c.h.b16 %v143
  %v164 = vunpack.c.l.b16 %v144
  %v165 = vunpack.c.h.b16 %v144
  %v166 = vunpack.c.l.b16 %v145
  %v167 = vunpack.c.h.b16 %v145
  %v168 = vunpack.c.l.b16 %v146
  %v169 = vunpack.c.h.b16 %v146
  %v170 = vunpack.c.l.b16 %v147
  %v171 = vunpack.c.h.b16 %v147
  %v172 = vpack.c.b16 %v156, %v156
  %v173 = vpack.c.b16 %v157, %v157
  %v174 = vpack.c.b16 %v158, %v158
  %v175 = vpack.c.b16 %v159, %v159
  %v176 = vpack.c.b16 %v160, %v160
  %v177 = vpack.c.b16 %v161, %v161
  %v178 = vpack.c.b16 %v162, %v162
  %v179 = vpack.c.b16 %v163, %v163
  %v180 = vpack.c.b16 %v164, %v164
  %v181 = vpack.c.b16 %v165, %v165
  %v182 = vpack.c.b16 %v166, %v166
  %v183 = vpack.c.b16 %v167, %v167
  %v184 = vpack.c.b16 %v168, %v168
  %v185 = vpack.c.b16 %v169, %v169
  %v186 = vpack.c.b16 %v170, %v170
  %v187 = vpack.c.b16 %v171, %v171
  %vm204 = vcmask 257024
  %205 = vst.msk [vmem:[%s3] sm:$0xf] %vm204, %v172
  %206 = vst.msk [vmem:[%s3 + $0x4] sm:$0xf] %vm204, %v173
  %207 = vst.msk [vmem:[%s3 + $0x8] sm:$0xf] %vm204, %v174
  %208 = vst.msk [vmem:[%s3 + $0xc] sm:$0xf] %vm204, %v175
  %209 = vst.msk [vmem:[%s3 + $0x10] sm:$0xf] %vm204, %v176
  %210 = vst.msk [vmem:[%s3 + $0x14] sm:$0xf] %vm204, %v177
  %211 = vst.msk [vmem:[%s3 + $0x18] sm:$0xf] %vm204, %v178
  %212 = vst.msk [vmem:[%s3 + $0x1c] sm:$0xf] %vm204, %v179
  %213 = vst.msk [vmem:[%s3 + $0x20] sm:$0xf] %vm204, %v180
  %214 = vst.msk [vmem:[%s3 + $0x24] sm:$0xf] %vm204, %v181
  %215 = vst.msk [vmem:[%s3 + $0x28] sm:$0xf] %vm204, %v182
  %216 = vst.msk [vmem:[%s3 + $0x2c] sm:$0xf] %vm204, %v183
  %217 = vst.msk [vmem:[%s3 + $0x30] sm:$0xf] %vm204, %v184
  %218 = vst.msk [vmem:[%s3 + $0x34] sm:$0xf] %vm204, %v185
  %219 = vst.msk [vmem:[%s3 + $0x38] sm:$0xf] %vm204, %v186
  %220 = vst.msk [vmem:[%s3 + $0x3c] sm:$0xf] %vm204, %v187
  // Predicated region
  $region14: #{discriminator_forward.11} parent=0 // pred_check
    _
  $region15: #{discriminator_forward.11} parent=0 // pred_check_branch
    %222 = sbr.rel (0) target = $region17
  $region16: #{discriminator_forward.11} parent=0 // pred_region
    _
  $region17: #{discriminator_forward.11} parent=0 // pred_fallthru
    _
  // Predicated region
  $region18: #{discriminator_forward.11} parent=0 // pred_check
    _
  $region19: #{discriminator_forward.11} parent=0 // pred_check_branch
    %224 = sbr.rel (0) target = $region21
  $region20: #{discriminator_forward.11} parent=0 // pred_region
    _
  $region21: #{discriminator_forward.11} parent=0 // pred_fallthru
    _

// kernel: discriminator_forward.12
$region0: #{discriminator_forward.12}
  #allocation0 [shape = 'u32[]', space=smem, size = 0x4, offset = 0x4, fixed_abs, tag = 'smem constant byte address 0x4 - core index']
  #allocation1 [shape = 'u32[144,128]{1,0:T(1,128)}', space=vmem, size = 0x12000, scoped, tag = 'internal scratch']
  %s0 = inlined_call_operand.vmem [shape: bf16[32,512], index: 0, kind: input, shape index: {}]
  %s1 = inlined_call_operand.vmem [shape: bf16[512,64], index: 1, kind: input, shape index: {}]
  %s2 = inlined_call_operand.vmem [shape: bf16[32,64], index: 2, kind: output, shape index: {0}]
  %s3 = inlined_call_operand.vmem [shape: f32[1,2,64], index: 3, kind: output, shape index: {1}]
  %4 = xla_tuple %s2, %s3
  %s5 = sld [smem:[#allocation0]]
  $region26: #{discriminator_forward.12} parent=0
    _
  %s7 = ssub.s32 1, %s5
  %s8 = scalar_select 0, %s7, %s5
  // Predicated region
  $region2: #{discriminator_forward.12} parent=0 // pred_check
    _
  $region3: #{discriminator_forward.12} parent=0 // pred_check_branch
    %10 = sbr.rel (0) target = $region5
  $region4: #{discriminator_forward.12} parent=0 // pred_region
    _
  $region5: #{discriminator_forward.12} parent=0 // pred_fallthru
    _
  // Predicated region
  $region6: #{discriminator_forward.12} parent=0 // pred_check
    _
  $region7: #{discriminator_forward.12} parent=0 // pred_check_branch
    %12 = sbr.rel (0) target = $region9
  $region8: #{discriminator_forward.12} parent=0 // pred_region
    _
  $region9: #{discriminator_forward.12} parent=0 // pred_fallthru
    _
  %v14 = vld [vmem:[%s0] sm:$0xff]
  %v15 = vld [vmem:[%s0 + $0x8] sm:$0xff]
  %v16 = vld [vmem:[%s0 + $0x10] sm:$0xff]
  %v17 = vld [vmem:[%s0 + $0x18] sm:$0xff]
  %v18 = vld [vmem:[%s0 + $0x20] sm:$0xff]
  %v19 = vld [vmem:[%s0 + $0x28] sm:$0xff]
  %v20 = vld [vmem:[%s0 + $0x30] sm:$0xff]
  %v21 = vld [vmem:[%s0 + $0x38] sm:$0xff]
  %v22 = vld [vmem:[%s1] sm:$0xf]
  %v23 = vld [vmem:[%s1 + $0x4] sm:$0xf]
  %v24 = vld [vmem:[%s1 + $0x8] sm:$0xf]
  %v25 = vld [vmem:[%s1 + $0xc] sm:$0xf]
  %v26 = vld [vmem:[%s1 + $0x10] sm:$0xf]
  %v27 = vld [vmem:[%s1 + $0x14] sm:$0xf]
  %v28 = vld [vmem:[%s1 + $0x18] sm:$0xf]
  %v29 = vld [vmem:[%s1 + $0x1c] sm:$0xf]
  %v30 = vld [vmem:[%s1 + $0x20] sm:$0xf]
  %v31 = vld [vmem:[%s1 + $0x24] sm:$0xf]
  %v32 = vld [vmem:[%s1 + $0x28] sm:$0xf]
  %v33 = vld [vmem:[%s1 + $0x2c] sm:$0xf]
  %v34 = vld [vmem:[%s1 + $0x30] sm:$0xf]
  %v35 = vld [vmem:[%s1 + $0x34] sm:$0xf]
  %v36 = vld [vmem:[%s1 + $0x38] sm:$0xf]
  %v37 = vld [vmem:[%s1 + $0x3c] sm:$0xf]
  %v38 = vld [vmem:[%s1 + $0x40] sm:$0xf]
  %v39 = vld [vmem:[%s1 + $0x44] sm:$0xf]
  %v40 = vld [vmem:[%s1 + $0x48] sm:$0xf]
  %v41 = vld [vmem:[%s1 + $0x4c] sm:$0xf]
  %v42 = vld [vmem:[%s1 + $0x50] sm:$0xf]
  %v43 = vld [vmem:[%s1 + $0x54] sm:$0xf]
  %v44 = vld [vmem:[%s1 + $0x58] sm:$0xf]
  %v45 = vld [vmem:[%s1 + $0x5c] sm:$0xf]
  %v46 = vld [vmem:[%s1 + $0x60] sm:$0xf]
  %v47 = vld [vmem:[%s1 + $0x64] sm:$0xf]
  %v48 = vld [vmem:[%s1 + $0x68] sm:$0xf]
  %v49 = vld [vmem:[%s1 + $0x6c] sm:$0xf]
  %v50 = vld [vmem:[%s1 + $0x70] sm:$0xf]
  %v51 = vld [vmem:[%s1 + $0x74] sm:$0xf]
  %v52 = vld [vmem:[%s1 + $0x78] sm:$0xf]
  %v53 = vld [vmem:[%s1 + $0x7c] sm:$0xf]
  %v54 = vld [vmem:[%s1 + $0x80] sm:$0xf]
  %v55 = vld [vmem:[%s1 + $0x84] sm:$0xf]
  %v56 = vld [vmem:[%s1 + $0x88] sm:$0xf]
  %v57 = vld [vmem:[%s1 + $0x8c] sm:$0xf]
  %v58 = vld [vmem:[%s1 + $0x90] sm:$0xf]
  %v59 = vld [vmem:[%s1 + $0x94] sm:$0xf]
  %v60 = vld [vmem:[%s1 + $0x98] sm:$0xf]
  %v61 = vld [vmem:[%s1 + $0x9c] sm:$0xf]
  %v62 = vld [vmem:[%s1 + $0xa0] sm:$0xf]
  %v63 = vld [vmem:[%s1 + $0xa4] sm:$0xf]
  %v64 = vld [vmem:[%s1 + $0xa8] sm:$0xf]
  %v65 = vld [vmem:[%s1 + $0xac] sm:$0xf]
  %v66 = vld [vmem:[%s1 + $0xb0] sm:$0xf]
  %v67 = vld [vmem:[%s1 + $0xb4] sm:$0xf]
  %v68 = vld [vmem:[%s1 + $0xb8] sm:$0xf]
  %v69 = vld [vmem:[%s1 + $0xbc] sm:$0xf]
  %v70 = vld [vmem:[%s1 + $0xc0] sm:$0xf]
  %v71 = vld [vmem:[%s1 + $0xc4] sm:$0xf]
  %v72 = vld [vmem:[%s1 + $0xc8] sm:$0xf]
  %v73 = vld [vmem:[%s1 + $0xcc] sm:$0xf]
  %v74 = vld [vmem:[%s1 + $0xd0] sm:$0xf]
  %v75 = vld [vmem:[%s1 + $0xd4] sm:$0xf]
  %v76 = vld [vmem:[%s1 + $0xd8] sm:$0xf]
  %v77 = vld [vmem:[%s1 + $0xdc] sm:$0xf]
  %v78 = vld [vmem:[%s1 + $0xe0] sm:$0xf]
  %v79 = vld [vmem:[%s1 + $0xe4] sm:$0xf]
  %v80 = vld [vmem:[%s1 + $0xe8] sm:$0xf]
  %v81 = vld [vmem:[%s1 + $0xec] sm:$0xf]
  %v82 = vld [vmem:[%s1 + $0xf0] sm:$0xf]
  %v83 = vld [vmem:[%s1 + $0xf4] sm:$0xf]
  %v84 = vld [vmem:[%s1 + $0xf8] sm:$0xf]
  %v85 = vld [vmem:[%s1 + $0xfc] sm:$0xf]
  %v94 = vunpack.c.l.b16 %v14
  %v95 = vunpack.c.h.b16 %v14
  %v96 = vunpack.c.l.b16 %v15
  %v97 = vunpack.c.h.b16 %v15
  %v98 = vunpack.c.l.b16 %v16
  %v99 = vunpack.c.h.b16 %v16
  %v100 = vunpack.c.l.b16 %v17
  %v101 = vunpack.c.h.b16 %v17
  %v102 = vunpack.c.l.b16 %v18
  %v103 = vunpack.c.h.b16 %v18
  %v104 = vunpack.c.l.b16 %v19
  %v105 = vunpack.c.h.b16 %v19
  %v106 = vunpack.c.l.b16 %v20
  %v107 = vunpack.c.h.b16 %v20
  %v108 = vunpack.c.l.b16 %v21
  %v109 = vunpack.c.h.b16 %v21
  %v110 = vpack.c.b16 %v98, %v94
  %v111 = vpack.c.b16 %v99, %v95
  %v112 = vpack.c.b16 %v100, %v96
  %v113 = vpack.c.b16 %v101, %v97
  %v114 = vpack.c.b16 %v106, %v102
  %v115 = vpack.c.b16 %v107, %v103
  %v116 = vpack.c.b16 %v108, %v104
  %v117 = vpack.c.b16 %v109, %v105
  %v190 = vunpack.c.l.b16 %v22
  %v191 = vunpack.c.l.b16 %v23
  %v192 = vunpack.c.l.b16 %v24
  %v193 = vunpack.c.l.b16 %v25
  %v194 = vunpack.c.l.b16 %v26
  %v195 = vunpack.c.l.b16 %v27
  %v196 = vunpack.c.l.b16 %v28
  %v197 = vunpack.c.l.b16 %v29
  %v198 = vunpack.c.l.b16 %v30
  %v199 = vunpack.c.l.b16 %v31
  %v200 = vunpack.c.l.b16 %v32
  %v201 = vunpack.c.l.b16 %v33
  %v202 = vunpack.c.l.b16 %v34
  %v203 = vunpack.c.l.b16 %v35
  %v204 = vunpack.c.l.b16 %v36
  %v205 = vunpack.c.l.b16 %v37
  %v206 = vunpack.c.l.b16 %v38
  %v207 = vunpack.c.l.b16 %v39
  %v208 = vunpack.c.l.b16 %v40
  %v209 = vunpack.c.l.b16 %v41
  %v210 = vunpack.c.l.b16 %v42
  %v211 = vunpack.c.l.b16 %v43
  %v212 = vunpack.c.l.b16 %v44
  %v213 = vunpack.c.l.b16 %v45
  %v214 = vunpack.c.l.b16 %v46
  %v215 = vunpack.c.l.b16 %v47
  %v216 = vunpack.c.l.b16 %v48
  %v217 = vunpack.c.l.b16 %v49
  %v218 = vunpack.c.l.b16 %v50
  %v219 = vunpack.c.l.b16 %v51
  %v220 = vunpack.c.l.b16 %v52
  %v221 = vunpack.c.l.b16 %v53
  %v222 = vunpack.c.l.b16 %v54
  %v223 = vunpack.c.l.b16 %v55
  %v224 = vunpack.c.l.b16 %v56
  %v225 = vunpack.c.l.b16 %v57
  %v226 = vunpack.c.l.b16 %v58
  %v227 = vunpack.c.l.b16 %v59
  %v228 = vunpack.c.l.b16 %v60
  %v229 = vunpack.c.l.b16 %v61
  %v230 = vunpack.c.l.b16 %v62
  %v231 = vunpack.c.l.b16 %v63
  %v232 = vunpack.c.l.b16 %v64
  %v233 = vunpack.c.l.b16 %v65
  %v234 = vunpack.c.l.b16 %v66
  %v235 = vunpack.c.l.b16 %v67
  %v236 = vunpack.c.l.b16 %v68
  %v237 = vunpack.c.l.b16 %v69
  %v238 = vunpack.c.l.b16 %v70
  %v239 = vunpack.c.l.b16 %v71
  %v240 = vunpack.c.l.b16 %v72
  %v241 = vunpack.c.l.b16 %v73
  %v242 = vunpack.c.l.b16 %v74
  %v243 = vunpack.c.l.b16 %v75
  %v244 = vunpack.c.l.b16 %v76
  %v245 = vunpack.c.l.b16 %v77
  %v246 = vunpack.c.l.b16 %v78
  %v247 = vunpack.c.l.b16 %v79
  %v248 = vunpack.c.l.b16 %v80
  %v249 = vunpack.c.l.b16 %v81
  %v250 = vunpack.c.l.b16 %v82
  %v251 = vunpack.c.l.b16 %v83
  %v252 = vunpack.c.l.b16 %v84
  %v253 = vunpack.c.l.b16 %v85
  %v254 = vpack.c.b16 %v191, %v190
  %v255 = vpack.c.b16 %v193, %v192
  %v256 = vpack.c.b16 %v195, %v194
  %v257 = vpack.c.b16 %v197, %v196
  %v258 = vpack.c.b16 %v199, %v198
  %v259 = vpack.c.b16 %v201, %v200
  %v260 = vpack.c.b16 %v203, %v202
  %v261 = vpack.c.b16 %v205, %v204
  %v262 = vpack.c.b16 %v207, %v206
  %v263 = vpack.c.b16 %v209, %v208
  %v264 = vpack.c.b16 %v211, %v210
  %v265 = vpack.c.b16 %v213, %v212
  %v266 = vpack.c.b16 %v215, %v214
  %v267 = vpack.c.b16 %v217, %v216
  %v268 = vpack.c.b16 %v219, %v218
  %v269 = vpack.c.b16 %v221, %v220
  %v270 = vpack.c.b16 %v223, %v222
  %v271 = vpack.c.b16 %v225, %v224
  %v272 = vpack.c.b16 %v227, %v226
  %v273 = vpack.c.b16 %v229, %v228
  %v274 = vpack.c.b16 %v231, %v230
  %v275 = vpack.c.b16 %v233, %v232
  %v276 = vpack.c.b16 %v235, %v234
  %v277 = vpack.c.b16 %v237, %v236
  %v278 = vpack.c.b16 %v239, %v238
  %v279 = vpack.c.b16 %v241, %v240
  %v280 = vpack.c.b16 %v243, %v242
  %v281 = vpack.c.b16 %v245, %v244
  %v282 = vpack.c.b16 %v247, %v246
  %v283 = vpack.c.b16 %v249, %v248
  %v284 = vpack.c.b16 %v251, %v250
  %v285 = vpack.c.b16 %v253, %v252
  %318 = vmatprep.subr.bf16.mxu0 0
  %319 = vmatpush1.bf16.msra.mxu0 %v261
  %320 = vmatprep.subr.bf16.mxu0 0
  %321 = vmatpush1.bf16.msra.mxu0 %v260
  %322 = vmatprep.subr.bf16.mxu0 0
  %323 = vmatpush1.bf16.msra.mxu0 %v259
  %324 = vmatprep.subr.bf16.mxu0 0
  %325 = vmatpush1.bf16.msra.mxu0 %v258
  %326 = vmatprep.subr.bf16.mxu0 0
  %327 = vmatpush1.bf16.msra.mxu0 %v257
  %328 = vmatprep.subr.bf16.mxu0 0
  %329 = vmatpush1.bf16.msra.mxu0 %v256
  %330 = vmatprep.subr.bf16.mxu0 0
  %331 = vmatpush1.bf16.msra.mxu0 %v255
  %332 = vmatprep.subr.bf16.mxu0 0
  %333 = vmatpush1.bf16.msra.mxu0 %v254
  %334 = vmatprep.subr.bf16.mxu0 0
  %335 = vmatpush2.bf16.msra.mxu0 %v269
  %336 = vmatprep.subr.bf16.mxu0 0
  %337 = vmatpush2.bf16.msra.mxu0 %v268
  %338 = vmatprep.subr.bf16.mxu0 0
  %339 = vmatpush2.bf16.msra.mxu0 %v267
  %340 = vmatprep.subr.bf16.mxu0 0
  %341 = vmatpush2.bf16.msra.mxu0 %v266
  %342 = vmatprep.subr.bf16.mxu0 0
  %343 = vmatpush2.bf16.msra.mxu0 %v265
  %344 = vmatprep.subr.bf16.mxu0 0
  %345 = vmatpush2.bf16.msra.mxu0 %v264
  %346 = vmatprep.subr.bf16.mxu0 0
  %347 = vmatpush2.bf16.msra.mxu0 %v263
  %348 = vmatprep.subr.bf16.mxu0 0
  %349 = vmatpush2.bf16.msra.mxu0 %v262
  %350 = vmatprep.mubr.bf16.mxu0 %v111
  %351 = vmatmul.mubr.bf16.gmra.mxu0 %v110
  %v352 = vpop.f32.mrf.mxu0
  %v353 = vadd.f32 0.0, %v352
  %v354 = vpop.f32.mrf.mxu0
  %v355 = vpop.f32.mrf.mxu0
  %v356 = vadd.f32 0.0, %v355
  %v357 = vpop.f32.mrf.mxu0
  %358 = vmatprep.mubr.bf16.mxu0 %v115
  %359 = vmatmul.mubr.bf16.gmra.mxu0 %v114
  %v360 = vpop.f32.mrf.mxu0
  %v361 = vadd.f32 0.0, %v360
  %v362 = vpop.f32.mrf.mxu0
  %v363 = vpop.f32.mrf.mxu0
  %v364 = vadd.f32 0.0, %v363
  %v365 = vpop.f32.mrf.mxu0
  %366 = vdwg.mxu0
  %367 = vmatprep.subr.bf16.mxu0 0
  %368 = vmatpush1.bf16.msra.mxu0 %v277
  %369 = vmatprep.subr.bf16.mxu0 0
  %370 = vmatpush1.bf16.msra.mxu0 %v276
  %371 = vmatprep.subr.bf16.mxu0 0
  %372 = vmatpush1.bf16.msra.mxu0 %v275
  %373 = vmatprep.subr.bf16.mxu0 0
  %374 = vmatpush1.bf16.msra.mxu0 %v274
  %375 = vmatprep.subr.bf16.mxu0 0
  %376 = vmatpush1.bf16.msra.mxu0 %v273
  %377 = vmatprep.subr.bf16.mxu0 0
  %378 = vmatpush1.bf16.msra.mxu0 %v272
  %379 = vmatprep.subr.bf16.mxu0 0
  %380 = vmatpush1.bf16.msra.mxu0 %v271
  %381 = vmatprep.subr.bf16.mxu0 0
  %382 = vmatpush1.bf16.msra.mxu0 %v270
  %383 = vmatprep.subr.bf16.mxu0 0
  %384 = vmatpush2.bf16.msra.mxu0 %v285
  %385 = vmatprep.subr.bf16.mxu0 0
  %386 = vmatpush2.bf16.msra.mxu0 %v284
  %387 = vmatprep.subr.bf16.mxu0 0
  %388 = vmatpush2.bf16.msra.mxu0 %v283
  %389 = vmatprep.subr.bf16.mxu0 0
  %390 = vmatpush2.bf16.msra.mxu0 %v282
  %391 = vmatprep.subr.bf16.mxu0 0
  %392 = vmatpush2.bf16.msra.mxu0 %v281
  %393 = vmatprep.subr.bf16.mxu0 0
  %394 = vmatpush2.bf16.msra.mxu0 %v280
  %395 = vmatprep.subr.bf16.mxu0 0
  %396 = vmatpush2.bf16.msra.mxu0 %v279
  %397 = vmatprep.subr.bf16.mxu0 0
  %398 = vmatpush2.bf16.msra.mxu0 %v278
  %399 = vmatprep.mubr.bf16.mxu0 %v113
  %400 = vmatmul.mubr.bf16.gmra.mxu0 %v112
  %v401 = vpop.f32.mrf.mxu0
  %v402 = vadd.f32 %v353, %v401
  %v403 = vpop.f32.mrf.mxu0
  %v404 = vpop.f32.mrf.mxu0
  %v405 = vadd.f32 %v356, %v404
  %v406 = vpop.f32.mrf.mxu0
  %407 = vmatprep.mubr.bf16.mxu0 %v117
  %408 = vmatmul.mubr.bf16.gmra.mxu0 %v116
  %v409 = vpop.f32.mrf.mxu0
  %v410 = vadd.f32 %v361, %v409
  %v411 = vpop.f32.mrf.mxu0
  %v412 = vpop.f32.mrf.mxu0
  %v413 = vadd.f32 %v364, %v412
  %v414 = vpop.f32.mrf.mxu0
  %415 = vdwg.mxu0
  %vm416 = vcmask 523264
  %v417 = vsel %vm416, %v402, 0.0
  %v418 = vsel %vm416, %v405, 0.0
  %v419 = vadd.f32 %v417, %v418
  %v420 = vsel %vm416, %v410, 0.0
  %v421 = vadd.f32 %v419, %v420
  %v422 = vsel %vm416, %v413, 0.0
  %v423 = vadd.f32 %v421, %v422
  %v424 = vrot.slane %v423, 4
  %v425 = vadd.f32 %v423, %v424
  %v426 = vrot.slane %v425, 2
  %v427 = vadd.f32 %v425, %v426
  %v428 = vrot.slane %v427, 1
  %v429 = vadd.f32 %v427, %v428
  %v430 = vmul.f32 %v402, %v402
  %v431 = vmul.f32 %v405, %v405
  %v432 = vmul.f32 %v410, %v410
  %v433 = vmul.f32 %v413, %v413
  %v434 = vsel %vm416, %v430, 0.0
  %v435 = vsel %vm416, %v431, 0.0
  %v436 = vadd.f32 %v434, %v435
  %v437 = vsel %vm416, %v432, 0.0
  %v438 = vadd.f32 %v436, %v437
  %v439 = vsel %vm416, %v433, 0.0
  %v440 = vadd.f32 %v438, %v439
  %v441 = vrot.slane %v440, 4
  %v442 = vadd.f32 %v440, %v441
  %v443 = vrot.slane %v442, 2
  %v444 = vadd.f32 %v442, %v443
  %v445 = vrot.slane %v444, 1
  %v446 = vadd.f32 %v444, %v445
  %vm447 = vcmask 1040384
  %v448 = vsel %vm447, %v429, %v446
  %vm449 = vcmask 517120
  %450 = vst.msk [vmem:[%s3] sm:$0x3] %vm449, %v448
  %v451 = vpack.c.bf16 %v405, %v402
  %v452 = vpack.c.bf16 %v413, %v410
  %v455 = vunpack.c.l.b16 %v451
  %v456 = vunpack.c.h.b16 %v451
  %v457 = vunpack.c.l.b16 %v452
  %v458 = vunpack.c.h.b16 %v452
  %v459 = vpack.c.b16 %v455, %v455
  %v460 = vpack.c.b16 %v456, %v456
  %v461 = vpack.c.b16 %v457, %v457
  %v462 = vpack.c.b16 %v458, %v458
  %vm467 = vcmask 519168
  %468 = vst.msk [vmem:[%s2] sm:$0xf] %vm467, %v459
  %469 = vst.msk [vmem:[%s2 + $0x4] sm:$0xf] %vm467, %v460
  %470 = vst.msk [vmem:[%s2 + $0x8] sm:$0xf] %vm467, %v461
  %471 = vst.msk [vmem:[%s2 + $0xc] sm:$0xf] %vm467, %v462
  // Predicated region
  $region10: #{discriminator_forward.12} parent=0 // pred_check
    _
  $region11: #{discriminator_forward.12} parent=0 // pred_check_branch
    %473 = sbr.rel (0) target = $region13
  $region12: #{discriminator_forward.12} parent=0 // pred_region
    _
  $region13: #{discriminator_forward.12} parent=0 // pred_fallthru
    _
  // Predicated region
  $region14: #{discriminator_forward.12} parent=0 // pred_check
    _
  $region15: #{discriminator_forward.12} parent=0 // pred_check_branch
    %475 = sbr.rel (0) target = $region17
  $region16: #{discriminator_forward.12} parent=0 // pred_region
    _
  $region17: #{discriminator_forward.12} parent=0 // pred_fallthru
    _
  // Predicated region
  $region18: #{discriminator_forward.12} parent=0 // pred_check
    _
  $region19: #{discriminator_forward.12} parent=0 // pred_check_branch
    %477 = sbr.rel (0) target = $region21
  $region20: #{discriminator_forward.12} parent=0 // pred_region
    _
  $region21: #{discriminator_forward.12} parent=0 // pred_fallthru
    _
  // Predicated region
  $region22: #{discriminator_forward.12} parent=0 // pred_check
    _
  $region23: #{discriminator_forward.12} parent=0 // pred_check_branch
    %479 = sbr.rel (0) target = $region25
  $region24: #{discriminator_forward.12} parent=0 // pred_region
    _
  $region25: #{discriminator_forward.12} parent=0 // pred_fallthru
    _

// kernel: discriminator_forward.13
$region0: #{discriminator_forward.13}
  #allocation0 [shape = 'u32[]', space=smem, size = 0x4, offset = 0x4, fixed_abs, tag = 'smem constant byte address 0x4 - core index']
  #allocation1 [shape = 'u32[144,128]{1,0:T(1,128)}', space=vmem, size = 0x12000, scoped, tag = 'internal scratch']
  %s0 = inlined_call_operand.vmem [shape: bf16[32,64], index: 0, kind: input, shape index: {}]
  %s1 = inlined_call_operand.vmem [shape: f32[1,64], index: 1, kind: input, shape index: {}]
  %s2 = inlined_call_operand.vmem [shape: f32[1,64], index: 2, kind: input, shape index: {}]
  %s3 = inlined_call_operand.vmem [shape: bf16[32,64], index: 3, kind: output, shape index: {}]
  %s4 = sld [smem:[#allocation0]]
  $region22: #{discriminator_forward.13} parent=0
    _
  %s6 = ssub.s32 1, %s4
  %s7 = scalar_select 0, %s6, %s4
  // Predicated region
  $region2: #{discriminator_forward.13} parent=0 // pred_check
    _
  $region3: #{discriminator_forward.13} parent=0 // pred_check_branch
    %9 = sbr.rel (0) target = $region5
  $region4: #{discriminator_forward.13} parent=0 // pred_region
    _
  $region5: #{discriminator_forward.13} parent=0 // pred_fallthru
    _
  // Predicated region
  $region6: #{discriminator_forward.13} parent=0 // pred_check
    _
  $region7: #{discriminator_forward.13} parent=0 // pred_check_branch
    %11 = sbr.rel (0) target = $region9
  $region8: #{discriminator_forward.13} parent=0 // pred_region
    _
  $region9: #{discriminator_forward.13} parent=0 // pred_fallthru
    _
  // Predicated region
  $region10: #{discriminator_forward.13} parent=0 // pred_check
    _
  $region11: #{discriminator_forward.13} parent=0 // pred_check_branch
    %13 = sbr.rel (0) target = $region13
  $region12: #{discriminator_forward.13} parent=0 // pred_region
    _
  $region13: #{discriminator_forward.13} parent=0 // pred_fallthru
    _
  %v14 = vld [vmem:[%s0] sm:$0xf]
  %v15 = vld [vmem:[%s0 + $0x4] sm:$0xf]
  %v16 = vld [vmem:[%s0 + $0x8] sm:$0xf]
  %v17 = vld [vmem:[%s0 + $0xc] sm:$0xf]
  %v18 = vunpack.c.l.bf16 %v14
  %v19 = vunpack.c.l.bf16 %v15
  %v20 = vunpack.c.l.bf16 %v16
  %v21 = vunpack.c.l.bf16 %v17
  %v22 = vld [vmem:[%s1] sm:$0x1]
  %v24 = vlaneseq
  %v25 = vshrl.u32 %v24, 7
  %v26 = vsub.s32 0, %v25
  %v27 = vrot.slane %v22, %v26
  %v29 = vmul.f32 %v18, %v27
  %v30 = vmul.f32 %v19, %v27
  %v31 = vmul.f32 %v20, %v27
  %v32 = vmul.f32 %v21, %v27
  %v33 = vld [vmem:[%s2] sm:$0x1]
  %v35 = vlaneseq
  %v36 = vshrl.u32 %v35, 7
  %v37 = vsub.s32 0, %v36
  %v38 = vrot.slane %v33, %v37
  %v40 = vadd.f32 %v29, %v38
  %v41 = vadd.f32 %v30, %v38
  %v42 = vadd.f32 %v31, %v38
  %v43 = vadd.f32 %v32, %v38
  %vm44 = vcmp.gt.f32.partialorder %v40, 0.0
  %vm45 = vcmp.gt.f32.partialorder %v41, 0.0
  %vm46 = vcmp.gt.f32.partialorder %v42, 0.0
  %vm47 = vcmp.gt.f32.partialorder %v43, 0.0
  %v48 = vmul.f32 %v40, 0.2
  %v49 = vmul.f32 %v41, 0.2
  %v50 = vmul.f32 %v42, 0.2
  %v51 = vmul.f32 %v43, 0.2
  %v52 = vsel %vm44, %v40, %v48
  %v53 = vsel %vm45, %v41, %v49
  %v54 = vsel %vm46, %v42, %v50
  %v55 = vsel %vm47, %v43, %v51
  %v56 = vpack.c.bf16 %v53, %v52
  %v57 = vpack.c.bf16 %v55, %v54
  %v60 = vunpack.c.l.b16 %v56
  %v61 = vunpack.c.h.b16 %v56
  %v62 = vunpack.c.l.b16 %v57
  %v63 = vunpack.c.h.b16 %v57
  %v64 = vpack.c.b16 %v60, %v60
  %v65 = vpack.c.b16 %v61, %v61
  %v66 = vpack.c.b16 %v62, %v62
  %v67 = vpack.c.b16 %v63, %v63
  %vm72 = vcmask 519168
  %73 = vst.msk [vmem:[%s3] sm:$0xf] %vm72, %v64
  %74 = vst.msk [vmem:[%s3 + $0x4] sm:$0xf] %vm72, %v65
  %75 = vst.msk [vmem:[%s3 + $0x8] sm:$0xf] %vm72, %v66
  %76 = vst.msk [vmem:[%s3 + $0xc] sm:$0xf] %vm72, %v67
  // Predicated region
  $region14: #{discriminator_forward.13} parent=0 // pred_check
    _
  $region15: #{discriminator_forward.13} parent=0 // pred_check_branch
    %78 = sbr.rel (0) target = $region17
  $region16: #{discriminator_forward.13} parent=0 // pred_region
    _
  $region17: #{discriminator_forward.13} parent=0 // pred_fallthru
    _
  // Predicated region
  $region18: #{discriminator_forward.13} parent=0 // pred_check
    _
  $region19: #{discriminator_forward.13} parent=0 // pred_check_branch
    %80 = sbr.rel (0) target = $region21
  $region20: #{discriminator_forward.13} parent=0 // pred_region
    _
  $region21: #{discriminator_forward.13} parent=0 // pred_fallthru
    _

</llo_original>
